<compile_context>
chip_gen: v7x
topology: tpu7x:2x2x1
jax: 0.10.0
libtpu: 0.0.40
codegen_flags: <defaults>
</compile_context>

<pallas_src>
import functools
import math

import jax
import jax.numpy as jnp
from jax.experimental import pallas as pl
from jax.experimental.pallas import tpu as pltpu


# ------------------------------ fused kernel ---------------------------------

def _dbsnl_kernel(*refs, H, W, num_module, stride):
    """Fused DBSNl forward for one batch element.

    refs = (x_ref, w0, b0, ..., w{L-1}, b{L-1}, o_ref, col_ref)
    Activations are (C, M) with M = H*W on the lane axis (lane-dense).
    Weights are (Cout, Cin) for 1x1 convs and (Cout, 9*Cin) packed im2col weights for
    the 3x3 convs; biases are (Cout, 1).
    """
    M = H * W
    n_layers = 8 + 2 * num_module
    assert len(refs) == 2 * n_layers + 3
    x_ref = refs[0]
    wb = refs[1:1 + 2 * n_layers]
    o_ref = refs[1 + 2 * n_layers]
    col_ref = refs[2 + 2 * n_layers]          # (9*base_ch, M) VMEM im2col scratch

    # Per-flattened-pixel (row, col) indices, used to mask the zero padding of the
    # 3x3 convs.  Built from compares + adds only (vector integer div/mod is avoided).
    pidx = jax.lax.broadcasted_iota(jnp.int32, (1, M), 1)
    yi = jnp.zeros((1, M), jnp.int32)
    for k in range(1, H):
        yi = yi + jnp.where(pidx >= k * W, 1, 0)
    xi = pidx - W * yi

    def pw(a, li, relu):
        # 1x1 conv: (Cout, Cin) @ (Cin, M) + bias  [+ ReLU]   (MXU + VPU)
        w = wb[2 * li][...]
        b = wb[2 * li + 1][...]
        y = jnp.dot(w, a, preferred_element_type=jnp.float32) + b
        return jnp.maximum(y, 0.0) if relu else y

    def conv3(a, li, d, relu):
        # 3x3 conv, dilation = zero-padding = d ("same"), as one im2col matmul:
        #   col[(3*ky+kx)*C + ci, p] = a[ci, pixel shifted by ((ky-1)d, (kx-1)d)]
        #   y = W_packed (Cout, 9C) @ col (9C, M)
        C = a.shape[0]
        for ky in range(3):
            for kx in range(3):
                dy = (ky - 1) * d
                dx = (kx - 1) * d
                s = dy * W + dx                            # flat-index offset of tap
                if s == 0:
                    blk = a
                else:
                    # blk[ci, p] = a[ci, (p + s) mod M]  (XLU lane rotation)
                    blk = pltpu.roll(a, shift=(-s) % M, axis=1)
                valid = ((yi + dy >= 0) & (yi + dy < H) &
                         (xi + dx >= 0) & (xi + dx < W))   # inside-image (not padding)
                mask = jnp.where(valid, 1.0, 0.0)          # (1, M) f32
                t = ky * 3 + kx
                col_ref[t * C:(t + 1) * C, :] = blk * mask
        w = wb[2 * li][...]
        b = wb[2 * li + 1][...]
        y = jnp.dot(w, col_ref[...], preferred_element_type=jnp.float32) + b
        return jnp.maximum(y, 0.0) if relu else y

    x = x_ref[...].astype(jnp.float32)                     # (in_ch, M)
    li = 0
    x = pw(x, li, True); li += 1                           # head 1x1 + ReLU
    x = conv3(x, li, 1, True); li += 1                     # CentralMaskedConv2d (3x3, pad 1) + ReLU
    x = pw(x, li, True); li += 1                           # branch pw1 + ReLU
    x = pw(x, li, True); li += 1                           # branch pw2 + ReLU
    for _ in range(num_module):                            # DCl blocks, residual fused in VMEM
        y = conv3(x, li, stride, True); li += 1            # 3x3, dil = pad = stride, + ReLU
        y = pw(y, li, False); li += 1                      # 1x1, no ReLU
        x = x + y
    x = pw(x, li, True); li += 1                           # branch pw3 + ReLU
    x = pw(x, li, True); li += 1                           # tail 1x1 + ReLU
    x = pw(x, li, True); li += 1                           # tail 1x1 + ReLU
    x = pw(x, li, False); li += 1                          # tail 1x1 (no ReLU)
    o_ref[...] = x.astype(o_ref.dtype)


# ---------------------------- parameter handling ------------------------------

def _pack_conv3_weight(w):
    # (Cout, Cin, 3, 3) [PyTorch OIHW] -> (Cout, 9*Cin); im2col rows are tap-major:
    # packed[:, (3*ky+kx)*Cin + ci] == w[:, ci, ky, kx]
    cout, cin = w.shape[0], w.shape[1]
    return jnp.transpose(w, (0, 2, 3, 1)).reshape(cout, 9 * cin)


def _flatten_layers(params):
    """Flat (w, b) list in the exact order the fused kernel consumes them."""
    br = params["branch1"]
    layers = [params["head"], br["masked"], br["pw1"], br["pw2"]]
    for dcl in br["dcl"]:
        layers += [dcl["conv"], dcl["pw"]]
    layers += [br["pw3"], params["tail1"], params["tail2"], params["tail3"]]
    flat = []
    for lyr in layers:
        w = lyr["w"]
        if w.ndim == 4:                     # 3x3 conv -> packed im2col weight
            w = _pack_conv3_weight(w)
        flat += [w.astype(jnp.float32), lyr["b"].astype(jnp.float32)]
    return flat


def _init_conv1x1(key, cin, cout):
    kw, kb = jax.random.split(key)
    bound = 1.0 / math.sqrt(cin)
    return {"w": jax.random.uniform(kw, (cout, cin), jnp.float32, -bound, bound),
            "b": jax.random.uniform(kb, (cout, 1), jnp.float32, -bound, bound)}


def _init_conv3x3(key, cin, cout, *, blind_spot=False):
    kw, kb = jax.random.split(key)
    bound = 1.0 / math.sqrt(cin * 9)
    w = jax.random.uniform(kw, (cout, cin, 3, 3), jnp.float32, -bound, bound)
    if blind_spot:
        # CentralMaskedConv2d: zero the central tap.  (If these params were ever
        # trained, the mask must be re-applied after every update.)
        w = w.at[:, :, 1, 1].set(0.0)
    b = jax.random.uniform(kb, (cout, 1), jnp.float32, -bound, bound)
    return {"w": w, "b": b}


def init_dbsnl_params(key, in_ch=3, out_ch=3, base_ch=16, num_module=2, stride=2):
    assert base_ch % 2 == 0, "base channel should be divided with 2"
    assert stride == 2, "fused kernel assumes the 3x3 blind-spot kernel (stride=2)"
    keys = iter(jax.random.split(key, 10 + 2 * num_module))
    params = {"head": _init_conv1x1(next(keys), in_ch, base_ch)}
    params["branch1"] = {
        "masked": _init_conv3x3(next(keys), base_ch, base_ch, blind_spot=True),
        "pw1": _init_conv1x1(next(keys), base_ch, base_ch),
        "pw2": _init_conv1x1(next(keys), base_ch, base_ch),
        "dcl": [
            {"conv": _init_conv3x3(next(keys), base_ch, base_ch),
             "pw": _init_conv1x1(next(keys), base_ch, base_ch)}
            for _ in range(num_module)
        ],
        "pw3": _init_conv1x1(next(keys), base_ch, base_ch),
    }
    params["tail1"] = _init_conv1x1(next(keys), base_ch, base_ch // 2)
    params["tail2"] = _init_conv1x1(next(keys), base_ch // 2, base_ch // 2)
    params["tail3"] = _init_conv1x1(next(keys), base_ch // 2, out_ch)
    return params


# --------------------------------- forward ------------------------------------

def dbsnl_forward(x_nchw, params, *, stride=2):
    """NCHW in / NCHW out, matching the PyTorch module.  One fused pallas_call."""
    assert stride == 2, "fused kernel assumes the 3x3 blind-spot kernel (stride=2)"
    N, in_ch, H, W = x_nchw.shape
    M = H * W
    base_ch = params["head"]["w"].shape[0]
    out_ch = params["tail3"]["w"].shape[0]
    num_module = len(params["branch1"]["dcl"])

    flat = _flatten_layers(params)
    x = x_nchw.reshape(N, in_ch, M).astype(jnp.float32)    # channels-first, lane-dense M

    in_specs = [pl.BlockSpec((None, in_ch, M), lambda n: (n, 0, 0))]
    in_specs += [pl.BlockSpec(a.shape, lambda n: (0, 0)) for a in flat]

    out = pl.pallas_call(
        functools.partial(_dbsnl_kernel, H=H, W=W,
                          num_module=num_module, stride=stride),
        out_shape=jax.ShapeDtypeStruct((N, out_ch, M), jnp.float32),
        grid_spec=pltpu.PrefetchScalarGridSpec(
            num_scalar_prefetch=0,
            grid=(N,),                                     # one image per grid step
            in_specs=in_specs,
            out_specs=pl.BlockSpec((None, out_ch, M), lambda n: (n, 0, 0)),
            scratch_shapes=[pltpu.VMEM((9 * base_ch, M), jnp.float32)],  # im2col
        ),
        compiler_params=pltpu.CompilerParams(
            dimension_semantics=("parallel",),             # v7x: one image per TensorCore
        ),
    )(x, *flat)
    return out.reshape(N, out_ch, H, W)


# ----------------------------------- main --------------------------------------

if __name__ == "__main__":
    in_ch, out_ch, base_ch, num_module, stride = 3, 3, 16, 2, 2
    N, H, W = 2, 16, 16

    key = jax.random.PRNGKey(0)
    kx, kp = jax.random.split(key)
    x = jax.random.normal(kx, (N, in_ch, H, W), jnp.float32)
    params = init_dbsnl_params(kp, in_ch, out_ch, base_ch, num_module, stride)

    fwd = jax.jit(functools.partial(dbsnl_forward, stride=stride))
    out = fwd(x, params)
    jax.block_until_ready(out)

    assert out.shape == (N, out_ch, H, W), out.shape
    assert bool(jnp.all(jnp.isfinite(out)))
    print("KERNEL_OK")
</pallas_src>

<mosaic_0001>
module attributes {stable_mosaic.version = 11 : i64} {
  func.func @_dbsnl_kernel(%arg0: i32, %arg1: memref<1x3x256xf32, #tpu.memory_space<vmem>>, %arg2: memref<16x3xf32, #tpu.memory_space<vmem>>, %arg3: memref<16x1xf32, #tpu.memory_space<vmem>>, %arg4: memref<16x144xf32, #tpu.memory_space<vmem>>, %arg5: memref<16x1xf32, #tpu.memory_space<vmem>>, %arg6: memref<16x16xf32, #tpu.memory_space<vmem>>, %arg7: memref<16x1xf32, #tpu.memory_space<vmem>>, %arg8: memref<16x16xf32, #tpu.memory_space<vmem>>, %arg9: memref<16x1xf32, #tpu.memory_space<vmem>>, %arg10: memref<16x144xf32, #tpu.memory_space<vmem>>, %arg11: memref<16x1xf32, #tpu.memory_space<vmem>>, %arg12: memref<16x16xf32, #tpu.memory_space<vmem>>, %arg13: memref<16x1xf32, #tpu.memory_space<vmem>>, %arg14: memref<16x144xf32, #tpu.memory_space<vmem>>, %arg15: memref<16x1xf32, #tpu.memory_space<vmem>>, %arg16: memref<16x16xf32, #tpu.memory_space<vmem>>, %arg17: memref<16x1xf32, #tpu.memory_space<vmem>>, %arg18: memref<16x16xf32, #tpu.memory_space<vmem>>, %arg19: memref<16x1xf32, #tpu.memory_space<vmem>>, %arg20: memref<8x16xf32, #tpu.memory_space<vmem>>, %arg21: memref<8x1xf32, #tpu.memory_space<vmem>>, %arg22: memref<8x8xf32, #tpu.memory_space<vmem>>, %arg23: memref<8x1xf32, #tpu.memory_space<vmem>>, %arg24: memref<3x8xf32, #tpu.memory_space<vmem>>, %arg25: memref<3x1xf32, #tpu.memory_space<vmem>>, %arg26: memref<1x3x256xf32, #tpu.memory_space<vmem>>, %arg27: memref<144x256xf32, #tpu.memory_space<vmem>>) attributes {dimension_semantics = [#tpu.dimension_semantics<parallel>], iteration_bounds = array<i64: 2>, scalar_prefetch = 0 : i64, scratch_operands = 1 : i64, tpu.core_type = #tpu.core_type<tc>, window_params = [{transform_indices = @transform_0, window_bounds = array<i64: 1, 3, 256>}, {pipeline_mode = #tpu.pipeline_mode<synchronous>, transform_indices = @transform_1, window_bounds = array<i64: 16, 3>}, {pipeline_mode = #tpu.pipeline_mode<synchronous>, transform_indices = @transform_2, window_bounds = array<i64: 16, 1>}, {pipeline_mode = #tpu.pipeline_mode<synchronous>, transform_indices = @transform_3, window_bounds = array<i64: 16, 144>}, {pipeline_mode = #tpu.pipeline_mode<synchronous>, transform_indices = @transform_4, window_bounds = array<i64: 16, 1>}, {pipeline_mode = #tpu.pipeline_mode<synchronous>, transform_indices = @transform_5, window_bounds = array<i64: 16, 16>}, {pipeline_mode = #tpu.pipeline_mode<synchronous>, transform_indices = @transform_6, window_bounds = array<i64: 16, 1>}, {pipeline_mode = #tpu.pipeline_mode<synchronous>, transform_indices = @transform_7, window_bounds = array<i64: 16, 16>}, {pipeline_mode = #tpu.pipeline_mode<synchronous>, transform_indices = @transform_8, window_bounds = array<i64: 16, 1>}, {pipeline_mode = #tpu.pipeline_mode<synchronous>, transform_indices = @transform_9, window_bounds = array<i64: 16, 144>}, {pipeline_mode = #tpu.pipeline_mode<synchronous>, transform_indices = @transform_10, window_bounds = array<i64: 16, 1>}, {pipeline_mode = #tpu.pipeline_mode<synchronous>, transform_indices = @transform_11, window_bounds = array<i64: 16, 16>}, {pipeline_mode = #tpu.pipeline_mode<synchronous>, transform_indices = @transform_12, window_bounds = array<i64: 16, 1>}, {pipeline_mode = #tpu.pipeline_mode<synchronous>, transform_indices = @transform_13, window_bounds = array<i64: 16, 144>}, {pipeline_mode = #tpu.pipeline_mode<synchronous>, transform_indices = @transform_14, window_bounds = array<i64: 16, 1>}, {pipeline_mode = #tpu.pipeline_mode<synchronous>, transform_indices = @transform_15, window_bounds = array<i64: 16, 16>}, {pipeline_mode = #tpu.pipeline_mode<synchronous>, transform_indices = @transform_16, window_bounds = array<i64: 16, 1>}, {pipeline_mode = #tpu.pipeline_mode<synchronous>, transform_indices = @transform_17, window_bounds = array<i64: 16, 16>}, {pipeline_mode = #tpu.pipeline_mode<synchronous>, transform_indices = @transform_18, window_bounds = array<i64: 16, 1>}, {pipeline_mode = #tpu.pipeline_mode<synchronous>, transform_indices = @transform_19, window_bounds = array<i64: 8, 16>}, {pipeline_mode = #tpu.pipeline_mode<synchronous>, transform_indices = @transform_20, window_bounds = array<i64: 8, 1>}, {pipeline_mode = #tpu.pipeline_mode<synchronous>, transform_indices = @transform_21, window_bounds = array<i64: 8, 8>}, {pipeline_mode = #tpu.pipeline_mode<synchronous>, transform_indices = @transform_22, window_bounds = array<i64: 8, 1>}, {pipeline_mode = #tpu.pipeline_mode<synchronous>, transform_indices = @transform_23, window_bounds = array<i64: 3, 8>}, {pipeline_mode = #tpu.pipeline_mode<synchronous>, transform_indices = @transform_24, window_bounds = array<i64: 3, 1>}, {transform_indices = @transform_25, window_bounds = array<i64: 1, 3, 256>}]} {
    %0 = tpu.iota {dimensions = array<i32: 1>} : vector<1x256xi32>
    %c0_i32 = arith.constant 0 : i32
    %1 = vector.broadcast %c0_i32 : i32 to vector<1x256xi32>
    %c16_i32 = arith.constant 16 : i32
    %2 = vector.broadcast %c16_i32 : i32 to vector<1x256xi32>
    %3 = arith.cmpi sge, %0, %2 : vector<1x256xi32>
    %c1_i32 = arith.constant 1 : i32
    %c0_i32_0 = arith.constant 0 : i32
    %4 = vector.broadcast %c1_i32 : i32 to vector<1x256xi32>
    %5 = vector.broadcast %c0_i32_0 : i32 to vector<1x256xi32>
    %6 = arith.select %3, %4, %5 : vector<1x256xi1>, vector<1x256xi32>
    %7 = arith.addi %1, %6 : vector<1x256xi32>
    %c32_i32 = arith.constant 32 : i32
    %8 = vector.broadcast %c32_i32 : i32 to vector<1x256xi32>
    %9 = arith.cmpi sge, %0, %8 : vector<1x256xi32>
    %c1_i32_1 = arith.constant 1 : i32
    %c0_i32_2 = arith.constant 0 : i32
    %10 = vector.broadcast %c1_i32_1 : i32 to vector<1x256xi32>
    %11 = vector.broadcast %c0_i32_2 : i32 to vector<1x256xi32>
    %12 = arith.select %9, %10, %11 : vector<1x256xi1>, vector<1x256xi32>
    %13 = arith.addi %7, %12 : vector<1x256xi32>
    %c48_i32 = arith.constant 48 : i32
    %14 = vector.broadcast %c48_i32 : i32 to vector<1x256xi32>
    %15 = arith.cmpi sge, %0, %14 : vector<1x256xi32>
    %c1_i32_3 = arith.constant 1 : i32
    %c0_i32_4 = arith.constant 0 : i32
    %16 = vector.broadcast %c1_i32_3 : i32 to vector<1x256xi32>
    %17 = vector.broadcast %c0_i32_4 : i32 to vector<1x256xi32>
    %18 = arith.select %15, %16, %17 : vector<1x256xi1>, vector<1x256xi32>
    %19 = arith.addi %13, %18 : vector<1x256xi32>
    %c64_i32 = arith.constant 64 : i32
    %20 = vector.broadcast %c64_i32 : i32 to vector<1x256xi32>
    %21 = arith.cmpi sge, %0, %20 : vector<1x256xi32>
    %c1_i32_5 = arith.constant 1 : i32
    %c0_i32_6 = arith.constant 0 : i32
    %22 = vector.broadcast %c1_i32_5 : i32 to vector<1x256xi32>
    %23 = vector.broadcast %c0_i32_6 : i32 to vector<1x256xi32>
    %24 = arith.select %21, %22, %23 : vector<1x256xi1>, vector<1x256xi32>
    %25 = arith.addi %19, %24 : vector<1x256xi32>
    %c80_i32 = arith.constant 80 : i32
    %26 = vector.broadcast %c80_i32 : i32 to vector<1x256xi32>
    %27 = arith.cmpi sge, %0, %26 : vector<1x256xi32>
    %c1_i32_7 = arith.constant 1 : i32
    %c0_i32_8 = arith.constant 0 : i32
    %28 = vector.broadcast %c1_i32_7 : i32 to vector<1x256xi32>
    %29 = vector.broadcast %c0_i32_8 : i32 to vector<1x256xi32>
    %30 = arith.select %27, %28, %29 : vector<1x256xi1>, vector<1x256xi32>
    %31 = arith.addi %25, %30 : vector<1x256xi32>
    %c96_i32 = arith.constant 96 : i32
    %32 = vector.broadcast %c96_i32 : i32 to vector<1x256xi32>
    %33 = arith.cmpi sge, %0, %32 : vector<1x256xi32>
    %c1_i32_9 = arith.constant 1 : i32
    %c0_i32_10 = arith.constant 0 : i32
    %34 = vector.broadcast %c1_i32_9 : i32 to vector<1x256xi32>
    %35 = vector.broadcast %c0_i32_10 : i32 to vector<1x256xi32>
    %36 = arith.select %33, %34, %35 : vector<1x256xi1>, vector<1x256xi32>
    %37 = arith.addi %31, %36 : vector<1x256xi32>
    %c112_i32 = arith.constant 112 : i32
    %38 = vector.broadcast %c112_i32 : i32 to vector<1x256xi32>
    %39 = arith.cmpi sge, %0, %38 : vector<1x256xi32>
    %c1_i32_11 = arith.constant 1 : i32
    %c0_i32_12 = arith.constant 0 : i32
    %40 = vector.broadcast %c1_i32_11 : i32 to vector<1x256xi32>
    %41 = vector.broadcast %c0_i32_12 : i32 to vector<1x256xi32>
    %42 = arith.select %39, %40, %41 : vector<1x256xi1>, vector<1x256xi32>
    %43 = arith.addi %37, %42 : vector<1x256xi32>
    %c128_i32 = arith.constant 128 : i32
    %44 = vector.broadcast %c128_i32 : i32 to vector<1x256xi32>
    %45 = arith.cmpi sge, %0, %44 : vector<1x256xi32>
    %c1_i32_13 = arith.constant 1 : i32
    %c0_i32_14 = arith.constant 0 : i32
    %46 = vector.broadcast %c1_i32_13 : i32 to vector<1x256xi32>
    %47 = vector.broadcast %c0_i32_14 : i32 to vector<1x256xi32>
    %48 = arith.select %45, %46, %47 : vector<1x256xi1>, vector<1x256xi32>
    %49 = arith.addi %43, %48 : vector<1x256xi32>
    %c144_i32 = arith.constant 144 : i32
    %50 = vector.broadcast %c144_i32 : i32 to vector<1x256xi32>
    %51 = arith.cmpi sge, %0, %50 : vector<1x256xi32>
    %c1_i32_15 = arith.constant 1 : i32
    %c0_i32_16 = arith.constant 0 : i32
    %52 = vector.broadcast %c1_i32_15 : i32 to vector<1x256xi32>
    %53 = vector.broadcast %c0_i32_16 : i32 to vector<1x256xi32>
    %54 = arith.select %51, %52, %53 : vector<1x256xi1>, vector<1x256xi32>
    %55 = arith.addi %49, %54 : vector<1x256xi32>
    %c160_i32 = arith.constant 160 : i32
    %56 = vector.broadcast %c160_i32 : i32 to vector<1x256xi32>
    %57 = arith.cmpi sge, %0, %56 : vector<1x256xi32>
    %c1_i32_17 = arith.constant 1 : i32
    %c0_i32_18 = arith.constant 0 : i32
    %58 = vector.broadcast %c1_i32_17 : i32 to vector<1x256xi32>
    %59 = vector.broadcast %c0_i32_18 : i32 to vector<1x256xi32>
    %60 = arith.select %57, %58, %59 : vector<1x256xi1>, vector<1x256xi32>
    %61 = arith.addi %55, %60 : vector<1x256xi32>
    %c176_i32 = arith.constant 176 : i32
    %62 = vector.broadcast %c176_i32 : i32 to vector<1x256xi32>
    %63 = arith.cmpi sge, %0, %62 : vector<1x256xi32>
    %c1_i32_19 = arith.constant 1 : i32
    %c0_i32_20 = arith.constant 0 : i32
    %64 = vector.broadcast %c1_i32_19 : i32 to vector<1x256xi32>
    %65 = vector.broadcast %c0_i32_20 : i32 to vector<1x256xi32>
    %66 = arith.select %63, %64, %65 : vector<1x256xi1>, vector<1x256xi32>
    %67 = arith.addi %61, %66 : vector<1x256xi32>
    %c192_i32 = arith.constant 192 : i32
    %68 = vector.broadcast %c192_i32 : i32 to vector<1x256xi32>
    %69 = arith.cmpi sge, %0, %68 : vector<1x256xi32>
    %c1_i32_21 = arith.constant 1 : i32
    %c0_i32_22 = arith.constant 0 : i32
    %70 = vector.broadcast %c1_i32_21 : i32 to vector<1x256xi32>
    %71 = vector.broadcast %c0_i32_22 : i32 to vector<1x256xi32>
    %72 = arith.select %69, %70, %71 : vector<1x256xi1>, vector<1x256xi32>
    %73 = arith.addi %67, %72 : vector<1x256xi32>
    %c208_i32 = arith.constant 208 : i32
    %74 = vector.broadcast %c208_i32 : i32 to vector<1x256xi32>
    %75 = arith.cmpi sge, %0, %74 : vector<1x256xi32>
    %c1_i32_23 = arith.constant 1 : i32
    %c0_i32_24 = arith.constant 0 : i32
    %76 = vector.broadcast %c1_i32_23 : i32 to vector<1x256xi32>
    %77 = vector.broadcast %c0_i32_24 : i32 to vector<1x256xi32>
    %78 = arith.select %75, %76, %77 : vector<1x256xi1>, vector<1x256xi32>
    %79 = arith.addi %73, %78 : vector<1x256xi32>
    %c224_i32 = arith.constant 224 : i32
    %80 = vector.broadcast %c224_i32 : i32 to vector<1x256xi32>
    %81 = arith.cmpi sge, %0, %80 : vector<1x256xi32>
    %c1_i32_25 = arith.constant 1 : i32
    %c0_i32_26 = arith.constant 0 : i32
    %82 = vector.broadcast %c1_i32_25 : i32 to vector<1x256xi32>
    %83 = vector.broadcast %c0_i32_26 : i32 to vector<1x256xi32>
    %84 = arith.select %81, %82, %83 : vector<1x256xi1>, vector<1x256xi32>
    %85 = arith.addi %79, %84 : vector<1x256xi32>
    %c240_i32 = arith.constant 240 : i32
    %86 = vector.broadcast %c240_i32 : i32 to vector<1x256xi32>
    %87 = arith.cmpi sge, %0, %86 : vector<1x256xi32>
    %c1_i32_27 = arith.constant 1 : i32
    %c0_i32_28 = arith.constant 0 : i32
    %88 = vector.broadcast %c1_i32_27 : i32 to vector<1x256xi32>
    %89 = vector.broadcast %c0_i32_28 : i32 to vector<1x256xi32>
    %90 = arith.select %87, %88, %89 : vector<1x256xi1>, vector<1x256xi32>
    %91 = arith.addi %85, %90 : vector<1x256xi32>
    %c16_i32_29 = arith.constant 16 : i32
    %92 = vector.broadcast %c16_i32_29 : i32 to vector<1x256xi32>
    %93 = arith.muli %92, %91 : vector<1x256xi32>
    %94 = arith.subi %0, %93 : vector<1x256xi32>
    %c0 = arith.constant 0 : index
    %c0_30 = arith.constant 0 : index
    %c0_31 = arith.constant 0 : index
    %95 = vector.load %arg1[%c0, %c0_30, %c0_31] : memref<1x3x256xf32, #tpu.memory_space<vmem>>, vector<1x3x256xf32>
    %96 = vector.shape_cast %95 : vector<1x3x256xf32> to vector<3x256xf32>
    %c0_32 = arith.constant 0 : index
    %c0_33 = arith.constant 0 : index
    %97 = vector.load %arg2[%c0_32, %c0_33] : memref<16x3xf32, #tpu.memory_space<vmem>>, vector<16x3xf32>
    %c0_34 = arith.constant 0 : index
    %c0_35 = arith.constant 0 : index
    %98 = vector.load %arg3[%c0_34, %c0_35] : memref<16x1xf32, #tpu.memory_space<vmem>>, vector<16x1xf32>
    %cst = arith.constant dense<0.000000e+00> : vector<16x256xf32>
    %99 = tpu.matmul %97, %96, %cst {dimension_numbers = #tpu.dot_dimension_numbers<[1], [0], [0], [1], [0, 0, 1, 1], [], []>} : vector<16x3xf32>, vector<3x256xf32>, vector<16x256xf32> -> vector<16x256xf32>
    %100 = vector.broadcast %98 : vector<16x1xf32> to vector<16x256xf32>
    %101 = arith.addf %99, %100 : vector<16x256xf32>
    %cst_36 = arith.constant 0.000000e+00 : f32
    %102 = vector.broadcast %cst_36 : f32 to vector<16x256xf32>
    %103 = arith.maximumf %101, %102 : vector<16x256xf32>
    %c17_i32 = arith.constant 17 : i32
    %104 = tpu.dynamic_rotate %103 by %c17_i32 dim 1 : vector<16x256xf32>, i32 -> vector<16x256xf32>
    %c-1_i32 = arith.constant -1 : i32
    %105 = vector.broadcast %c-1_i32 : i32 to vector<1x256xi32>
    %106 = arith.addi %91, %105 : vector<1x256xi32>
    %c0_i32_37 = arith.constant 0 : i32
    %107 = vector.broadcast %c0_i32_37 : i32 to vector<1x256xi32>
    %108 = arith.cmpi sge, %106, %107 : vector<1x256xi32>
    %c-1_i32_38 = arith.constant -1 : i32
    %109 = vector.broadcast %c-1_i32_38 : i32 to vector<1x256xi32>
    %110 = arith.addi %91, %109 : vector<1x256xi32>
    %c16_i32_39 = arith.constant 16 : i32
    %111 = vector.broadcast %c16_i32_39 : i32 to vector<1x256xi32>
    %112 = arith.cmpi slt, %110, %111 : vector<1x256xi32>
    %113 = arith.andi %108, %112 : vector<1x256xi1>
    %c-1_i32_40 = arith.constant -1 : i32
    %114 = vector.broadcast %c-1_i32_40 : i32 to vector<1x256xi32>
    %115 = arith.addi %94, %114 : vector<1x256xi32>
    %c0_i32_41 = arith.constant 0 : i32
    %116 = vector.broadcast %c0_i32_41 : i32 to vector<1x256xi32>
    %117 = arith.cmpi sge, %115, %116 : vector<1x256xi32>
    %118 = arith.andi %113, %117 : vector<1x256xi1>
    %c-1_i32_42 = arith.constant -1 : i32
    %119 = vector.broadcast %c-1_i32_42 : i32 to vector<1x256xi32>
    %120 = arith.addi %94, %119 : vector<1x256xi32>
    %c16_i32_43 = arith.constant 16 : i32
    %121 = vector.broadcast %c16_i32_43 : i32 to vector<1x256xi32>
    %122 = arith.cmpi slt, %120, %121 : vector<1x256xi32>
    %123 = arith.andi %118, %122 : vector<1x256xi1>
    %cst_44 = arith.constant 1.000000e+00 : f32
    %cst_45 = arith.constant 0.000000e+00 : f32
    %124 = vector.broadcast %cst_44 : f32 to vector<1x256xf32>
    %125 = vector.broadcast %cst_45 : f32 to vector<1x256xf32>
    %126 = arith.select %123, %124, %125 : vector<1x256xi1>, vector<1x256xf32>
    %127 = vector.broadcast %126 : vector<1x256xf32> to vector<16x256xf32>
    %128 = arith.mulf %104, %127 : vector<16x256xf32>
    %c0_46 = arith.constant 0 : index
    %c0_47 = arith.constant 0 : index
    %129 = vector.load %arg27[%c0_46, %c0_47] : memref<144x256xf32, #tpu.memory_space<vmem>>, vector<16x256xf32>
    tpu.vector_store %arg27[%c0_46, %c0_47], %128 {strides = array<i32>} : memref<144x256xf32, #tpu.memory_space<vmem>>, vector<16x256xf32>,
    %c16_i32_48 = arith.constant 16 : i32
    %130 = tpu.dynamic_rotate %103 by %c16_i32_48 dim 1 : vector<16x256xf32>, i32 -> vector<16x256xf32>
    %c-1_i32_49 = arith.constant -1 : i32
    %131 = vector.broadcast %c-1_i32_49 : i32 to vector<1x256xi32>
    %132 = arith.addi %91, %131 : vector<1x256xi32>
    %c0_i32_50 = arith.constant 0 : i32
    %133 = vector.broadcast %c0_i32_50 : i32 to vector<1x256xi32>
    %134 = arith.cmpi sge, %132, %133 : vector<1x256xi32>
    %c-1_i32_51 = arith.constant -1 : i32
    %135 = vector.broadcast %c-1_i32_51 : i32 to vector<1x256xi32>
    %136 = arith.addi %91, %135 : vector<1x256xi32>
    %c16_i32_52 = arith.constant 16 : i32
    %137 = vector.broadcast %c16_i32_52 : i32 to vector<1x256xi32>
    %138 = arith.cmpi slt, %136, %137 : vector<1x256xi32>
    %139 = arith.andi %134, %138 : vector<1x256xi1>
    %c0_i32_53 = arith.constant 0 : i32
    %140 = vector.broadcast %c0_i32_53 : i32 to vector<1x256xi32>
    %141 = arith.addi %94, %140 : vector<1x256xi32>
    %c0_i32_54 = arith.constant 0 : i32
    %142 = vector.broadcast %c0_i32_54 : i32 to vector<1x256xi32>
    %143 = arith.cmpi sge, %141, %142 : vector<1x256xi32>
    %144 = arith.andi %139, %143 : vector<1x256xi1>
    %c0_i32_55 = arith.constant 0 : i32
    %145 = vector.broadcast %c0_i32_55 : i32 to vector<1x256xi32>
    %146 = arith.addi %94, %145 : vector<1x256xi32>
    %c16_i32_56 = arith.constant 16 : i32
    %147 = vector.broadcast %c16_i32_56 : i32 to vector<1x256xi32>
    %148 = arith.cmpi slt, %146, %147 : vector<1x256xi32>
    %149 = arith.andi %144, %148 : vector<1x256xi1>
    %cst_57 = arith.constant 1.000000e+00 : f32
    %cst_58 = arith.constant 0.000000e+00 : f32
    %150 = vector.broadcast %cst_57 : f32 to vector<1x256xf32>
    %151 = vector.broadcast %cst_58 : f32 to vector<1x256xf32>
    %152 = arith.select %149, %150, %151 : vector<1x256xi1>, vector<1x256xf32>
    %153 = vector.broadcast %152 : vector<1x256xf32> to vector<16x256xf32>
    %154 = arith.mulf %130, %153 : vector<16x256xf32>
    %c16 = arith.constant 16 : index
    %c0_59 = arith.constant 0 : index
    %155 = vector.load %arg27[%c16, %c0_59] : memref<144x256xf32, #tpu.memory_space<vmem>>, vector<16x256xf32>
    tpu.vector_store %arg27[%c16, %c0_59], %154 {strides = array<i32>} : memref<144x256xf32, #tpu.memory_space<vmem>>, vector<16x256xf32>,
    %c15_i32 = arith.constant 15 : i32
    %156 = tpu.dynamic_rotate %103 by %c15_i32 dim 1 : vector<16x256xf32>, i32 -> vector<16x256xf32>
    %c-1_i32_60 = arith.constant -1 : i32
    %157 = vector.broadcast %c-1_i32_60 : i32 to vector<1x256xi32>
    %158 = arith.addi %91, %157 : vector<1x256xi32>
    %c0_i32_61 = arith.constant 0 : i32
    %159 = vector.broadcast %c0_i32_61 : i32 to vector<1x256xi32>
    %160 = arith.cmpi sge, %158, %159 : vector<1x256xi32>
    %c-1_i32_62 = arith.constant -1 : i32
    %161 = vector.broadcast %c-1_i32_62 : i32 to vector<1x256xi32>
    %162 = arith.addi %91, %161 : vector<1x256xi32>
    %c16_i32_63 = arith.constant 16 : i32
    %163 = vector.broadcast %c16_i32_63 : i32 to vector<1x256xi32>
    %164 = arith.cmpi slt, %162, %163 : vector<1x256xi32>
    %165 = arith.andi %160, %164 : vector<1x256xi1>
    %c1_i32_64 = arith.constant 1 : i32
    %166 = vector.broadcast %c1_i32_64 : i32 to vector<1x256xi32>
    %167 = arith.addi %94, %166 : vector<1x256xi32>
    %c0_i32_65 = arith.constant 0 : i32
    %168 = vector.broadcast %c0_i32_65 : i32 to vector<1x256xi32>
    %169 = arith.cmpi sge, %167, %168 : vector<1x256xi32>
    %170 = arith.andi %165, %169 : vector<1x256xi1>
    %c1_i32_66 = arith.constant 1 : i32
    %171 = vector.broadcast %c1_i32_66 : i32 to vector<1x256xi32>
    %172 = arith.addi %94, %171 : vector<1x256xi32>
    %c16_i32_67 = arith.constant 16 : i32
    %173 = vector.broadcast %c16_i32_67 : i32 to vector<1x256xi32>
    %174 = arith.cmpi slt, %172, %173 : vector<1x256xi32>
    %175 = arith.andi %170, %174 : vector<1x256xi1>
    %cst_68 = arith.constant 1.000000e+00 : f32
    %cst_69 = arith.constant 0.000000e+00 : f32
    %176 = vector.broadcast %cst_68 : f32 to vector<1x256xf32>
    %177 = vector.broadcast %cst_69 : f32 to vector<1x256xf32>
    %178 = arith.select %175, %176, %177 : vector<1x256xi1>, vector<1x256xf32>
    %179 = vector.broadcast %178 : vector<1x256xf32> to vector<16x256xf32>
    %180 = arith.mulf %156, %179 : vector<16x256xf32>
    %c32 = arith.constant 32 : index
    %c0_70 = arith.constant 0 : index
    %181 = vector.load %arg27[%c32, %c0_70] : memref<144x256xf32, #tpu.memory_space<vmem>>, vector<16x256xf32>
    tpu.vector_store %arg27[%c32, %c0_70], %180 {strides = array<i32>} : memref<144x256xf32, #tpu.memory_space<vmem>>, vector<16x256xf32>,
    %c1_i32_71 = arith.constant 1 : i32
    %182 = tpu.dynamic_rotate %103 by %c1_i32_71 dim 1 : vector<16x256xf32>, i32 -> vector<16x256xf32>
    %c0_i32_72 = arith.constant 0 : i32
    %183 = vector.broadcast %c0_i32_72 : i32 to vector<1x256xi32>
    %184 = arith.addi %91, %183 : vector<1x256xi32>
    %c0_i32_73 = arith.constant 0 : i32
    %185 = vector.broadcast %c0_i32_73 : i32 to vector<1x256xi32>
    %186 = arith.cmpi sge, %184, %185 : vector<1x256xi32>
    %c0_i32_74 = arith.constant 0 : i32
    %187 = vector.broadcast %c0_i32_74 : i32 to vector<1x256xi32>
    %188 = arith.addi %91, %187 : vector<1x256xi32>
    %c16_i32_75 = arith.constant 16 : i32
    %189 = vector.broadcast %c16_i32_75 : i32 to vector<1x256xi32>
    %190 = arith.cmpi slt, %188, %189 : vector<1x256xi32>
    %191 = arith.andi %186, %190 : vector<1x256xi1>
    %c-1_i32_76 = arith.constant -1 : i32
    %192 = vector.broadcast %c-1_i32_76 : i32 to vector<1x256xi32>
    %193 = arith.addi %94, %192 : vector<1x256xi32>
    %c0_i32_77 = arith.constant 0 : i32
    %194 = vector.broadcast %c0_i32_77 : i32 to vector<1x256xi32>
    %195 = arith.cmpi sge, %193, %194 : vector<1x256xi32>
    %196 = arith.andi %191, %195 : vector<1x256xi1>
    %c-1_i32_78 = arith.constant -1 : i32
    %197 = vector.broadcast %c-1_i32_78 : i32 to vector<1x256xi32>
    %198 = arith.addi %94, %197 : vector<1x256xi32>
    %c16_i32_79 = arith.constant 16 : i32
    %199 = vector.broadcast %c16_i32_79 : i32 to vector<1x256xi32>
    %200 = arith.cmpi slt, %198, %199 : vector<1x256xi32>
    %201 = arith.andi %196, %200 : vector<1x256xi1>
    %cst_80 = arith.constant 1.000000e+00 : f32
    %cst_81 = arith.constant 0.000000e+00 : f32
    %202 = vector.broadcast %cst_80 : f32 to vector<1x256xf32>
    %203 = vector.broadcast %cst_81 : f32 to vector<1x256xf32>
    %204 = arith.select %201, %202, %203 : vector<1x256xi1>, vector<1x256xf32>
    %205 = vector.broadcast %204 : vector<1x256xf32> to vector<16x256xf32>
    %206 = arith.mulf %182, %205 : vector<16x256xf32>
    %c48 = arith.constant 48 : index
    %c0_82 = arith.constant 0 : index
    %207 = vector.load %arg27[%c48, %c0_82] : memref<144x256xf32, #tpu.memory_space<vmem>>, vector<16x256xf32>
    tpu.vector_store %arg27[%c48, %c0_82], %206 {strides = array<i32>} : memref<144x256xf32, #tpu.memory_space<vmem>>, vector<16x256xf32>,
    %c0_i32_83 = arith.constant 0 : i32
    %208 = vector.broadcast %c0_i32_83 : i32 to vector<1x256xi32>
    %209 = arith.addi %91, %208 : vector<1x256xi32>
    %c0_i32_84 = arith.constant 0 : i32
    %210 = vector.broadcast %c0_i32_84 : i32 to vector<1x256xi32>
    %211 = arith.cmpi sge, %209, %210 : vector<1x256xi32>
    %c0_i32_85 = arith.constant 0 : i32
    %212 = vector.broadcast %c0_i32_85 : i32 to vector<1x256xi32>
    %213 = arith.addi %91, %212 : vector<1x256xi32>
    %c16_i32_86 = arith.constant 16 : i32
    %214 = vector.broadcast %c16_i32_86 : i32 to vector<1x256xi32>
    %215 = arith.cmpi slt, %213, %214 : vector<1x256xi32>
    %216 = arith.andi %211, %215 : vector<1x256xi1>
    %c0_i32_87 = arith.constant 0 : i32
    %217 = vector.broadcast %c0_i32_87 : i32 to vector<1x256xi32>
    %218 = arith.addi %94, %217 : vector<1x256xi32>
    %c0_i32_88 = arith.constant 0 : i32
    %219 = vector.broadcast %c0_i32_88 : i32 to vector<1x256xi32>
    %220 = arith.cmpi sge, %218, %219 : vector<1x256xi32>
    %221 = arith.andi %216, %220 : vector<1x256xi1>
    %c0_i32_89 = arith.constant 0 : i32
    %222 = vector.broadcast %c0_i32_89 : i32 to vector<1x256xi32>
    %223 = arith.addi %94, %222 : vector<1x256xi32>
    %c16_i32_90 = arith.constant 16 : i32
    %224 = vector.broadcast %c16_i32_90 : i32 to vector<1x256xi32>
    %225 = arith.cmpi slt, %223, %224 : vector<1x256xi32>
    %226 = arith.andi %221, %225 : vector<1x256xi1>
    %cst_91 = arith.constant 1.000000e+00 : f32
    %cst_92 = arith.constant 0.000000e+00 : f32
    %227 = vector.broadcast %cst_91 : f32 to vector<1x256xf32>
    %228 = vector.broadcast %cst_92 : f32 to vector<1x256xf32>
    %229 = arith.select %226, %227, %228 : vector<1x256xi1>, vector<1x256xf32>
    %230 = vector.broadcast %229 : vector<1x256xf32> to vector<16x256xf32>
    %231 = arith.mulf %103, %230 : vector<16x256xf32>
    %c64 = arith.constant 64 : index
    %c0_93 = arith.constant 0 : index
    %232 = vector.load %arg27[%c64, %c0_93] : memref<144x256xf32, #tpu.memory_space<vmem>>, vector<16x256xf32>
    tpu.vector_store %arg27[%c64, %c0_93], %231 {strides = array<i32>} : memref<144x256xf32, #tpu.memory_space<vmem>>, vector<16x256xf32>,
    %c255_i32 = arith.constant 255 : i32
    %233 = tpu.dynamic_rotate %103 by %c255_i32 dim 1 : vector<16x256xf32>, i32 -> vector<16x256xf32>
    %c0_i32_94 = arith.constant 0 : i32
    %234 = vector.broadcast %c0_i32_94 : i32 to vector<1x256xi32>
    %235 = arith.addi %91, %234 : vector<1x256xi32>
    %c0_i32_95 = arith.constant 0 : i32
    %236 = vector.broadcast %c0_i32_95 : i32 to vector<1x256xi32>
    %237 = arith.cmpi sge, %235, %236 : vector<1x256xi32>
    %c0_i32_96 = arith.constant 0 : i32
    %238 = vector.broadcast %c0_i32_96 : i32 to vector<1x256xi32>
    %239 = arith.addi %91, %238 : vector<1x256xi32>
    %c16_i32_97 = arith.constant 16 : i32
    %240 = vector.broadcast %c16_i32_97 : i32 to vector<1x256xi32>
    %241 = arith.cmpi slt, %239, %240 : vector<1x256xi32>
    %242 = arith.andi %237, %241 : vector<1x256xi1>
    %c1_i32_98 = arith.constant 1 : i32
    %243 = vector.broadcast %c1_i32_98 : i32 to vector<1x256xi32>
    %244 = arith.addi %94, %243 : vector<1x256xi32>
    %c0_i32_99 = arith.constant 0 : i32
    %245 = vector.broadcast %c0_i32_99 : i32 to vector<1x256xi32>
    %246 = arith.cmpi sge, %244, %245 : vector<1x256xi32>
    %247 = arith.andi %242, %246 : vector<1x256xi1>
    %c1_i32_100 = arith.constant 1 : i32
    %248 = vector.broadcast %c1_i32_100 : i32 to vector<1x256xi32>
    %249 = arith.addi %94, %248 : vector<1x256xi32>
    %c16_i32_101 = arith.constant 16 : i32
    %250 = vector.broadcast %c16_i32_101 : i32 to vector<1x256xi32>
    %251 = arith.cmpi slt, %249, %250 : vector<1x256xi32>
    %252 = arith.andi %247, %251 : vector<1x256xi1>
    %cst_102 = arith.constant 1.000000e+00 : f32
    %cst_103 = arith.constant 0.000000e+00 : f32
    %253 = vector.broadcast %cst_102 : f32 to vector<1x256xf32>
    %254 = vector.broadcast %cst_103 : f32 to vector<1x256xf32>
    %255 = arith.select %252, %253, %254 : vector<1x256xi1>, vector<1x256xf32>
    %256 = vector.broadcast %255 : vector<1x256xf32> to vector<16x256xf32>
    %257 = arith.mulf %233, %256 : vector<16x256xf32>
    %c80 = arith.constant 80 : index
    %c0_104 = arith.constant 0 : index
    %258 = vector.load %arg27[%c80, %c0_104] : memref<144x256xf32, #tpu.memory_space<vmem>>, vector<16x256xf32>
    tpu.vector_store %arg27[%c80, %c0_104], %257 {strides = array<i32>} : memref<144x256xf32, #tpu.memory_space<vmem>>, vector<16x256xf32>,
    %c241_i32 = arith.constant 241 : i32
    %259 = tpu.dynamic_rotate %103 by %c241_i32 dim 1 : vector<16x256xf32>, i32 -> vector<16x256xf32>
    %c1_i32_105 = arith.constant 1 : i32
    %260 = vector.broadcast %c1_i32_105 : i32 to vector<1x256xi32>
    %261 = arith.addi %91, %260 : vector<1x256xi32>
    %c0_i32_106 = arith.constant 0 : i32
    %262 = vector.broadcast %c0_i32_106 : i32 to vector<1x256xi32>
    %263 = arith.cmpi sge, %261, %262 : vector<1x256xi32>
    %c1_i32_107 = arith.constant 1 : i32
    %264 = vector.broadcast %c1_i32_107 : i32 to vector<1x256xi32>
    %265 = arith.addi %91, %264 : vector<1x256xi32>
    %c16_i32_108 = arith.constant 16 : i32
    %266 = vector.broadcast %c16_i32_108 : i32 to vector<1x256xi32>
    %267 = arith.cmpi slt, %265, %266 : vector<1x256xi32>
    %268 = arith.andi %263, %267 : vector<1x256xi1>
    %c-1_i32_109 = arith.constant -1 : i32
    %269 = vector.broadcast %c-1_i32_109 : i32 to vector<1x256xi32>
    %270 = arith.addi %94, %269 : vector<1x256xi32>
    %c0_i32_110 = arith.constant 0 : i32
    %271 = vector.broadcast %c0_i32_110 : i32 to vector<1x256xi32>
    %272 = arith.cmpi sge, %270, %271 : vector<1x256xi32>
    %273 = arith.andi %268, %272 : vector<1x256xi1>
    %c-1_i32_111 = arith.constant -1 : i32
    %274 = vector.broadcast %c-1_i32_111 : i32 to vector<1x256xi32>
    %275 = arith.addi %94, %274 : vector<1x256xi32>
    %c16_i32_112 = arith.constant 16 : i32
    %276 = vector.broadcast %c16_i32_112 : i32 to vector<1x256xi32>
    %277 = arith.cmpi slt, %275, %276 : vector<1x256xi32>
    %278 = arith.andi %273, %277 : vector<1x256xi1>
    %cst_113 = arith.constant 1.000000e+00 : f32
    %cst_114 = arith.constant 0.000000e+00 : f32
    %279 = vector.broadcast %cst_113 : f32 to vector<1x256xf32>
    %280 = vector.broadcast %cst_114 : f32 to vector<1x256xf32>
    %281 = arith.select %278, %279, %280 : vector<1x256xi1>, vector<1x256xf32>
    %282 = vector.broadcast %281 : vector<1x256xf32> to vector<16x256xf32>
    %283 = arith.mulf %259, %282 : vector<16x256xf32>
    %c96 = arith.constant 96 : index
    %c0_115 = arith.constant 0 : index
    %284 = vector.load %arg27[%c96, %c0_115] : memref<144x256xf32, #tpu.memory_space<vmem>>, vector<16x256xf32>
    tpu.vector_store %arg27[%c96, %c0_115], %283 {strides = array<i32>} : memref<144x256xf32, #tpu.memory_space<vmem>>, vector<16x256xf32>,
    %c240_i32_116 = arith.constant 240 : i32
    %285 = tpu.dynamic_rotate %103 by %c240_i32_116 dim 1 : vector<16x256xf32>, i32 -> vector<16x256xf32>
    %c1_i32_117 = arith.constant 1 : i32
    %286 = vector.broadcast %c1_i32_117 : i32 to vector<1x256xi32>
    %287 = arith.addi %91, %286 : vector<1x256xi32>
    %c0_i32_118 = arith.constant 0 : i32
    %288 = vector.broadcast %c0_i32_118 : i32 to vector<1x256xi32>
    %289 = arith.cmpi sge, %287, %288 : vector<1x256xi32>
    %c1_i32_119 = arith.constant 1 : i32
    %290 = vector.broadcast %c1_i32_119 : i32 to vector<1x256xi32>
    %291 = arith.addi %91, %290 : vector<1x256xi32>
    %c16_i32_120 = arith.constant 16 : i32
    %292 = vector.broadcast %c16_i32_120 : i32 to vector<1x256xi32>
    %293 = arith.cmpi slt, %291, %292 : vector<1x256xi32>
    %294 = arith.andi %289, %293 : vector<1x256xi1>
    %c0_i32_121 = arith.constant 0 : i32
    %295 = vector.broadcast %c0_i32_121 : i32 to vector<1x256xi32>
    %296 = arith.addi %94, %295 : vector<1x256xi32>
    %c0_i32_122 = arith.constant 0 : i32
    %297 = vector.broadcast %c0_i32_122 : i32 to vector<1x256xi32>
    %298 = arith.cmpi sge, %296, %297 : vector<1x256xi32>
    %299 = arith.andi %294, %298 : vector<1x256xi1>
    %c0_i32_123 = arith.constant 0 : i32
    %300 = vector.broadcast %c0_i32_123 : i32 to vector<1x256xi32>
    %301 = arith.addi %94, %300 : vector<1x256xi32>
    %c16_i32_124 = arith.constant 16 : i32
    %302 = vector.broadcast %c16_i32_124 : i32 to vector<1x256xi32>
    %303 = arith.cmpi slt, %301, %302 : vector<1x256xi32>
    %304 = arith.andi %299, %303 : vector<1x256xi1>
    %cst_125 = arith.constant 1.000000e+00 : f32
    %cst_126 = arith.constant 0.000000e+00 : f32
    %305 = vector.broadcast %cst_125 : f32 to vector<1x256xf32>
    %306 = vector.broadcast %cst_126 : f32 to vector<1x256xf32>
    %307 = arith.select %304, %305, %306 : vector<1x256xi1>, vector<1x256xf32>
    %308 = vector.broadcast %307 : vector<1x256xf32> to vector<16x256xf32>
    %309 = arith.mulf %285, %308 : vector<16x256xf32>
    %c112 = arith.constant 112 : index
    %c0_127 = arith.constant 0 : index
    %310 = vector.load %arg27[%c112, %c0_127] : memref<144x256xf32, #tpu.memory_space<vmem>>, vector<16x256xf32>
    tpu.vector_store %arg27[%c112, %c0_127], %309 {strides = array<i32>} : memref<144x256xf32, #tpu.memory_space<vmem>>, vector<16x256xf32>,
    %c239_i32 = arith.constant 239 : i32
    %311 = tpu.dynamic_rotate %103 by %c239_i32 dim 1 : vector<16x256xf32>, i32 -> vector<16x256xf32>
    %c1_i32_128 = arith.constant 1 : i32
    %312 = vector.broadcast %c1_i32_128 : i32 to vector<1x256xi32>
    %313 = arith.addi %91, %312 : vector<1x256xi32>
    %c0_i32_129 = arith.constant 0 : i32
    %314 = vector.broadcast %c0_i32_129 : i32 to vector<1x256xi32>
    %315 = arith.cmpi sge, %313, %314 : vector<1x256xi32>
    %c1_i32_130 = arith.constant 1 : i32
    %316 = vector.broadcast %c1_i32_130 : i32 to vector<1x256xi32>
    %317 = arith.addi %91, %316 : vector<1x256xi32>
    %c16_i32_131 = arith.constant 16 : i32
    %318 = vector.broadcast %c16_i32_131 : i32 to vector<1x256xi32>
    %319 = arith.cmpi slt, %317, %318 : vector<1x256xi32>
    %320 = arith.andi %315, %319 : vector<1x256xi1>
    %c1_i32_132 = arith.constant 1 : i32
    %321 = vector.broadcast %c1_i32_132 : i32 to vector<1x256xi32>
    %322 = arith.addi %94, %321 : vector<1x256xi32>
    %c0_i32_133 = arith.constant 0 : i32
    %323 = vector.broadcast %c0_i32_133 : i32 to vector<1x256xi32>
    %324 = arith.cmpi sge, %322, %323 : vector<1x256xi32>
    %325 = arith.andi %320, %324 : vector<1x256xi1>
    %c1_i32_134 = arith.constant 1 : i32
    %326 = vector.broadcast %c1_i32_134 : i32 to vector<1x256xi32>
    %327 = arith.addi %94, %326 : vector<1x256xi32>
    %c16_i32_135 = arith.constant 16 : i32
    %328 = vector.broadcast %c16_i32_135 : i32 to vector<1x256xi32>
    %329 = arith.cmpi slt, %327, %328 : vector<1x256xi32>
    %330 = arith.andi %325, %329 : vector<1x256xi1>
    %cst_136 = arith.constant 1.000000e+00 : f32
    %cst_137 = arith.constant 0.000000e+00 : f32
    %331 = vector.broadcast %cst_136 : f32 to vector<1x256xf32>
    %332 = vector.broadcast %cst_137 : f32 to vector<1x256xf32>
    %333 = arith.select %330, %331, %332 : vector<1x256xi1>, vector<1x256xf32>
    %334 = vector.broadcast %333 : vector<1x256xf32> to vector<16x256xf32>
    %335 = arith.mulf %311, %334 : vector<16x256xf32>
    %c128 = arith.constant 128 : index
    %c0_138 = arith.constant 0 : index
    %336 = vector.load %arg27[%c128, %c0_138] : memref<144x256xf32, #tpu.memory_space<vmem>>, vector<16x256xf32>
    tpu.vector_store %arg27[%c128, %c0_138], %335 {strides = array<i32>} : memref<144x256xf32, #tpu.memory_space<vmem>>, vector<16x256xf32>,
    %c0_139 = arith.constant 0 : index
    %c0_140 = arith.constant 0 : index
    %337 = vector.load %arg4[%c0_139, %c0_140] : memref<16x144xf32, #tpu.memory_space<vmem>>, vector<16x144xf32>
    %c0_141 = arith.constant 0 : index
    %c0_142 = arith.constant 0 : index
    %338 = vector.load %arg5[%c0_141, %c0_142] : memref<16x1xf32, #tpu.memory_space<vmem>>, vector<16x1xf32>
    %c0_143 = arith.constant 0 : index
    %c0_144 = arith.constant 0 : index
    %339 = vector.load %arg27[%c0_143, %c0_144] : memref<144x256xf32, #tpu.memory_space<vmem>>, vector<144x256xf32>
    %cst_145 = arith.constant dense<0.000000e+00> : vector<16x256xf32>
    %340 = tpu.matmul %337, %339, %cst_145 {dimension_numbers = #tpu.dot_dimension_numbers<[1], [0], [0], [1], [0, 0, 1, 1], [], []>} : vector<16x144xf32>, vector<144x256xf32>, vector<16x256xf32> -> vector<16x256xf32>
    %341 = vector.broadcast %338 : vector<16x1xf32> to vector<16x256xf32>
    %342 = arith.addf %340, %341 : vector<16x256xf32>
    %cst_146 = arith.constant 0.000000e+00 : f32
    %343 = vector.broadcast %cst_146 : f32 to vector<16x256xf32>
    %344 = arith.maximumf %342, %343 : vector<16x256xf32>
    %c0_147 = arith.constant 0 : index
    %c0_148 = arith.constant 0 : index
    %345 = vector.load %arg6[%c0_147, %c0_148] : memref<16x16xf32, #tpu.memory_space<vmem>>, vector<16x16xf32>
    %c0_149 = arith.constant 0 : index
    %c0_150 = arith.constant 0 : index
    %346 = vector.load %arg7[%c0_149, %c0_150] : memref<16x1xf32, #tpu.memory_space<vmem>>, vector<16x1xf32>
    %cst_151 = arith.constant dense<0.000000e+00> : vector<16x256xf32>
    %347 = tpu.matmul %345, %344, %cst_151 {dimension_numbers = #tpu.dot_dimension_numbers<[1], [0], [0], [1], [0, 0, 1, 1], [], []>} : vector<16x16xf32>, vector<16x256xf32>, vector<16x256xf32> -> vector<16x256xf32>
    %348 = vector.broadcast %346 : vector<16x1xf32> to vector<16x256xf32>
    %349 = arith.addf %347, %348 : vector<16x256xf32>
    %cst_152 = arith.constant 0.000000e+00 : f32
    %350 = vector.broadcast %cst_152 : f32 to vector<16x256xf32>
    %351 = arith.maximumf %349, %350 : vector<16x256xf32>
    %c0_153 = arith.constant 0 : index
    %c0_154 = arith.constant 0 : index
    %352 = vector.load %arg8[%c0_153, %c0_154] : memref<16x16xf32, #tpu.memory_space<vmem>>, vector<16x16xf32>
    %c0_155 = arith.constant 0 : index
    %c0_156 = arith.constant 0 : index
    %353 = vector.load %arg9[%c0_155, %c0_156] : memref<16x1xf32, #tpu.memory_space<vmem>>, vector<16x1xf32>
    %cst_157 = arith.constant dense<0.000000e+00> : vector<16x256xf32>
    %354 = tpu.matmul %352, %351, %cst_157 {dimension_numbers = #tpu.dot_dimension_numbers<[1], [0], [0], [1], [0, 0, 1, 1], [], []>} : vector<16x16xf32>, vector<16x256xf32>, vector<16x256xf32> -> vector<16x256xf32>
    %355 = vector.broadcast %353 : vector<16x1xf32> to vector<16x256xf32>
    %356 = arith.addf %354, %355 : vector<16x256xf32>
    %cst_158 = arith.constant 0.000000e+00 : f32
    %357 = vector.broadcast %cst_158 : f32 to vector<16x256xf32>
    %358 = arith.maximumf %356, %357 : vector<16x256xf32>
    %c34_i32 = arith.constant 34 : i32
    %359 = tpu.dynamic_rotate %358 by %c34_i32 dim 1 : vector<16x256xf32>, i32 -> vector<16x256xf32>
    %c-2_i32 = arith.constant -2 : i32
    %360 = vector.broadcast %c-2_i32 : i32 to vector<1x256xi32>
    %361 = arith.addi %91, %360 : vector<1x256xi32>
    %c0_i32_159 = arith.constant 0 : i32
    %362 = vector.broadcast %c0_i32_159 : i32 to vector<1x256xi32>
    %363 = arith.cmpi sge, %361, %362 : vector<1x256xi32>
    %c-2_i32_160 = arith.constant -2 : i32
    %364 = vector.broadcast %c-2_i32_160 : i32 to vector<1x256xi32>
    %365 = arith.addi %91, %364 : vector<1x256xi32>
    %c16_i32_161 = arith.constant 16 : i32
    %366 = vector.broadcast %c16_i32_161 : i32 to vector<1x256xi32>
    %367 = arith.cmpi slt, %365, %366 : vector<1x256xi32>
    %368 = arith.andi %363, %367 : vector<1x256xi1>
    %c-2_i32_162 = arith.constant -2 : i32
    %369 = vector.broadcast %c-2_i32_162 : i32 to vector<1x256xi32>
    %370 = arith.addi %94, %369 : vector<1x256xi32>
    %c0_i32_163 = arith.constant 0 : i32
    %371 = vector.broadcast %c0_i32_163 : i32 to vector<1x256xi32>
    %372 = arith.cmpi sge, %370, %371 : vector<1x256xi32>
    %373 = arith.andi %368, %372 : vector<1x256xi1>
    %c-2_i32_164 = arith.constant -2 : i32
    %374 = vector.broadcast %c-2_i32_164 : i32 to vector<1x256xi32>
    %375 = arith.addi %94, %374 : vector<1x256xi32>
    %c16_i32_165 = arith.constant 16 : i32
    %376 = vector.broadcast %c16_i32_165 : i32 to vector<1x256xi32>
    %377 = arith.cmpi slt, %375, %376 : vector<1x256xi32>
    %378 = arith.andi %373, %377 : vector<1x256xi1>
    %cst_166 = arith.constant 1.000000e+00 : f32
    %cst_167 = arith.constant 0.000000e+00 : f32
    %379 = vector.broadcast %cst_166 : f32 to vector<1x256xf32>
    %380 = vector.broadcast %cst_167 : f32 to vector<1x256xf32>
    %381 = arith.select %378, %379, %380 : vector<1x256xi1>, vector<1x256xf32>
    %382 = vector.broadcast %381 : vector<1x256xf32> to vector<16x256xf32>
    %383 = arith.mulf %359, %382 : vector<16x256xf32>
    %c0_168 = arith.constant 0 : index
    %c0_169 = arith.constant 0 : index
    %384 = vector.load %arg27[%c0_168, %c0_169] : memref<144x256xf32, #tpu.memory_space<vmem>>, vector<16x256xf32>
    tpu.vector_store %arg27[%c0_168, %c0_169], %383 {strides = array<i32>} : memref<144x256xf32, #tpu.memory_space<vmem>>, vector<16x256xf32>,
    %c32_i32_170 = arith.constant 32 : i32
    %385 = tpu.dynamic_rotate %358 by %c32_i32_170 dim 1 : vector<16x256xf32>, i32 -> vector<16x256xf32>
    %c-2_i32_171 = arith.constant -2 : i32
    %386 = vector.broadcast %c-2_i32_171 : i32 to vector<1x256xi32>
    %387 = arith.addi %91, %386 : vector<1x256xi32>
    %c0_i32_172 = arith.constant 0 : i32
    %388 = vector.broadcast %c0_i32_172 : i32 to vector<1x256xi32>
    %389 = arith.cmpi sge, %387, %388 : vector<1x256xi32>
    %c-2_i32_173 = arith.constant -2 : i32
    %390 = vector.broadcast %c-2_i32_173 : i32 to vector<1x256xi32>
    %391 = arith.addi %91, %390 : vector<1x256xi32>
    %c16_i32_174 = arith.constant 16 : i32
    %392 = vector.broadcast %c16_i32_174 : i32 to vector<1x256xi32>
    %393 = arith.cmpi slt, %391, %392 : vector<1x256xi32>
    %394 = arith.andi %389, %393 : vector<1x256xi1>
    %c0_i32_175 = arith.constant 0 : i32
    %395 = vector.broadcast %c0_i32_175 : i32 to vector<1x256xi32>
    %396 = arith.addi %94, %395 : vector<1x256xi32>
    %c0_i32_176 = arith.constant 0 : i32
    %397 = vector.broadcast %c0_i32_176 : i32 to vector<1x256xi32>
    %398 = arith.cmpi sge, %396, %397 : vector<1x256xi32>
    %399 = arith.andi %394, %398 : vector<1x256xi1>
    %c0_i32_177 = arith.constant 0 : i32
    %400 = vector.broadcast %c0_i32_177 : i32 to vector<1x256xi32>
    %401 = arith.addi %94, %400 : vector<1x256xi32>
    %c16_i32_178 = arith.constant 16 : i32
    %402 = vector.broadcast %c16_i32_178 : i32 to vector<1x256xi32>
    %403 = arith.cmpi slt, %401, %402 : vector<1x256xi32>
    %404 = arith.andi %399, %403 : vector<1x256xi1>
    %cst_179 = arith.constant 1.000000e+00 : f32
    %cst_180 = arith.constant 0.000000e+00 : f32
    %405 = vector.broadcast %cst_179 : f32 to vector<1x256xf32>
    %406 = vector.broadcast %cst_180 : f32 to vector<1x256xf32>
    %407 = arith.select %404, %405, %406 : vector<1x256xi1>, vector<1x256xf32>
    %408 = vector.broadcast %407 : vector<1x256xf32> to vector<16x256xf32>
    %409 = arith.mulf %385, %408 : vector<16x256xf32>
    %c16_181 = arith.constant 16 : index
    %c0_182 = arith.constant 0 : index
    %410 = vector.load %arg27[%c16_181, %c0_182] : memref<144x256xf32, #tpu.memory_space<vmem>>, vector<16x256xf32>
    tpu.vector_store %arg27[%c16_181, %c0_182], %409 {strides = array<i32>} : memref<144x256xf32, #tpu.memory_space<vmem>>, vector<16x256xf32>,
    %c30_i32 = arith.constant 30 : i32
    %411 = tpu.dynamic_rotate %358 by %c30_i32 dim 1 : vector<16x256xf32>, i32 -> vector<16x256xf32>
    %c-2_i32_183 = arith.constant -2 : i32
    %412 = vector.broadcast %c-2_i32_183 : i32 to vector<1x256xi32>
    %413 = arith.addi %91, %412 : vector<1x256xi32>
    %c0_i32_184 = arith.constant 0 : i32
    %414 = vector.broadcast %c0_i32_184 : i32 to vector<1x256xi32>
    %415 = arith.cmpi sge, %413, %414 : vector<1x256xi32>
    %c-2_i32_185 = arith.constant -2 : i32
    %416 = vector.broadcast %c-2_i32_185 : i32 to vector<1x256xi32>
    %417 = arith.addi %91, %416 : vector<1x256xi32>
    %c16_i32_186 = arith.constant 16 : i32
    %418 = vector.broadcast %c16_i32_186 : i32 to vector<1x256xi32>
    %419 = arith.cmpi slt, %417, %418 : vector<1x256xi32>
    %420 = arith.andi %415, %419 : vector<1x256xi1>
    %c2_i32 = arith.constant 2 : i32
    %421 = vector.broadcast %c2_i32 : i32 to vector<1x256xi32>
    %422 = arith.addi %94, %421 : vector<1x256xi32>
    %c0_i32_187 = arith.constant 0 : i32
    %423 = vector.broadcast %c0_i32_187 : i32 to vector<1x256xi32>
    %424 = arith.cmpi sge, %422, %423 : vector<1x256xi32>
    %425 = arith.andi %420, %424 : vector<1x256xi1>
    %c2_i32_188 = arith.constant 2 : i32
    %426 = vector.broadcast %c2_i32_188 : i32 to vector<1x256xi32>
    %427 = arith.addi %94, %426 : vector<1x256xi32>
    %c16_i32_189 = arith.constant 16 : i32
    %428 = vector.broadcast %c16_i32_189 : i32 to vector<1x256xi32>
    %429 = arith.cmpi slt, %427, %428 : vector<1x256xi32>
    %430 = arith.andi %425, %429 : vector<1x256xi1>
    %cst_190 = arith.constant 1.000000e+00 : f32
    %cst_191 = arith.constant 0.000000e+00 : f32
    %431 = vector.broadcast %cst_190 : f32 to vector<1x256xf32>
    %432 = vector.broadcast %cst_191 : f32 to vector<1x256xf32>
    %433 = arith.select %430, %431, %432 : vector<1x256xi1>, vector<1x256xf32>
    %434 = vector.broadcast %433 : vector<1x256xf32> to vector<16x256xf32>
    %435 = arith.mulf %411, %434 : vector<16x256xf32>
    %c32_192 = arith.constant 32 : index
    %c0_193 = arith.constant 0 : index
    %436 = vector.load %arg27[%c32_192, %c0_193] : memref<144x256xf32, #tpu.memory_space<vmem>>, vector<16x256xf32>
    tpu.vector_store %arg27[%c32_192, %c0_193], %435 {strides = array<i32>} : memref<144x256xf32, #tpu.memory_space<vmem>>, vector<16x256xf32>,
    %c2_i32_194 = arith.constant 2 : i32
    %437 = tpu.dynamic_rotate %358 by %c2_i32_194 dim 1 : vector<16x256xf32>, i32 -> vector<16x256xf32>
    %c0_i32_195 = arith.constant 0 : i32
    %438 = vector.broadcast %c0_i32_195 : i32 to vector<1x256xi32>
    %439 = arith.addi %91, %438 : vector<1x256xi32>
    %c0_i32_196 = arith.constant 0 : i32
    %440 = vector.broadcast %c0_i32_196 : i32 to vector<1x256xi32>
    %441 = arith.cmpi sge, %439, %440 : vector<1x256xi32>
    %c0_i32_197 = arith.constant 0 : i32
    %442 = vector.broadcast %c0_i32_197 : i32 to vector<1x256xi32>
    %443 = arith.addi %91, %442 : vector<1x256xi32>
    %c16_i32_198 = arith.constant 16 : i32
    %444 = vector.broadcast %c16_i32_198 : i32 to vector<1x256xi32>
    %445 = arith.cmpi slt, %443, %444 : vector<1x256xi32>
    %446 = arith.andi %441, %445 : vector<1x256xi1>
    %c-2_i32_199 = arith.constant -2 : i32
    %447 = vector.broadcast %c-2_i32_199 : i32 to vector<1x256xi32>
    %448 = arith.addi %94, %447 : vector<1x256xi32>
    %c0_i32_200 = arith.constant 0 : i32
    %449 = vector.broadcast %c0_i32_200 : i32 to vector<1x256xi32>
    %450 = arith.cmpi sge, %448, %449 : vector<1x256xi32>
    %451 = arith.andi %446, %450 : vector<1x256xi1>
    %c-2_i32_201 = arith.constant -2 : i32
    %452 = vector.broadcast %c-2_i32_201 : i32 to vector<1x256xi32>
    %453 = arith.addi %94, %452 : vector<1x256xi32>
    %c16_i32_202 = arith.constant 16 : i32
    %454 = vector.broadcast %c16_i32_202 : i32 to vector<1x256xi32>
    %455 = arith.cmpi slt, %453, %454 : vector<1x256xi32>
    %456 = arith.andi %451, %455 : vector<1x256xi1>
    %cst_203 = arith.constant 1.000000e+00 : f32
    %cst_204 = arith.constant 0.000000e+00 : f32
    %457 = vector.broadcast %cst_203 : f32 to vector<1x256xf32>
    %458 = vector.broadcast %cst_204 : f32 to vector<1x256xf32>
    %459 = arith.select %456, %457, %458 : vector<1x256xi1>, vector<1x256xf32>
    %460 = vector.broadcast %459 : vector<1x256xf32> to vector<16x256xf32>
    %461 = arith.mulf %437, %460 : vector<16x256xf32>
    %c48_205 = arith.constant 48 : index
    %c0_206 = arith.constant 0 : index
    %462 = vector.load %arg27[%c48_205, %c0_206] : memref<144x256xf32, #tpu.memory_space<vmem>>, vector<16x256xf32>
    tpu.vector_store %arg27[%c48_205, %c0_206], %461 {strides = array<i32>} : memref<144x256xf32, #tpu.memory_space<vmem>>, vector<16x256xf32>,
    %c0_i32_207 = arith.constant 0 : i32
    %463 = vector.broadcast %c0_i32_207 : i32 to vector<1x256xi32>
    %464 = arith.addi %91, %463 : vector<1x256xi32>
    %c0_i32_208 = arith.constant 0 : i32
    %465 = vector.broadcast %c0_i32_208 : i32 to vector<1x256xi32>
    %466 = arith.cmpi sge, %464, %465 : vector<1x256xi32>
    %c0_i32_209 = arith.constant 0 : i32
    %467 = vector.broadcast %c0_i32_209 : i32 to vector<1x256xi32>
    %468 = arith.addi %91, %467 : vector<1x256xi32>
    %c16_i32_210 = arith.constant 16 : i32
    %469 = vector.broadcast %c16_i32_210 : i32 to vector<1x256xi32>
    %470 = arith.cmpi slt, %468, %469 : vector<1x256xi32>
    %471 = arith.andi %466, %470 : vector<1x256xi1>
    %c0_i32_211 = arith.constant 0 : i32
    %472 = vector.broadcast %c0_i32_211 : i32 to vector<1x256xi32>
    %473 = arith.addi %94, %472 : vector<1x256xi32>
    %c0_i32_212 = arith.constant 0 : i32
    %474 = vector.broadcast %c0_i32_212 : i32 to vector<1x256xi32>
    %475 = arith.cmpi sge, %473, %474 : vector<1x256xi32>
    %476 = arith.andi %471, %475 : vector<1x256xi1>
    %c0_i32_213 = arith.constant 0 : i32
    %477 = vector.broadcast %c0_i32_213 : i32 to vector<1x256xi32>
    %478 = arith.addi %94, %477 : vector<1x256xi32>
    %c16_i32_214 = arith.constant 16 : i32
    %479 = vector.broadcast %c16_i32_214 : i32 to vector<1x256xi32>
    %480 = arith.cmpi slt, %478, %479 : vector<1x256xi32>
    %481 = arith.andi %476, %480 : vector<1x256xi1>
    %cst_215 = arith.constant 1.000000e+00 : f32
    %cst_216 = arith.constant 0.000000e+00 : f32
    %482 = vector.broadcast %cst_215 : f32 to vector<1x256xf32>
    %483 = vector.broadcast %cst_216 : f32 to vector<1x256xf32>
    %484 = arith.select %481, %482, %483 : vector<1x256xi1>, vector<1x256xf32>
    %485 = vector.broadcast %484 : vector<1x256xf32> to vector<16x256xf32>
    %486 = arith.mulf %358, %485 : vector<16x256xf32>
    %c64_217 = arith.constant 64 : index
    %c0_218 = arith.constant 0 : index
    %487 = vector.load %arg27[%c64_217, %c0_218] : memref<144x256xf32, #tpu.memory_space<vmem>>, vector<16x256xf32>
    tpu.vector_store %arg27[%c64_217, %c0_218], %486 {strides = array<i32>} : memref<144x256xf32, #tpu.memory_space<vmem>>, vector<16x256xf32>,
    %c254_i32 = arith.constant 254 : i32
    %488 = tpu.dynamic_rotate %358 by %c254_i32 dim 1 : vector<16x256xf32>, i32 -> vector<16x256xf32>
    %c0_i32_219 = arith.constant 0 : i32
    %489 = vector.broadcast %c0_i32_219 : i32 to vector<1x256xi32>
    %490 = arith.addi %91, %489 : vector<1x256xi32>
    %c0_i32_220 = arith.constant 0 : i32
    %491 = vector.broadcast %c0_i32_220 : i32 to vector<1x256xi32>
    %492 = arith.cmpi sge, %490, %491 : vector<1x256xi32>
    %c0_i32_221 = arith.constant 0 : i32
    %493 = vector.broadcast %c0_i32_221 : i32 to vector<1x256xi32>
    %494 = arith.addi %91, %493 : vector<1x256xi32>
    %c16_i32_222 = arith.constant 16 : i32
    %495 = vector.broadcast %c16_i32_222 : i32 to vector<1x256xi32>
    %496 = arith.cmpi slt, %494, %495 : vector<1x256xi32>
    %497 = arith.andi %492, %496 : vector<1x256xi1>
    %c2_i32_223 = arith.constant 2 : i32
    %498 = vector.broadcast %c2_i32_223 : i32 to vector<1x256xi32>
    %499 = arith.addi %94, %498 : vector<1x256xi32>
    %c0_i32_224 = arith.constant 0 : i32
    %500 = vector.broadcast %c0_i32_224 : i32 to vector<1x256xi32>
    %501 = arith.cmpi sge, %499, %500 : vector<1x256xi32>
    %502 = arith.andi %497, %501 : vector<1x256xi1>
    %c2_i32_225 = arith.constant 2 : i32
    %503 = vector.broadcast %c2_i32_225 : i32 to vector<1x256xi32>
    %504 = arith.addi %94, %503 : vector<1x256xi32>
    %c16_i32_226 = arith.constant 16 : i32
    %505 = vector.broadcast %c16_i32_226 : i32 to vector<1x256xi32>
    %506 = arith.cmpi slt, %504, %505 : vector<1x256xi32>
    %507 = arith.andi %502, %506 : vector<1x256xi1>
    %cst_227 = arith.constant 1.000000e+00 : f32
    %cst_228 = arith.constant 0.000000e+00 : f32
    %508 = vector.broadcast %cst_227 : f32 to vector<1x256xf32>
    %509 = vector.broadcast %cst_228 : f32 to vector<1x256xf32>
    %510 = arith.select %507, %508, %509 : vector<1x256xi1>, vector<1x256xf32>
    %511 = vector.broadcast %510 : vector<1x256xf32> to vector<16x256xf32>
    %512 = arith.mulf %488, %511 : vector<16x256xf32>
    %c80_229 = arith.constant 80 : index
    %c0_230 = arith.constant 0 : index
    %513 = vector.load %arg27[%c80_229, %c0_230] : memref<144x256xf32, #tpu.memory_space<vmem>>, vector<16x256xf32>
    tpu.vector_store %arg27[%c80_229, %c0_230], %512 {strides = array<i32>} : memref<144x256xf32, #tpu.memory_space<vmem>>, vector<16x256xf32>,
    %c226_i32 = arith.constant 226 : i32
    %514 = tpu.dynamic_rotate %358 by %c226_i32 dim 1 : vector<16x256xf32>, i32 -> vector<16x256xf32>
    %c2_i32_231 = arith.constant 2 : i32
    %515 = vector.broadcast %c2_i32_231 : i32 to vector<1x256xi32>
    %516 = arith.addi %91, %515 : vector<1x256xi32>
    %c0_i32_232 = arith.constant 0 : i32
    %517 = vector.broadcast %c0_i32_232 : i32 to vector<1x256xi32>
    %518 = arith.cmpi sge, %516, %517 : vector<1x256xi32>
    %c2_i32_233 = arith.constant 2 : i32
    %519 = vector.broadcast %c2_i32_233 : i32 to vector<1x256xi32>
    %520 = arith.addi %91, %519 : vector<1x256xi32>
    %c16_i32_234 = arith.constant 16 : i32
    %521 = vector.broadcast %c16_i32_234 : i32 to vector<1x256xi32>
    %522 = arith.cmpi slt, %520, %521 : vector<1x256xi32>
    %523 = arith.andi %518, %522 : vector<1x256xi1>
    %c-2_i32_235 = arith.constant -2 : i32
    %524 = vector.broadcast %c-2_i32_235 : i32 to vector<1x256xi32>
    %525 = arith.addi %94, %524 : vector<1x256xi32>
    %c0_i32_236 = arith.constant 0 : i32
    %526 = vector.broadcast %c0_i32_236 : i32 to vector<1x256xi32>
    %527 = arith.cmpi sge, %525, %526 : vector<1x256xi32>
    %528 = arith.andi %523, %527 : vector<1x256xi1>
    %c-2_i32_237 = arith.constant -2 : i32
    %529 = vector.broadcast %c-2_i32_237 : i32 to vector<1x256xi32>
    %530 = arith.addi %94, %529 : vector<1x256xi32>
    %c16_i32_238 = arith.constant 16 : i32
    %531 = vector.broadcast %c16_i32_238 : i32 to vector<1x256xi32>
    %532 = arith.cmpi slt, %530, %531 : vector<1x256xi32>
    %533 = arith.andi %528, %532 : vector<1x256xi1>
    %cst_239 = arith.constant 1.000000e+00 : f32
    %cst_240 = arith.constant 0.000000e+00 : f32
    %534 = vector.broadcast %cst_239 : f32 to vector<1x256xf32>
    %535 = vector.broadcast %cst_240 : f32 to vector<1x256xf32>
    %536 = arith.select %533, %534, %535 : vector<1x256xi1>, vector<1x256xf32>
    %537 = vector.broadcast %536 : vector<1x256xf32> to vector<16x256xf32>
    %538 = arith.mulf %514, %537 : vector<16x256xf32>
    %c96_241 = arith.constant 96 : index
    %c0_242 = arith.constant 0 : index
    %539 = vector.load %arg27[%c96_241, %c0_242] : memref<144x256xf32, #tpu.memory_space<vmem>>, vector<16x256xf32>
    tpu.vector_store %arg27[%c96_241, %c0_242], %538 {strides = array<i32>} : memref<144x256xf32, #tpu.memory_space<vmem>>, vector<16x256xf32>,
    %c224_i32_243 = arith.constant 224 : i32
    %540 = tpu.dynamic_rotate %358 by %c224_i32_243 dim 1 : vector<16x256xf32>, i32 -> vector<16x256xf32>
    %c2_i32_244 = arith.constant 2 : i32
    %541 = vector.broadcast %c2_i32_244 : i32 to vector<1x256xi32>
    %542 = arith.addi %91, %541 : vector<1x256xi32>
    %c0_i32_245 = arith.constant 0 : i32
    %543 = vector.broadcast %c0_i32_245 : i32 to vector<1x256xi32>
    %544 = arith.cmpi sge, %542, %543 : vector<1x256xi32>
    %c2_i32_246 = arith.constant 2 : i32
    %545 = vector.broadcast %c2_i32_246 : i32 to vector<1x256xi32>
    %546 = arith.addi %91, %545 : vector<1x256xi32>
    %c16_i32_247 = arith.constant 16 : i32
    %547 = vector.broadcast %c16_i32_247 : i32 to vector<1x256xi32>
    %548 = arith.cmpi slt, %546, %547 : vector<1x256xi32>
    %549 = arith.andi %544, %548 : vector<1x256xi1>
    %c0_i32_248 = arith.constant 0 : i32
    %550 = vector.broadcast %c0_i32_248 : i32 to vector<1x256xi32>
    %551 = arith.addi %94, %550 : vector<1x256xi32>
    %c0_i32_249 = arith.constant 0 : i32
    %552 = vector.broadcast %c0_i32_249 : i32 to vector<1x256xi32>
    %553 = arith.cmpi sge, %551, %552 : vector<1x256xi32>
    %554 = arith.andi %549, %553 : vector<1x256xi1>
    %c0_i32_250 = arith.constant 0 : i32
    %555 = vector.broadcast %c0_i32_250 : i32 to vector<1x256xi32>
    %556 = arith.addi %94, %555 : vector<1x256xi32>
    %c16_i32_251 = arith.constant 16 : i32
    %557 = vector.broadcast %c16_i32_251 : i32 to vector<1x256xi32>
    %558 = arith.cmpi slt, %556, %557 : vector<1x256xi32>
    %559 = arith.andi %554, %558 : vector<1x256xi1>
    %cst_252 = arith.constant 1.000000e+00 : f32
    %cst_253 = arith.constant 0.000000e+00 : f32
    %560 = vector.broadcast %cst_252 : f32 to vector<1x256xf32>
    %561 = vector.broadcast %cst_253 : f32 to vector<1x256xf32>
    %562 = arith.select %559, %560, %561 : vector<1x256xi1>, vector<1x256xf32>
    %563 = vector.broadcast %562 : vector<1x256xf32> to vector<16x256xf32>
    %564 = arith.mulf %540, %563 : vector<16x256xf32>
    %c112_254 = arith.constant 112 : index
    %c0_255 = arith.constant 0 : index
    %565 = vector.load %arg27[%c112_254, %c0_255] : memref<144x256xf32, #tpu.memory_space<vmem>>, vector<16x256xf32>
    tpu.vector_store %arg27[%c112_254, %c0_255], %564 {strides = array<i32>} : memref<144x256xf32, #tpu.memory_space<vmem>>, vector<16x256xf32>,
    %c222_i32 = arith.constant 222 : i32
    %566 = tpu.dynamic_rotate %358 by %c222_i32 dim 1 : vector<16x256xf32>, i32 -> vector<16x256xf32>
    %c2_i32_256 = arith.constant 2 : i32
    %567 = vector.broadcast %c2_i32_256 : i32 to vector<1x256xi32>
    %568 = arith.addi %91, %567 : vector<1x256xi32>
    %c0_i32_257 = arith.constant 0 : i32
    %569 = vector.broadcast %c0_i32_257 : i32 to vector<1x256xi32>
    %570 = arith.cmpi sge, %568, %569 : vector<1x256xi32>
    %c2_i32_258 = arith.constant 2 : i32
    %571 = vector.broadcast %c2_i32_258 : i32 to vector<1x256xi32>
    %572 = arith.addi %91, %571 : vector<1x256xi32>
    %c16_i32_259 = arith.constant 16 : i32
    %573 = vector.broadcast %c16_i32_259 : i32 to vector<1x256xi32>
    %574 = arith.cmpi slt, %572, %573 : vector<1x256xi32>
    %575 = arith.andi %570, %574 : vector<1x256xi1>
    %c2_i32_260 = arith.constant 2 : i32
    %576 = vector.broadcast %c2_i32_260 : i32 to vector<1x256xi32>
    %577 = arith.addi %94, %576 : vector<1x256xi32>
    %c0_i32_261 = arith.constant 0 : i32
    %578 = vector.broadcast %c0_i32_261 : i32 to vector<1x256xi32>
    %579 = arith.cmpi sge, %577, %578 : vector<1x256xi32>
    %580 = arith.andi %575, %579 : vector<1x256xi1>
    %c2_i32_262 = arith.constant 2 : i32
    %581 = vector.broadcast %c2_i32_262 : i32 to vector<1x256xi32>
    %582 = arith.addi %94, %581 : vector<1x256xi32>
    %c16_i32_263 = arith.constant 16 : i32
    %583 = vector.broadcast %c16_i32_263 : i32 to vector<1x256xi32>
    %584 = arith.cmpi slt, %582, %583 : vector<1x256xi32>
    %585 = arith.andi %580, %584 : vector<1x256xi1>
    %cst_264 = arith.constant 1.000000e+00 : f32
    %cst_265 = arith.constant 0.000000e+00 : f32
    %586 = vector.broadcast %cst_264 : f32 to vector<1x256xf32>
    %587 = vector.broadcast %cst_265 : f32 to vector<1x256xf32>
    %588 = arith.select %585, %586, %587 : vector<1x256xi1>, vector<1x256xf32>
    %589 = vector.broadcast %588 : vector<1x256xf32> to vector<16x256xf32>
    %590 = arith.mulf %566, %589 : vector<16x256xf32>
    %c128_266 = arith.constant 128 : index
    %c0_267 = arith.constant 0 : index
    %591 = vector.load %arg27[%c128_266, %c0_267] : memref<144x256xf32, #tpu.memory_space<vmem>>, vector<16x256xf32>
    tpu.vector_store %arg27[%c128_266, %c0_267], %590 {strides = array<i32>} : memref<144x256xf32, #tpu.memory_space<vmem>>, vector<16x256xf32>,
    %c0_268 = arith.constant 0 : index
    %c0_269 = arith.constant 0 : index
    %592 = vector.load %arg10[%c0_268, %c0_269] : memref<16x144xf32, #tpu.memory_space<vmem>>, vector<16x144xf32>
    %c0_270 = arith.constant 0 : index
    %c0_271 = arith.constant 0 : index
    %593 = vector.load %arg11[%c0_270, %c0_271] : memref<16x1xf32, #tpu.memory_space<vmem>>, vector<16x1xf32>
    %c0_272 = arith.constant 0 : index
    %c0_273 = arith.constant 0 : index
    %594 = vector.load %arg27[%c0_272, %c0_273] : memref<144x256xf32, #tpu.memory_space<vmem>>, vector<144x256xf32>
    %cst_274 = arith.constant dense<0.000000e+00> : vector<16x256xf32>
    %595 = tpu.matmul %592, %594, %cst_274 {dimension_numbers = #tpu.dot_dimension_numbers<[1], [0], [0], [1], [0, 0, 1, 1], [], []>} : vector<16x144xf32>, vector<144x256xf32>, vector<16x256xf32> -> vector<16x256xf32>
    %596 = vector.broadcast %593 : vector<16x1xf32> to vector<16x256xf32>
    %597 = arith.addf %595, %596 : vector<16x256xf32>
    %cst_275 = arith.constant 0.000000e+00 : f32
    %598 = vector.broadcast %cst_275 : f32 to vector<16x256xf32>
    %599 = arith.maximumf %597, %598 : vector<16x256xf32>
    %c0_276 = arith.constant 0 : index
    %c0_277 = arith.constant 0 : index
    %600 = vector.load %arg12[%c0_276, %c0_277] : memref<16x16xf32, #tpu.memory_space<vmem>>, vector<16x16xf32>
    %c0_278 = arith.constant 0 : index
    %c0_279 = arith.constant 0 : index
    %601 = vector.load %arg13[%c0_278, %c0_279] : memref<16x1xf32, #tpu.memory_space<vmem>>, vector<16x1xf32>
    %cst_280 = arith.constant dense<0.000000e+00> : vector<16x256xf32>
    %602 = tpu.matmul %600, %599, %cst_280 {dimension_numbers = #tpu.dot_dimension_numbers<[1], [0], [0], [1], [0, 0, 1, 1], [], []>} : vector<16x16xf32>, vector<16x256xf32>, vector<16x256xf32> -> vector<16x256xf32>
    %603 = vector.broadcast %601 : vector<16x1xf32> to vector<16x256xf32>
    %604 = arith.addf %602, %603 : vector<16x256xf32>
    %605 = arith.addf %358, %604 : vector<16x256xf32>
    %c34_i32_281 = arith.constant 34 : i32
    %606 = tpu.dynamic_rotate %605 by %c34_i32_281 dim 1 : vector<16x256xf32>, i32 -> vector<16x256xf32>
    %c-2_i32_282 = arith.constant -2 : i32
    %607 = vector.broadcast %c-2_i32_282 : i32 to vector<1x256xi32>
    %608 = arith.addi %91, %607 : vector<1x256xi32>
    %c0_i32_283 = arith.constant 0 : i32
    %609 = vector.broadcast %c0_i32_283 : i32 to vector<1x256xi32>
    %610 = arith.cmpi sge, %608, %609 : vector<1x256xi32>
    %c-2_i32_284 = arith.constant -2 : i32
    %611 = vector.broadcast %c-2_i32_284 : i32 to vector<1x256xi32>
    %612 = arith.addi %91, %611 : vector<1x256xi32>
    %c16_i32_285 = arith.constant 16 : i32
    %613 = vector.broadcast %c16_i32_285 : i32 to vector<1x256xi32>
    %614 = arith.cmpi slt, %612, %613 : vector<1x256xi32>
    %615 = arith.andi %610, %614 : vector<1x256xi1>
    %c-2_i32_286 = arith.constant -2 : i32
    %616 = vector.broadcast %c-2_i32_286 : i32 to vector<1x256xi32>
    %617 = arith.addi %94, %616 : vector<1x256xi32>
    %c0_i32_287 = arith.constant 0 : i32
    %618 = vector.broadcast %c0_i32_287 : i32 to vector<1x256xi32>
    %619 = arith.cmpi sge, %617, %618 : vector<1x256xi32>
    %620 = arith.andi %615, %619 : vector<1x256xi1>
    %c-2_i32_288 = arith.constant -2 : i32
    %621 = vector.broadcast %c-2_i32_288 : i32 to vector<1x256xi32>
    %622 = arith.addi %94, %621 : vector<1x256xi32>
    %c16_i32_289 = arith.constant 16 : i32
    %623 = vector.broadcast %c16_i32_289 : i32 to vector<1x256xi32>
    %624 = arith.cmpi slt, %622, %623 : vector<1x256xi32>
    %625 = arith.andi %620, %624 : vector<1x256xi1>
    %cst_290 = arith.constant 1.000000e+00 : f32
    %cst_291 = arith.constant 0.000000e+00 : f32
    %626 = vector.broadcast %cst_290 : f32 to vector<1x256xf32>
    %627 = vector.broadcast %cst_291 : f32 to vector<1x256xf32>
    %628 = arith.select %625, %626, %627 : vector<1x256xi1>, vector<1x256xf32>
    %629 = vector.broadcast %628 : vector<1x256xf32> to vector<16x256xf32>
    %630 = arith.mulf %606, %629 : vector<16x256xf32>
    %c0_292 = arith.constant 0 : index
    %c0_293 = arith.constant 0 : index
    %631 = vector.load %arg27[%c0_292, %c0_293] : memref<144x256xf32, #tpu.memory_space<vmem>>, vector<16x256xf32>
    tpu.vector_store %arg27[%c0_292, %c0_293], %630 {strides = array<i32>} : memref<144x256xf32, #tpu.memory_space<vmem>>, vector<16x256xf32>,
    %c32_i32_294 = arith.constant 32 : i32
    %632 = tpu.dynamic_rotate %605 by %c32_i32_294 dim 1 : vector<16x256xf32>, i32 -> vector<16x256xf32>
    %c-2_i32_295 = arith.constant -2 : i32
    %633 = vector.broadcast %c-2_i32_295 : i32 to vector<1x256xi32>
    %634 = arith.addi %91, %633 : vector<1x256xi32>
    %c0_i32_296 = arith.constant 0 : i32
    %635 = vector.broadcast %c0_i32_296 : i32 to vector<1x256xi32>
    %636 = arith.cmpi sge, %634, %635 : vector<1x256xi32>
    %c-2_i32_297 = arith.constant -2 : i32
    %637 = vector.broadcast %c-2_i32_297 : i32 to vector<1x256xi32>
    %638 = arith.addi %91, %637 : vector<1x256xi32>
    %c16_i32_298 = arith.constant 16 : i32
    %639 = vector.broadcast %c16_i32_298 : i32 to vector<1x256xi32>
    %640 = arith.cmpi slt, %638, %639 : vector<1x256xi32>
    %641 = arith.andi %636, %640 : vector<1x256xi1>
    %c0_i32_299 = arith.constant 0 : i32
    %642 = vector.broadcast %c0_i32_299 : i32 to vector<1x256xi32>
    %643 = arith.addi %94, %642 : vector<1x256xi32>
    %c0_i32_300 = arith.constant 0 : i32
    %644 = vector.broadcast %c0_i32_300 : i32 to vector<1x256xi32>
    %645 = arith.cmpi sge, %643, %644 : vector<1x256xi32>
    %646 = arith.andi %641, %645 : vector<1x256xi1>
    %c0_i32_301 = arith.constant 0 : i32
    %647 = vector.broadcast %c0_i32_301 : i32 to vector<1x256xi32>
    %648 = arith.addi %94, %647 : vector<1x256xi32>
    %c16_i32_302 = arith.constant 16 : i32
    %649 = vector.broadcast %c16_i32_302 : i32 to vector<1x256xi32>
    %650 = arith.cmpi slt, %648, %649 : vector<1x256xi32>
    %651 = arith.andi %646, %650 : vector<1x256xi1>
    %cst_303 = arith.constant 1.000000e+00 : f32
    %cst_304 = arith.constant 0.000000e+00 : f32
    %652 = vector.broadcast %cst_303 : f32 to vector<1x256xf32>
    %653 = vector.broadcast %cst_304 : f32 to vector<1x256xf32>
    %654 = arith.select %651, %652, %653 : vector<1x256xi1>, vector<1x256xf32>
    %655 = vector.broadcast %654 : vector<1x256xf32> to vector<16x256xf32>
    %656 = arith.mulf %632, %655 : vector<16x256xf32>
    %c16_305 = arith.constant 16 : index
    %c0_306 = arith.constant 0 : index
    %657 = vector.load %arg27[%c16_305, %c0_306] : memref<144x256xf32, #tpu.memory_space<vmem>>, vector<16x256xf32>
    tpu.vector_store %arg27[%c16_305, %c0_306], %656 {strides = array<i32>} : memref<144x256xf32, #tpu.memory_space<vmem>>, vector<16x256xf32>,
    %c30_i32_307 = arith.constant 30 : i32
    %658 = tpu.dynamic_rotate %605 by %c30_i32_307 dim 1 : vector<16x256xf32>, i32 -> vector<16x256xf32>
    %c-2_i32_308 = arith.constant -2 : i32
    %659 = vector.broadcast %c-2_i32_308 : i32 to vector<1x256xi32>
    %660 = arith.addi %91, %659 : vector<1x256xi32>
    %c0_i32_309 = arith.constant 0 : i32
    %661 = vector.broadcast %c0_i32_309 : i32 to vector<1x256xi32>
    %662 = arith.cmpi sge, %660, %661 : vector<1x256xi32>
    %c-2_i32_310 = arith.constant -2 : i32
    %663 = vector.broadcast %c-2_i32_310 : i32 to vector<1x256xi32>
    %664 = arith.addi %91, %663 : vector<1x256xi32>
    %c16_i32_311 = arith.constant 16 : i32
    %665 = vector.broadcast %c16_i32_311 : i32 to vector<1x256xi32>
    %666 = arith.cmpi slt, %664, %665 : vector<1x256xi32>
    %667 = arith.andi %662, %666 : vector<1x256xi1>
    %c2_i32_312 = arith.constant 2 : i32
    %668 = vector.broadcast %c2_i32_312 : i32 to vector<1x256xi32>
    %669 = arith.addi %94, %668 : vector<1x256xi32>
    %c0_i32_313 = arith.constant 0 : i32
    %670 = vector.broadcast %c0_i32_313 : i32 to vector<1x256xi32>
    %671 = arith.cmpi sge, %669, %670 : vector<1x256xi32>
    %672 = arith.andi %667, %671 : vector<1x256xi1>
    %c2_i32_314 = arith.constant 2 : i32
    %673 = vector.broadcast %c2_i32_314 : i32 to vector<1x256xi32>
    %674 = arith.addi %94, %673 : vector<1x256xi32>
    %c16_i32_315 = arith.constant 16 : i32
    %675 = vector.broadcast %c16_i32_315 : i32 to vector<1x256xi32>
    %676 = arith.cmpi slt, %674, %675 : vector<1x256xi32>
    %677 = arith.andi %672, %676 : vector<1x256xi1>
    %cst_316 = arith.constant 1.000000e+00 : f32
    %cst_317 = arith.constant 0.000000e+00 : f32
    %678 = vector.broadcast %cst_316 : f32 to vector<1x256xf32>
    %679 = vector.broadcast %cst_317 : f32 to vector<1x256xf32>
    %680 = arith.select %677, %678, %679 : vector<1x256xi1>, vector<1x256xf32>
    %681 = vector.broadcast %680 : vector<1x256xf32> to vector<16x256xf32>
    %682 = arith.mulf %658, %681 : vector<16x256xf32>
    %c32_318 = arith.constant 32 : index
    %c0_319 = arith.constant 0 : index
    %683 = vector.load %arg27[%c32_318, %c0_319] : memref<144x256xf32, #tpu.memory_space<vmem>>, vector<16x256xf32>
    tpu.vector_store %arg27[%c32_318, %c0_319], %682 {strides = array<i32>} : memref<144x256xf32, #tpu.memory_space<vmem>>, vector<16x256xf32>,
    %c2_i32_320 = arith.constant 2 : i32
    %684 = tpu.dynamic_rotate %605 by %c2_i32_320 dim 1 : vector<16x256xf32>, i32 -> vector<16x256xf32>
    %c0_i32_321 = arith.constant 0 : i32
    %685 = vector.broadcast %c0_i32_321 : i32 to vector<1x256xi32>
    %686 = arith.addi %91, %685 : vector<1x256xi32>
    %c0_i32_322 = arith.constant 0 : i32
    %687 = vector.broadcast %c0_i32_322 : i32 to vector<1x256xi32>
    %688 = arith.cmpi sge, %686, %687 : vector<1x256xi32>
    %c0_i32_323 = arith.constant 0 : i32
    %689 = vector.broadcast %c0_i32_323 : i32 to vector<1x256xi32>
    %690 = arith.addi %91, %689 : vector<1x256xi32>
    %c16_i32_324 = arith.constant 16 : i32
    %691 = vector.broadcast %c16_i32_324 : i32 to vector<1x256xi32>
    %692 = arith.cmpi slt, %690, %691 : vector<1x256xi32>
    %693 = arith.andi %688, %692 : vector<1x256xi1>
    %c-2_i32_325 = arith.constant -2 : i32
    %694 = vector.broadcast %c-2_i32_325 : i32 to vector<1x256xi32>
    %695 = arith.addi %94, %694 : vector<1x256xi32>
    %c0_i32_326 = arith.constant 0 : i32
    %696 = vector.broadcast %c0_i32_326 : i32 to vector<1x256xi32>
    %697 = arith.cmpi sge, %695, %696 : vector<1x256xi32>
    %698 = arith.andi %693, %697 : vector<1x256xi1>
    %c-2_i32_327 = arith.constant -2 : i32
    %699 = vector.broadcast %c-2_i32_327 : i32 to vector<1x256xi32>
    %700 = arith.addi %94, %699 : vector<1x256xi32>
    %c16_i32_328 = arith.constant 16 : i32
    %701 = vector.broadcast %c16_i32_328 : i32 to vector<1x256xi32>
    %702 = arith.cmpi slt, %700, %701 : vector<1x256xi32>
    %703 = arith.andi %698, %702 : vector<1x256xi1>
    %cst_329 = arith.constant 1.000000e+00 : f32
    %cst_330 = arith.constant 0.000000e+00 : f32
    %704 = vector.broadcast %cst_329 : f32 to vector<1x256xf32>
    %705 = vector.broadcast %cst_330 : f32 to vector<1x256xf32>
    %706 = arith.select %703, %704, %705 : vector<1x256xi1>, vector<1x256xf32>
    %707 = vector.broadcast %706 : vector<1x256xf32> to vector<16x256xf32>
    %708 = arith.mulf %684, %707 : vector<16x256xf32>
    %c48_331 = arith.constant 48 : index
    %c0_332 = arith.constant 0 : index
    %709 = vector.load %arg27[%c48_331, %c0_332] : memref<144x256xf32, #tpu.memory_space<vmem>>, vector<16x256xf32>
    tpu.vector_store %arg27[%c48_331, %c0_332], %708 {strides = array<i32>} : memref<144x256xf32, #tpu.memory_space<vmem>>, vector<16x256xf32>,
    %c0_i32_333 = arith.constant 0 : i32
    %710 = vector.broadcast %c0_i32_333 : i32 to vector<1x256xi32>
    %711 = arith.addi %91, %710 : vector<1x256xi32>
    %c0_i32_334 = arith.constant 0 : i32
    %712 = vector.broadcast %c0_i32_334 : i32 to vector<1x256xi32>
    %713 = arith.cmpi sge, %711, %712 : vector<1x256xi32>
    %c0_i32_335 = arith.constant 0 : i32
    %714 = vector.broadcast %c0_i32_335 : i32 to vector<1x256xi32>
    %715 = arith.addi %91, %714 : vector<1x256xi32>
    %c16_i32_336 = arith.constant 16 : i32
    %716 = vector.broadcast %c16_i32_336 : i32 to vector<1x256xi32>
    %717 = arith.cmpi slt, %715, %716 : vector<1x256xi32>
    %718 = arith.andi %713, %717 : vector<1x256xi1>
    %c0_i32_337 = arith.constant 0 : i32
    %719 = vector.broadcast %c0_i32_337 : i32 to vector<1x256xi32>
    %720 = arith.addi %94, %719 : vector<1x256xi32>
    %c0_i32_338 = arith.constant 0 : i32
    %721 = vector.broadcast %c0_i32_338 : i32 to vector<1x256xi32>
    %722 = arith.cmpi sge, %720, %721 : vector<1x256xi32>
    %723 = arith.andi %718, %722 : vector<1x256xi1>
    %c0_i32_339 = arith.constant 0 : i32
    %724 = vector.broadcast %c0_i32_339 : i32 to vector<1x256xi32>
    %725 = arith.addi %94, %724 : vector<1x256xi32>
    %c16_i32_340 = arith.constant 16 : i32
    %726 = vector.broadcast %c16_i32_340 : i32 to vector<1x256xi32>
    %727 = arith.cmpi slt, %725, %726 : vector<1x256xi32>
    %728 = arith.andi %723, %727 : vector<1x256xi1>
    %cst_341 = arith.constant 1.000000e+00 : f32
    %cst_342 = arith.constant 0.000000e+00 : f32
    %729 = vector.broadcast %cst_341 : f32 to vector<1x256xf32>
    %730 = vector.broadcast %cst_342 : f32 to vector<1x256xf32>
    %731 = arith.select %728, %729, %730 : vector<1x256xi1>, vector<1x256xf32>
    %732 = vector.broadcast %731 : vector<1x256xf32> to vector<16x256xf32>
    %733 = arith.mulf %605, %732 : vector<16x256xf32>
    %c64_343 = arith.constant 64 : index
    %c0_344 = arith.constant 0 : index
    %734 = vector.load %arg27[%c64_343, %c0_344] : memref<144x256xf32, #tpu.memory_space<vmem>>, vector<16x256xf32>
    tpu.vector_store %arg27[%c64_343, %c0_344], %733 {strides = array<i32>} : memref<144x256xf32, #tpu.memory_space<vmem>>, vector<16x256xf32>,
    %c254_i32_345 = arith.constant 254 : i32
    %735 = tpu.dynamic_rotate %605 by %c254_i32_345 dim 1 : vector<16x256xf32>, i32 -> vector<16x256xf32>
    %c0_i32_346 = arith.constant 0 : i32
    %736 = vector.broadcast %c0_i32_346 : i32 to vector<1x256xi32>
    %737 = arith.addi %91, %736 : vector<1x256xi32>
    %c0_i32_347 = arith.constant 0 : i32
    %738 = vector.broadcast %c0_i32_347 : i32 to vector<1x256xi32>
    %739 = arith.cmpi sge, %737, %738 : vector<1x256xi32>
    %c0_i32_348 = arith.constant 0 : i32
    %740 = vector.broadcast %c0_i32_348 : i32 to vector<1x256xi32>
    %741 = arith.addi %91, %740 : vector<1x256xi32>
    %c16_i32_349 = arith.constant 16 : i32
    %742 = vector.broadcast %c16_i32_349 : i32 to vector<1x256xi32>
    %743 = arith.cmpi slt, %741, %742 : vector<1x256xi32>
    %744 = arith.andi %739, %743 : vector<1x256xi1>
    %c2_i32_350 = arith.constant 2 : i32
    %745 = vector.broadcast %c2_i32_350 : i32 to vector<1x256xi32>
    %746 = arith.addi %94, %745 : vector<1x256xi32>
    %c0_i32_351 = arith.constant 0 : i32
    %747 = vector.broadcast %c0_i32_351 : i32 to vector<1x256xi32>
    %748 = arith.cmpi sge, %746, %747 : vector<1x256xi32>
    %749 = arith.andi %744, %748 : vector<1x256xi1>
    %c2_i32_352 = arith.constant 2 : i32
    %750 = vector.broadcast %c2_i32_352 : i32 to vector<1x256xi32>
    %751 = arith.addi %94, %750 : vector<1x256xi32>
    %c16_i32_353 = arith.constant 16 : i32
    %752 = vector.broadcast %c16_i32_353 : i32 to vector<1x256xi32>
    %753 = arith.cmpi slt, %751, %752 : vector<1x256xi32>
    %754 = arith.andi %749, %753 : vector<1x256xi1>
    %cst_354 = arith.constant 1.000000e+00 : f32
    %cst_355 = arith.constant 0.000000e+00 : f32
    %755 = vector.broadcast %cst_354 : f32 to vector<1x256xf32>
    %756 = vector.broadcast %cst_355 : f32 to vector<1x256xf32>
    %757 = arith.select %754, %755, %756 : vector<1x256xi1>, vector<1x256xf32>
    %758 = vector.broadcast %757 : vector<1x256xf32> to vector<16x256xf32>
    %759 = arith.mulf %735, %758 : vector<16x256xf32>
    %c80_356 = arith.constant 80 : index
    %c0_357 = arith.constant 0 : index
    %760 = vector.load %arg27[%c80_356, %c0_357] : memref<144x256xf32, #tpu.memory_space<vmem>>, vector<16x256xf32>
    tpu.vector_store %arg27[%c80_356, %c0_357], %759 {strides = array<i32>} : memref<144x256xf32, #tpu.memory_space<vmem>>, vector<16x256xf32>,
    %c226_i32_358 = arith.constant 226 : i32
    %761 = tpu.dynamic_rotate %605 by %c226_i32_358 dim 1 : vector<16x256xf32>, i32 -> vector<16x256xf32>
    %c2_i32_359 = arith.constant 2 : i32
    %762 = vector.broadcast %c2_i32_359 : i32 to vector<1x256xi32>
    %763 = arith.addi %91, %762 : vector<1x256xi32>
    %c0_i32_360 = arith.constant 0 : i32
    %764 = vector.broadcast %c0_i32_360 : i32 to vector<1x256xi32>
    %765 = arith.cmpi sge, %763, %764 : vector<1x256xi32>
    %c2_i32_361 = arith.constant 2 : i32
    %766 = vector.broadcast %c2_i32_361 : i32 to vector<1x256xi32>
    %767 = arith.addi %91, %766 : vector<1x256xi32>
    %c16_i32_362 = arith.constant 16 : i32
    %768 = vector.broadcast %c16_i32_362 : i32 to vector<1x256xi32>
    %769 = arith.cmpi slt, %767, %768 : vector<1x256xi32>
    %770 = arith.andi %765, %769 : vector<1x256xi1>
    %c-2_i32_363 = arith.constant -2 : i32
    %771 = vector.broadcast %c-2_i32_363 : i32 to vector<1x256xi32>
    %772 = arith.addi %94, %771 : vector<1x256xi32>
    %c0_i32_364 = arith.constant 0 : i32
    %773 = vector.broadcast %c0_i32_364 : i32 to vector<1x256xi32>
    %774 = arith.cmpi sge, %772, %773 : vector<1x256xi32>
    %775 = arith.andi %770, %774 : vector<1x256xi1>
    %c-2_i32_365 = arith.constant -2 : i32
    %776 = vector.broadcast %c-2_i32_365 : i32 to vector<1x256xi32>
    %777 = arith.addi %94, %776 : vector<1x256xi32>
    %c16_i32_366 = arith.constant 16 : i32
    %778 = vector.broadcast %c16_i32_366 : i32 to vector<1x256xi32>
    %779 = arith.cmpi slt, %777, %778 : vector<1x256xi32>
    %780 = arith.andi %775, %779 : vector<1x256xi1>
    %cst_367 = arith.constant 1.000000e+00 : f32
    %cst_368 = arith.constant 0.000000e+00 : f32
    %781 = vector.broadcast %cst_367 : f32 to vector<1x256xf32>
    %782 = vector.broadcast %cst_368 : f32 to vector<1x256xf32>
    %783 = arith.select %780, %781, %782 : vector<1x256xi1>, vector<1x256xf32>
    %784 = vector.broadcast %783 : vector<1x256xf32> to vector<16x256xf32>
    %785 = arith.mulf %761, %784 : vector<16x256xf32>
    %c96_369 = arith.constant 96 : index
    %c0_370 = arith.constant 0 : index
    %786 = vector.load %arg27[%c96_369, %c0_370] : memref<144x256xf32, #tpu.memory_space<vmem>>, vector<16x256xf32>
    tpu.vector_store %arg27[%c96_369, %c0_370], %785 {strides = array<i32>} : memref<144x256xf32, #tpu.memory_space<vmem>>, vector<16x256xf32>,
    %c224_i32_371 = arith.constant 224 : i32
    %787 = tpu.dynamic_rotate %605 by %c224_i32_371 dim 1 : vector<16x256xf32>, i32 -> vector<16x256xf32>
    %c2_i32_372 = arith.constant 2 : i32
    %788 = vector.broadcast %c2_i32_372 : i32 to vector<1x256xi32>
    %789 = arith.addi %91, %788 : vector<1x256xi32>
    %c0_i32_373 = arith.constant 0 : i32
    %790 = vector.broadcast %c0_i32_373 : i32 to vector<1x256xi32>
    %791 = arith.cmpi sge, %789, %790 : vector<1x256xi32>
    %c2_i32_374 = arith.constant 2 : i32
    %792 = vector.broadcast %c2_i32_374 : i32 to vector<1x256xi32>
    %793 = arith.addi %91, %792 : vector<1x256xi32>
    %c16_i32_375 = arith.constant 16 : i32
    %794 = vector.broadcast %c16_i32_375 : i32 to vector<1x256xi32>
    %795 = arith.cmpi slt, %793, %794 : vector<1x256xi32>
    %796 = arith.andi %791, %795 : vector<1x256xi1>
    %c0_i32_376 = arith.constant 0 : i32
    %797 = vector.broadcast %c0_i32_376 : i32 to vector<1x256xi32>
    %798 = arith.addi %94, %797 : vector<1x256xi32>
    %c0_i32_377 = arith.constant 0 : i32
    %799 = vector.broadcast %c0_i32_377 : i32 to vector<1x256xi32>
    %800 = arith.cmpi sge, %798, %799 : vector<1x256xi32>
    %801 = arith.andi %796, %800 : vector<1x256xi1>
    %c0_i32_378 = arith.constant 0 : i32
    %802 = vector.broadcast %c0_i32_378 : i32 to vector<1x256xi32>
    %803 = arith.addi %94, %802 : vector<1x256xi32>
    %c16_i32_379 = arith.constant 16 : i32
    %804 = vector.broadcast %c16_i32_379 : i32 to vector<1x256xi32>
    %805 = arith.cmpi slt, %803, %804 : vector<1x256xi32>
    %806 = arith.andi %801, %805 : vector<1x256xi1>
    %cst_380 = arith.constant 1.000000e+00 : f32
    %cst_381 = arith.constant 0.000000e+00 : f32
    %807 = vector.broadcast %cst_380 : f32 to vector<1x256xf32>
    %808 = vector.broadcast %cst_381 : f32 to vector<1x256xf32>
    %809 = arith.select %806, %807, %808 : vector<1x256xi1>, vector<1x256xf32>
    %810 = vector.broadcast %809 : vector<1x256xf32> to vector<16x256xf32>
    %811 = arith.mulf %787, %810 : vector<16x256xf32>
    %c112_382 = arith.constant 112 : index
    %c0_383 = arith.constant 0 : index
    %812 = vector.load %arg27[%c112_382, %c0_383] : memref<144x256xf32, #tpu.memory_space<vmem>>, vector<16x256xf32>
    tpu.vector_store %arg27[%c112_382, %c0_383], %811 {strides = array<i32>} : memref<144x256xf32, #tpu.memory_space<vmem>>, vector<16x256xf32>,
    %c222_i32_384 = arith.constant 222 : i32
    %813 = tpu.dynamic_rotate %605 by %c222_i32_384 dim 1 : vector<16x256xf32>, i32 -> vector<16x256xf32>
    %c2_i32_385 = arith.constant 2 : i32
    %814 = vector.broadcast %c2_i32_385 : i32 to vector<1x256xi32>
    %815 = arith.addi %91, %814 : vector<1x256xi32>
    %c0_i32_386 = arith.constant 0 : i32
    %816 = vector.broadcast %c0_i32_386 : i32 to vector<1x256xi32>
    %817 = arith.cmpi sge, %815, %816 : vector<1x256xi32>
    %c2_i32_387 = arith.constant 2 : i32
    %818 = vector.broadcast %c2_i32_387 : i32 to vector<1x256xi32>
    %819 = arith.addi %91, %818 : vector<1x256xi32>
    %c16_i32_388 = arith.constant 16 : i32
    %820 = vector.broadcast %c16_i32_388 : i32 to vector<1x256xi32>
    %821 = arith.cmpi slt, %819, %820 : vector<1x256xi32>
    %822 = arith.andi %817, %821 : vector<1x256xi1>
    %c2_i32_389 = arith.constant 2 : i32
    %823 = vector.broadcast %c2_i32_389 : i32 to vector<1x256xi32>
    %824 = arith.addi %94, %823 : vector<1x256xi32>
    %c0_i32_390 = arith.constant 0 : i32
    %825 = vector.broadcast %c0_i32_390 : i32 to vector<1x256xi32>
    %826 = arith.cmpi sge, %824, %825 : vector<1x256xi32>
    %827 = arith.andi %822, %826 : vector<1x256xi1>
    %c2_i32_391 = arith.constant 2 : i32
    %828 = vector.broadcast %c2_i32_391 : i32 to vector<1x256xi32>
    %829 = arith.addi %94, %828 : vector<1x256xi32>
    %c16_i32_392 = arith.constant 16 : i32
    %830 = vector.broadcast %c16_i32_392 : i32 to vector<1x256xi32>
    %831 = arith.cmpi slt, %829, %830 : vector<1x256xi32>
    %832 = arith.andi %827, %831 : vector<1x256xi1>
    %cst_393 = arith.constant 1.000000e+00 : f32
    %cst_394 = arith.constant 0.000000e+00 : f32
    %833 = vector.broadcast %cst_393 : f32 to vector<1x256xf32>
    %834 = vector.broadcast %cst_394 : f32 to vector<1x256xf32>
    %835 = arith.select %832, %833, %834 : vector<1x256xi1>, vector<1x256xf32>
    %836 = vector.broadcast %835 : vector<1x256xf32> to vector<16x256xf32>
    %837 = arith.mulf %813, %836 : vector<16x256xf32>
    %c128_395 = arith.constant 128 : index
    %c0_396 = arith.constant 0 : index
    %838 = vector.load %arg27[%c128_395, %c0_396] : memref<144x256xf32, #tpu.memory_space<vmem>>, vector<16x256xf32>
    tpu.vector_store %arg27[%c128_395, %c0_396], %837 {strides = array<i32>} : memref<144x256xf32, #tpu.memory_space<vmem>>, vector<16x256xf32>,
    %c0_397 = arith.constant 0 : index
    %c0_398 = arith.constant 0 : index
    %839 = vector.load %arg14[%c0_397, %c0_398] : memref<16x144xf32, #tpu.memory_space<vmem>>, vector<16x144xf32>
    %c0_399 = arith.constant 0 : index
    %c0_400 = arith.constant 0 : index
    %840 = vector.load %arg15[%c0_399, %c0_400] : memref<16x1xf32, #tpu.memory_space<vmem>>, vector<16x1xf32>
    %c0_401 = arith.constant 0 : index
    %c0_402 = arith.constant 0 : index
    %841 = vector.load %arg27[%c0_401, %c0_402] : memref<144x256xf32, #tpu.memory_space<vmem>>, vector<144x256xf32>
    %cst_403 = arith.constant dense<0.000000e+00> : vector<16x256xf32>
    %842 = tpu.matmul %839, %841, %cst_403 {dimension_numbers = #tpu.dot_dimension_numbers<[1], [0], [0], [1], [0, 0, 1, 1], [], []>} : vector<16x144xf32>, vector<144x256xf32>, vector<16x256xf32> -> vector<16x256xf32>
    %843 = vector.broadcast %840 : vector<16x1xf32> to vector<16x256xf32>
    %844 = arith.addf %842, %843 : vector<16x256xf32>
    %cst_404 = arith.constant 0.000000e+00 : f32
    %845 = vector.broadcast %cst_404 : f32 to vector<16x256xf32>
    %846 = arith.maximumf %844, %845 : vector<16x256xf32>
    %c0_405 = arith.constant 0 : index
    %c0_406 = arith.constant 0 : index
    %847 = vector.load %arg16[%c0_405, %c0_406] : memref<16x16xf32, #tpu.memory_space<vmem>>, vector<16x16xf32>
    %c0_407 = arith.constant 0 : index
    %c0_408 = arith.constant 0 : index
    %848 = vector.load %arg17[%c0_407, %c0_408] : memref<16x1xf32, #tpu.memory_space<vmem>>, vector<16x1xf32>
    %cst_409 = arith.constant dense<0.000000e+00> : vector<16x256xf32>
    %849 = tpu.matmul %847, %846, %cst_409 {dimension_numbers = #tpu.dot_dimension_numbers<[1], [0], [0], [1], [0, 0, 1, 1], [], []>} : vector<16x16xf32>, vector<16x256xf32>, vector<16x256xf32> -> vector<16x256xf32>
    %850 = vector.broadcast %848 : vector<16x1xf32> to vector<16x256xf32>
    %851 = arith.addf %849, %850 : vector<16x256xf32>
    %852 = arith.addf %605, %851 : vector<16x256xf32>
    %c0_410 = arith.constant 0 : index
    %c0_411 = arith.constant 0 : index
    %853 = vector.load %arg18[%c0_410, %c0_411] : memref<16x16xf32, #tpu.memory_space<vmem>>, vector<16x16xf32>
    %c0_412 = arith.constant 0 : index
    %c0_413 = arith.constant 0 : index
    %854 = vector.load %arg19[%c0_412, %c0_413] : memref<16x1xf32, #tpu.memory_space<vmem>>, vector<16x1xf32>
    %cst_414 = arith.constant dense<0.000000e+00> : vector<16x256xf32>
    %855 = tpu.matmul %853, %852, %cst_414 {dimension_numbers = #tpu.dot_dimension_numbers<[1], [0], [0], [1], [0, 0, 1, 1], [], []>} : vector<16x16xf32>, vector<16x256xf32>, vector<16x256xf32> -> vector<16x256xf32>
    %856 = vector.broadcast %854 : vector<16x1xf32> to vector<16x256xf32>
    %857 = arith.addf %855, %856 : vector<16x256xf32>
    %cst_415 = arith.constant 0.000000e+00 : f32
    %858 = vector.broadcast %cst_415 : f32 to vector<16x256xf32>
    %859 = arith.maximumf %857, %858 : vector<16x256xf32>
    %c0_416 = arith.constant 0 : index
    %c0_417 = arith.constant 0 : index
    %860 = vector.load %arg20[%c0_416, %c0_417] : memref<8x16xf32, #tpu.memory_space<vmem>>, vector<8x16xf32>
    %c0_418 = arith.constant 0 : index
    %c0_419 = arith.constant 0 : index
    %861 = vector.load %arg21[%c0_418, %c0_419] : memref<8x1xf32, #tpu.memory_space<vmem>>, vector<8x1xf32>
    %cst_420 = arith.constant dense<0.000000e+00> : vector<8x256xf32>
    %862 = tpu.matmul %860, %859, %cst_420 {dimension_numbers = #tpu.dot_dimension_numbers<[1], [0], [0], [1], [0, 0, 1, 1], [], []>} : vector<8x16xf32>, vector<16x256xf32>, vector<8x256xf32> -> vector<8x256xf32>
    %863 = vector.broadcast %861 : vector<8x1xf32> to vector<8x256xf32>
    %864 = arith.addf %862, %863 : vector<8x256xf32>
    %cst_421 = arith.constant 0.000000e+00 : f32
    %865 = vector.broadcast %cst_421 : f32 to vector<8x256xf32>
    %866 = arith.maximumf %864, %865 : vector<8x256xf32>
    %c0_422 = arith.constant 0 : index
    %c0_423 = arith.constant 0 : index
    %867 = vector.load %arg22[%c0_422, %c0_423] : memref<8x8xf32, #tpu.memory_space<vmem>>, vector<8x8xf32>
    %c0_424 = arith.constant 0 : index
    %c0_425 = arith.constant 0 : index
    %868 = vector.load %arg23[%c0_424, %c0_425] : memref<8x1xf32, #tpu.memory_space<vmem>>, vector<8x1xf32>
    %cst_426 = arith.constant dense<0.000000e+00> : vector<8x256xf32>
    %869 = tpu.matmul %867, %866, %cst_426 {dimension_numbers = #tpu.dot_dimension_numbers<[1], [0], [0], [1], [0, 0, 1, 1], [], []>} : vector<8x8xf32>, vector<8x256xf32>, vector<8x256xf32> -> vector<8x256xf32>
    %870 = vector.broadcast %868 : vector<8x1xf32> to vector<8x256xf32>
    %871 = arith.addf %869, %870 : vector<8x256xf32>
    %cst_427 = arith.constant 0.000000e+00 : f32
    %872 = vector.broadcast %cst_427 : f32 to vector<8x256xf32>
    %873 = arith.maximumf %871, %872 : vector<8x256xf32>
    %c0_428 = arith.constant 0 : index
    %c0_429 = arith.constant 0 : index
    %874 = vector.load %arg24[%c0_428, %c0_429] : memref<3x8xf32, #tpu.memory_space<vmem>>, vector<3x8xf32>
    %c0_430 = arith.constant 0 : index
    %c0_431 = arith.constant 0 : index
    %875 = vector.load %arg25[%c0_430, %c0_431] : memref<3x1xf32, #tpu.memory_space<vmem>>, vector<3x1xf32>
    %cst_432 = arith.constant dense<0.000000e+00> : vector<3x256xf32>
    %876 = tpu.matmul %874, %873, %cst_432 {dimension_numbers = #tpu.dot_dimension_numbers<[1], [0], [0], [1], [0, 0, 1, 1], [], []>} : vector<3x8xf32>, vector<8x256xf32>, vector<3x256xf32> -> vector<3x256xf32>
    %877 = vector.broadcast %875 : vector<3x1xf32> to vector<3x256xf32>
    %878 = arith.addf %876, %877 : vector<3x256xf32>
    %c0_433 = arith.constant 0 : index
    %c0_434 = arith.constant 0 : index
    %c0_435 = arith.constant 0 : index
    %879 = vector.load %arg26[%c0_433, %c0_434, %c0_435] : memref<1x3x256xf32, #tpu.memory_space<vmem>>, vector<1x3x256xf32>
    %880 = vector.shape_cast %879 : vector<1x3x256xf32> to vector<3x256xf32>
    %881 = vector.shape_cast %878 : vector<3x256xf32> to vector<1x3x256xf32>
    tpu.vector_store %arg26[%c0_433, %c0_434, %c0_435], %881 {strides = array<i32>} : memref<1x3x256xf32, #tpu.memory_space<vmem>>, vector<1x3x256xf32>,
    return
  }
  func.func @transform_0(%arg0: i32) -> (i32, i32, i32) {
    %c0_i32 = arith.constant 0 : i32
    %c0_i32_0 = arith.constant 0 : i32
    %c0_i32_1 = arith.constant 0 : i32
    return %arg0, %c0_i32, %c0_i32_0 : i32, i32, i32
  }
  func.func @transform_1(%arg0: i32) -> (i32, i32) {
    %c0_i32 = arith.constant 0 : i32
    %c0_i32_0 = arith.constant 0 : i32
    %c0_i32_1 = arith.constant 0 : i32
    return %c0_i32, %c0_i32_0 : i32, i32
  }
  func.func @transform_2(%arg0: i32) -> (i32, i32) {
    %c0_i32 = arith.constant 0 : i32
    %c0_i32_0 = arith.constant 0 : i32
    %c0_i32_1 = arith.constant 0 : i32
    return %c0_i32, %c0_i32_0 : i32, i32
  }
  func.func @transform_3(%arg0: i32) -> (i32, i32) {
    %c0_i32 = arith.constant 0 : i32
    %c0_i32_0 = arith.constant 0 : i32
    %c0_i32_1 = arith.constant 0 : i32
    return %c0_i32, %c0_i32_0 : i32, i32
  }
  func.func @transform_4(%arg0: i32) -> (i32, i32) {
    %c0_i32 = arith.constant 0 : i32
    %c0_i32_0 = arith.constant 0 : i32
    %c0_i32_1 = arith.constant 0 : i32
    return %c0_i32, %c0_i32_0 : i32, i32
  }
  func.func @transform_5(%arg0: i32) -> (i32, i32) {
    %c0_i32 = arith.constant 0 : i32
    %c0_i32_0 = arith.constant 0 : i32
    %c0_i32_1 = arith.constant 0 : i32
    return %c0_i32, %c0_i32_0 : i32, i32
  }
  func.func @transform_6(%arg0: i32) -> (i32, i32) {
    %c0_i32 = arith.constant 0 : i32
    %c0_i32_0 = arith.constant 0 : i32
    %c0_i32_1 = arith.constant 0 : i32
    return %c0_i32, %c0_i32_0 : i32, i32
  }
  func.func @transform_7(%arg0: i32) -> (i32, i32) {
    %c0_i32 = arith.constant 0 : i32
    %c0_i32_0 = arith.constant 0 : i32
    %c0_i32_1 = arith.constant 0 : i32
    return %c0_i32, %c0_i32_0 : i32, i32
  }
  func.func @transform_8(%arg0: i32) -> (i32, i32) {
    %c0_i32 = arith.constant 0 : i32
    %c0_i32_0 = arith.constant 0 : i32
    %c0_i32_1 = arith.constant 0 : i32
    return %c0_i32, %c0_i32_0 : i32, i32
  }
  func.func @transform_9(%arg0: i32) -> (i32, i32) {
    %c0_i32 = arith.constant 0 : i32
    %c0_i32_0 = arith.constant 0 : i32
    %c0_i32_1 = arith.constant 0 : i32
    return %c0_i32, %c0_i32_0 : i32, i32
  }
  func.func @transform_10(%arg0: i32) -> (i32, i32) {
    %c0_i32 = arith.constant 0 : i32
    %c0_i32_0 = arith.constant 0 : i32
    %c0_i32_1 = arith.constant 0 : i32
    return %c0_i32, %c0_i32_0 : i32, i32
  }
  func.func @transform_11(%arg0: i32) -> (i32, i32) {
    %c0_i32 = arith.constant 0 : i32
    %c0_i32_0 = arith.constant 0 : i32
    %c0_i32_1 = arith.constant 0 : i32
    return %c0_i32, %c0_i32_0 : i32, i32
  }
  func.func @transform_12(%arg0: i32) -> (i32, i32) {
    %c0_i32 = arith.constant 0 : i32
    %c0_i32_0 = arith.constant 0 : i32
    %c0_i32_1 = arith.constant 0 : i32
    return %c0_i32, %c0_i32_0 : i32, i32
  }
  func.func @transform_13(%arg0: i32) -> (i32, i32) {
    %c0_i32 = arith.constant 0 : i32
    %c0_i32_0 = arith.constant 0 : i32
    %c0_i32_1 = arith.constant 0 : i32
    return %c0_i32, %c0_i32_0 : i32, i32
  }
  func.func @transform_14(%arg0: i32) -> (i32, i32) {
    %c0_i32 = arith.constant 0 : i32
    %c0_i32_0 = arith.constant 0 : i32
    %c0_i32_1 = arith.constant 0 : i32
    return %c0_i32, %c0_i32_0 : i32, i32
  }
  func.func @transform_15(%arg0: i32) -> (i32, i32) {
    %c0_i32 = arith.constant 0 : i32
    %c0_i32_0 = arith.constant 0 : i32
    %c0_i32_1 = arith.constant 0 : i32
    return %c0_i32, %c0_i32_0 : i32, i32
  }
  func.func @transform_16(%arg0: i32) -> (i32, i32) {
    %c0_i32 = arith.constant 0 : i32
    %c0_i32_0 = arith.constant 0 : i32
    %c0_i32_1 = arith.constant 0 : i32
    return %c0_i32, %c0_i32_0 : i32, i32
  }
  func.func @transform_17(%arg0: i32) -> (i32, i32) {
    %c0_i32 = arith.constant 0 : i32
    %c0_i32_0 = arith.constant 0 : i32
    %c0_i32_1 = arith.constant 0 : i32
    return %c0_i32, %c0_i32_0 : i32, i32
  }
  func.func @transform_18(%arg0: i32) -> (i32, i32) {
    %c0_i32 = arith.constant 0 : i32
    %c0_i32_0 = arith.constant 0 : i32
    %c0_i32_1 = arith.constant 0 : i32
    return %c0_i32, %c0_i32_0 : i32, i32
  }
  func.func @transform_19(%arg0: i32) -> (i32, i32) {
    %c0_i32 = arith.constant 0 : i32
    %c0_i32_0 = arith.constant 0 : i32
    %c0_i32_1 = arith.constant 0 : i32
    return %c0_i32, %c0_i32_0 : i32, i32
  }
  func.func @transform_20(%arg0: i32) -> (i32, i32) {
    %c0_i32 = arith.constant 0 : i32
    %c0_i32_0 = arith.constant 0 : i32
    %c0_i32_1 = arith.constant 0 : i32
    return %c0_i32, %c0_i32_0 : i32, i32
  }
  func.func @transform_21(%arg0: i32) -> (i32, i32) {
    %c0_i32 = arith.constant 0 : i32
    %c0_i32_0 = arith.constant 0 : i32
    %c0_i32_1 = arith.constant 0 : i32
    return %c0_i32, %c0_i32_0 : i32, i32
  }
  func.func @transform_22(%arg0: i32) -> (i32, i32) {
    %c0_i32 = arith.constant 0 : i32
    %c0_i32_0 = arith.constant 0 : i32
    %c0_i32_1 = arith.constant 0 : i32
    return %c0_i32, %c0_i32_0 : i32, i32
  }
  func.func @transform_23(%arg0: i32) -> (i32, i32) {
    %c0_i32 = arith.constant 0 : i32
    %c0_i32_0 = arith.constant 0 : i32
    %c0_i32_1 = arith.constant 0 : i32
    return %c0_i32, %c0_i32_0 : i32, i32
  }
  func.func @transform_24(%arg0: i32) -> (i32, i32) {
    %c0_i32 = arith.constant 0 : i32
    %c0_i32_0 = arith.constant 0 : i32
    %c0_i32_1 = arith.constant 0 : i32
    return %c0_i32, %c0_i32_0 : i32, i32
  }
  func.func @transform_25(%arg0: i32) -> (i32, i32, i32) {
    %c0_i32 = arith.constant 0 : i32
    %c0_i32_0 = arith.constant 0 : i32
    %c0_i32_1 = arith.constant 0 : i32
    return %arg0, %c0_i32, %c0_i32_0 : i32, i32, i32
  }
}

</mosaic_0001>

<llo_original>
// kernel: dbsnl_forward.1
$region0: #{dbsnl_forward.1}
  #allocation0 [shape = 'u32[]', space=smem, size = 0x4, offset = 0x4, fixed_abs, tag = 'smem constant byte address 0x4 - core index']
  #allocation1 [shape = 'u32[144,128]{1,0:T(1,128)}', space=vmem, size = 0x12000, scoped, tag = 'internal scratch']
  #allocation2 [shape = 'f32[144,256]{1,0:T(8,128)}', space=vmem, size = 0x24000, scoped, tag = 'scratch operand']
  %s0 = inlined_call_operand.vmem [shape: f32[2,3,256], index: 0, kind: input, shape index: {}]
  %s1 = inlined_call_operand.vmem [shape: f32[16,3], index: 1, kind: input, shape index: {}]
  %s2 = inlined_call_operand.vmem [shape: f32[16,1], index: 2, kind: input, shape index: {}]
  %s3 = inlined_call_operand.vmem [shape: f32[16,144], index: 3, kind: input, shape index: {}]
  %s4 = inlined_call_operand.vmem [shape: f32[16,1], index: 4, kind: input, shape index: {}]
  %s5 = inlined_call_operand.vmem [shape: f32[16,16], index: 5, kind: input, shape index: {}]
  %s6 = inlined_call_operand.vmem [shape: f32[16,1], index: 6, kind: input, shape index: {}]
  %s7 = inlined_call_operand.vmem [shape: f32[16,16], index: 7, kind: input, shape index: {}]
  %s8 = inlined_call_operand.vmem [shape: f32[16,1], index: 8, kind: input, shape index: {}]
  %s9 = inlined_call_operand.vmem [shape: f32[16,144], index: 9, kind: input, shape index: {}]
  %s10 = inlined_call_operand.vmem [shape: f32[16,1], index: 10, kind: input, shape index: {}]
  %s11 = inlined_call_operand.vmem [shape: f32[16,16], index: 11, kind: input, shape index: {}]
  %s12 = inlined_call_operand.vmem [shape: f32[16,1], index: 12, kind: input, shape index: {}]
  %s13 = inlined_call_operand.vmem [shape: f32[16,144], index: 13, kind: input, shape index: {}]
  %s14 = inlined_call_operand.vmem [shape: f32[16,1], index: 14, kind: input, shape index: {}]
  %s15 = inlined_call_operand.vmem [shape: f32[16,16], index: 15, kind: input, shape index: {}]
  %s16 = inlined_call_operand.vmem [shape: f32[16,1], index: 16, kind: input, shape index: {}]
  %s17 = inlined_call_operand.vmem [shape: f32[16,16], index: 17, kind: input, shape index: {}]
  %s18 = inlined_call_operand.vmem [shape: f32[16,1], index: 18, kind: input, shape index: {}]
  %s19 = inlined_call_operand.vmem [shape: f32[8,16], index: 19, kind: input, shape index: {}]
  %s20 = inlined_call_operand.vmem [shape: f32[8,1], index: 20, kind: input, shape index: {}]
  %s21 = inlined_call_operand.vmem [shape: f32[8,8], index: 21, kind: input, shape index: {}]
  %s22 = inlined_call_operand.vmem [shape: f32[8,1], index: 22, kind: input, shape index: {}]
  %s23 = inlined_call_operand.vmem [shape: f32[3,8], index: 23, kind: input, shape index: {}]
  %s24 = inlined_call_operand.vmem [shape: f32[3,1], index: 24, kind: input, shape index: {}]
  %s25 = inlined_call_operand.vmem [shape: f32[2,3,256], index: 25, kind: output, shape index: {}]
  %s26 = sld [smem:[#allocation0]]
  $region133: #{dbsnl_forward.1} parent=0
    _
  %s28 = ssub.s32 1, %s26
  %s29 = scalar_select 0, %s28, %s26
  loop: start=0, step=1, limit=4
  $region2: #{dbsnl_forward.1} parent=0 // loop_pre_header
    _
  $region3: #{dbsnl_forward.1} parent=0 // loop_header
    %s31 = sphi 0, %s35
    %p32 = scmp.ge.s32.totalorder %s31, 4
    %s41 = sphi 0, %s43
    %s44 = sphi 0, %s41
    %s45 = sphi 0, %s44
    %s61 = sphi 0, %s45
    %s65 = sphi 0, %s65
    %s67 = sphi 0, %s65
    %s68 = sphi 0, %s67
    %s82 = sphi 0, %s68
    %s86 = sphi 0, %s86
    %s88 = sphi 0, %s86
    %s89 = sphi 0, %s88
    %s103 = sphi 0, %s89
    %s107 = sphi 0, %s107
    %s109 = sphi 0, %s107
    %s110 = sphi 0, %s109
    %s124 = sphi 0, %s110
    %s128 = sphi 0, %s128
    %s130 = sphi 0, %s128
    %s131 = sphi 0, %s130
    %s145 = sphi 0, %s131
    %s149 = sphi 0, %s149
    %s151 = sphi 0, %s149
    %s152 = sphi 0, %s151
    %s166 = sphi 0, %s152
    %s170 = sphi 0, %s170
    %s172 = sphi 0, %s170
    %s173 = sphi 0, %s172
    %s187 = sphi 0, %s173
    %s191 = sphi 0, %s191
    %s193 = sphi 0, %s191
    %s194 = sphi 0, %s193
    %s208 = sphi 0, %s194
    %s212 = sphi 0, %s212
    %s214 = sphi 0, %s212
    %s215 = sphi 0, %s214
    %s229 = sphi 0, %s215
    %s233 = sphi 0, %s233
    %s235 = sphi 0, %s233
    %s236 = sphi 0, %s235
    %s250 = sphi 0, %s236
    %s254 = sphi 0, %s254
    %s256 = sphi 0, %s254
    %s257 = sphi 0, %s256
    %s271 = sphi 0, %s257
    %s275 = sphi 0, %s275
    %s277 = sphi 0, %s275
    %s278 = sphi 0, %s277
    %s292 = sphi 0, %s278
    %s296 = sphi 0, %s296
    %s298 = sphi 0, %s296
    %s299 = sphi 0, %s298
    %s313 = sphi 0, %s299
    %s317 = sphi 0, %s317
    %s319 = sphi 0, %s317
    %s320 = sphi 0, %s319
    %s334 = sphi 0, %s320
    %s338 = sphi 0, %s338
    %s340 = sphi 0, %s338
    %s341 = sphi 0, %s340
    %s355 = sphi 0, %s341
    %s359 = sphi 0, %s359
    %s361 = sphi 0, %s359
    %s362 = sphi 0, %s361
    %s376 = sphi 0, %s362
    %s380 = sphi 0, %s380
    %s382 = sphi 0, %s380
    %s383 = sphi 0, %s382
    %s397 = sphi 0, %s383
    %s401 = sphi 0, %s401
    %s403 = sphi 0, %s401
    %s404 = sphi 0, %s403
    %s418 = sphi 0, %s404
    %s422 = sphi 0, %s422
    %s424 = sphi 0, %s422
    %s425 = sphi 0, %s424
    %s439 = sphi 0, %s425
    %s443 = sphi 0, %s443
    %s445 = sphi 0, %s443
    %s446 = sphi 0, %s445
    %s460 = sphi 0, %s446
    %s464 = sphi 0, %s464
    %s466 = sphi 0, %s464
    %s467 = sphi 0, %s466
    %s481 = sphi 0, %s467
    %s485 = sphi 0, %s485
    %s487 = sphi 0, %s485
    %s488 = sphi 0, %s487
    %s502 = sphi 0, %s488
    %s506 = sphi 0, %s506
    %s508 = sphi 0, %s506
    %s509 = sphi 0, %s508
    %s523 = sphi 0, %s509
    %s527 = sphi 0, %s527
    %s529 = sphi 0, %s527
    %s530 = sphi 0, %s529
    %s544 = sphi 0, %s530
    %s548 = sphi 0, %s548
    %s550 = sphi 0, %s548
    %s551 = sphi 0, %s550
    %s565 = sphi 0, %s551
    %s571 = sphi 0, %s573
    %s574 = sphi 0, %s571
    %s575 = sphi 0, %s574
    %s591 = sphi 0, %s575
  $region4: #{dbsnl_forward.1} parent=0 // loop_header_branch
    %34 = sbr.rel (%p32) target = $region8
  $region5: #{dbsnl_forward.1} parent=0 // loop_body
    %s36 = ssub.s32 %s31, 1
    %s37 = ssub.s32 %s31, 2
    %s38 = sadd.s32 %s31, 1
    %s39 = ssub.s32 %s31, %s38
    %p40 = scmp.eq.s32.totalorder %s39, 0
    %s42 = sadd.s32 %s41, 1
    %s43 = scalar_select %p40, %s41, %s42
    %p46 = pneg %p40
    %p47 = scmp.eq.s32.totalorder %s31, 1
    %p48 = por %p46, %p47
    %p49 = scmp.ne.s32.totalorder %s41, %s44
    %p50 = scmp.eq.s32.totalorder %s31, 0
    %p51 = por %p49, %p50
    %p52 = scmp.ne.s32.totalorder %s41, %s44
    %p53 = scmp.eq.s32.totalorder %s36, 1
    %p54 = por %p52, %p53
    %p55 = scmp.ne.s32.totalorder %s44, %s45
    %p56 = scmp.eq.s32.totalorder %s36, 0
    %p57 = por %p55, %p56
    %p58 = scmp.ne.s32.totalorder %s44, %s45
    %p59 = scmp.eq.s32.totalorder %s37, 1
    %p60 = por %p58, %p59
    %p62 = scmp.ne.s32.totalorder %s45, %s61
    %p63 = scmp.eq.s32.totalorder %s37, 0
    %p64 = por %p62, %p63
    %s66 = sadd.s32 %s65, 1
    %p69 = scmp.eq.s32.totalorder %s31, 1
    %p70 = scmp.ne.s32.totalorder %s65, %s67
    %p71 = scmp.eq.s32.totalorder %s31, 0
    %p72 = por %p70, %p71
    %p73 = scmp.ne.s32.totalorder %s65, %s67
    %p74 = scmp.eq.s32.totalorder %s36, 1
    %p75 = por %p73, %p74
    %p76 = scmp.ne.s32.totalorder %s67, %s68
    %p77 = scmp.eq.s32.totalorder %s36, 0
    %p78 = por %p76, %p77
    %p79 = scmp.ne.s32.totalorder %s67, %s68
    %p80 = scmp.eq.s32.totalorder %s37, 1
    %p81 = por %p79, %p80
    %p83 = scmp.ne.s32.totalorder %s68, %s82
    %p84 = scmp.eq.s32.totalorder %s37, 0
    %p85 = por %p83, %p84
    %s87 = sadd.s32 %s86, 1
    %p90 = scmp.eq.s32.totalorder %s31, 1
    %p91 = scmp.ne.s32.totalorder %s86, %s88
    %p92 = scmp.eq.s32.totalorder %s31, 0
    %p93 = por %p91, %p92
    %p94 = scmp.ne.s32.totalorder %s86, %s88
    %p95 = scmp.eq.s32.totalorder %s36, 1
    %p96 = por %p94, %p95
    %p97 = scmp.ne.s32.totalorder %s88, %s89
    %p98 = scmp.eq.s32.totalorder %s36, 0
    %p99 = por %p97, %p98
    %p100 = scmp.ne.s32.totalorder %s88, %s89
    %p101 = scmp.eq.s32.totalorder %s37, 1
    %p102 = por %p100, %p101
    %p104 = scmp.ne.s32.totalorder %s89, %s103
    %p105 = scmp.eq.s32.totalorder %s37, 0
    %p106 = por %p104, %p105
    %s108 = sadd.s32 %s107, 1
    %p111 = scmp.eq.s32.totalorder %s31, 1
    %p112 = scmp.ne.s32.totalorder %s107, %s109
    %p113 = scmp.eq.s32.totalorder %s31, 0
    %p114 = por %p112, %p113
    %p115 = scmp.ne.s32.totalorder %s107, %s109
    %p116 = scmp.eq.s32.totalorder %s36, 1
    %p117 = por %p115, %p116
    %p118 = scmp.ne.s32.totalorder %s109, %s110
    %p119 = scmp.eq.s32.totalorder %s36, 0
    %p120 = por %p118, %p119
    %p121 = scmp.ne.s32.totalorder %s109, %s110
    %p122 = scmp.eq.s32.totalorder %s37, 1
    %p123 = por %p121, %p122
    %p125 = scmp.ne.s32.totalorder %s110, %s124
    %p126 = scmp.eq.s32.totalorder %s37, 0
    %p127 = por %p125, %p126
    %s129 = sadd.s32 %s128, 1
    %p132 = scmp.eq.s32.totalorder %s31, 1
    %p133 = scmp.ne.s32.totalorder %s128, %s130
    %p134 = scmp.eq.s32.totalorder %s31, 0
    %p135 = por %p133, %p134
    %p136 = scmp.ne.s32.totalorder %s128, %s130
    %p137 = scmp.eq.s32.totalorder %s36, 1
    %p138 = por %p136, %p137
    %p139 = scmp.ne.s32.totalorder %s130, %s131
    %p140 = scmp.eq.s32.totalorder %s36, 0
    %p141 = por %p139, %p140
    %p142 = scmp.ne.s32.totalorder %s130, %s131
    %p143 = scmp.eq.s32.totalorder %s37, 1
    %p144 = por %p142, %p143
    %p146 = scmp.ne.s32.totalorder %s131, %s145
    %p147 = scmp.eq.s32.totalorder %s37, 0
    %p148 = por %p146, %p147
    %s150 = sadd.s32 %s149, 1
    %p153 = scmp.eq.s32.totalorder %s31, 1
    %p154 = scmp.ne.s32.totalorder %s149, %s151
    %p155 = scmp.eq.s32.totalorder %s31, 0
    %p156 = por %p154, %p155
    %p157 = scmp.ne.s32.totalorder %s149, %s151
    %p158 = scmp.eq.s32.totalorder %s36, 1
    %p159 = por %p157, %p158
    %p160 = scmp.ne.s32.totalorder %s151, %s152
    %p161 = scmp.eq.s32.totalorder %s36, 0
    %p162 = por %p160, %p161
    %p163 = scmp.ne.s32.totalorder %s151, %s152
    %p164 = scmp.eq.s32.totalorder %s37, 1
    %p165 = por %p163, %p164
    %p167 = scmp.ne.s32.totalorder %s152, %s166
    %p168 = scmp.eq.s32.totalorder %s37, 0
    %p169 = por %p167, %p168
    %s171 = sadd.s32 %s170, 1
    %p174 = scmp.eq.s32.totalorder %s31, 1
    %p175 = scmp.ne.s32.totalorder %s170, %s172
    %p176 = scmp.eq.s32.totalorder %s31, 0
    %p177 = por %p175, %p176
    %p178 = scmp.ne.s32.totalorder %s170, %s172
    %p179 = scmp.eq.s32.totalorder %s36, 1
    %p180 = por %p178, %p179
    %p181 = scmp.ne.s32.totalorder %s172, %s173
    %p182 = scmp.eq.s32.totalorder %s36, 0
    %p183 = por %p181, %p182
    %p184 = scmp.ne.s32.totalorder %s172, %s173
    %p185 = scmp.eq.s32.totalorder %s37, 1
    %p186 = por %p184, %p185
    %p188 = scmp.ne.s32.totalorder %s173, %s187
    %p189 = scmp.eq.s32.totalorder %s37, 0
    %p190 = por %p188, %p189
    %s192 = sadd.s32 %s191, 1
    %p195 = scmp.eq.s32.totalorder %s31, 1
    %p196 = scmp.ne.s32.totalorder %s191, %s193
    %p197 = scmp.eq.s32.totalorder %s31, 0
    %p198 = por %p196, %p197
    %p199 = scmp.ne.s32.totalorder %s191, %s193
    %p200 = scmp.eq.s32.totalorder %s36, 1
    %p201 = por %p199, %p200
    %p202 = scmp.ne.s32.totalorder %s193, %s194
    %p203 = scmp.eq.s32.totalorder %s36, 0
    %p204 = por %p202, %p203
    %p205 = scmp.ne.s32.totalorder %s193, %s194
    %p206 = scmp.eq.s32.totalorder %s37, 1
    %p207 = por %p205, %p206
    %p209 = scmp.ne.s32.totalorder %s194, %s208
    %p210 = scmp.eq.s32.totalorder %s37, 0
    %p211 = por %p209, %p210
    %s213 = sadd.s32 %s212, 1
    %p216 = scmp.eq.s32.totalorder %s31, 1
    %p217 = scmp.ne.s32.totalorder %s212, %s214
    %p218 = scmp.eq.s32.totalorder %s31, 0
    %p219 = por %p217, %p218
    %p220 = scmp.ne.s32.totalorder %s212, %s214
    %p221 = scmp.eq.s32.totalorder %s36, 1
    %p222 = por %p220, %p221
    %p223 = scmp.ne.s32.totalorder %s214, %s215
    %p224 = scmp.eq.s32.totalorder %s36, 0
    %p225 = por %p223, %p224
    %p226 = scmp.ne.s32.totalorder %s214, %s215
    %p227 = scmp.eq.s32.totalorder %s37, 1
    %p228 = por %p226, %p227
    %p230 = scmp.ne.s32.totalorder %s215, %s229
    %p231 = scmp.eq.s32.totalorder %s37, 0
    %p232 = por %p230, %p231
    %s234 = sadd.s32 %s233, 1
    %p237 = scmp.eq.s32.totalorder %s31, 1
    %p238 = scmp.ne.s32.totalorder %s233, %s235
    %p239 = scmp.eq.s32.totalorder %s31, 0
    %p240 = por %p238, %p239
    %p241 = scmp.ne.s32.totalorder %s233, %s235
    %p242 = scmp.eq.s32.totalorder %s36, 1
    %p243 = por %p241, %p242
    %p244 = scmp.ne.s32.totalorder %s235, %s236
    %p245 = scmp.eq.s32.totalorder %s36, 0
    %p246 = por %p244, %p245
    %p247 = scmp.ne.s32.totalorder %s235, %s236
    %p248 = scmp.eq.s32.totalorder %s37, 1
    %p249 = por %p247, %p248
    %p251 = scmp.ne.s32.totalorder %s236, %s250
    %p252 = scmp.eq.s32.totalorder %s37, 0
    %p253 = por %p251, %p252
    %s255 = sadd.s32 %s254, 1
    %p258 = scmp.eq.s32.totalorder %s31, 1
    %p259 = scmp.ne.s32.totalorder %s254, %s256
    %p260 = scmp.eq.s32.totalorder %s31, 0
    %p261 = por %p259, %p260
    %p262 = scmp.ne.s32.totalorder %s254, %s256
    %p263 = scmp.eq.s32.totalorder %s36, 1
    %p264 = por %p262, %p263
    %p265 = scmp.ne.s32.totalorder %s256, %s257
    %p266 = scmp.eq.s32.totalorder %s36, 0
    %p267 = por %p265, %p266
    %p268 = scmp.ne.s32.totalorder %s256, %s257
    %p269 = scmp.eq.s32.totalorder %s37, 1
    %p270 = por %p268, %p269
    %p272 = scmp.ne.s32.totalorder %s257, %s271
    %p273 = scmp.eq.s32.totalorder %s37, 0
    %p274 = por %p272, %p273
    %s276 = sadd.s32 %s275, 1
    %p279 = scmp.eq.s32.totalorder %s31, 1
    %p280 = scmp.ne.s32.totalorder %s275, %s277
    %p281 = scmp.eq.s32.totalorder %s31, 0
    %p282 = por %p280, %p281
    %p283 = scmp.ne.s32.totalorder %s275, %s277
    %p284 = scmp.eq.s32.totalorder %s36, 1
    %p285 = por %p283, %p284
    %p286 = scmp.ne.s32.totalorder %s277, %s278
    %p287 = scmp.eq.s32.totalorder %s36, 0
    %p288 = por %p286, %p287
    %p289 = scmp.ne.s32.totalorder %s277, %s278
    %p290 = scmp.eq.s32.totalorder %s37, 1
    %p291 = por %p289, %p290
    %p293 = scmp.ne.s32.totalorder %s278, %s292
    %p294 = scmp.eq.s32.totalorder %s37, 0
    %p295 = por %p293, %p294
    %s297 = sadd.s32 %s296, 1
    %p300 = scmp.eq.s32.totalorder %s31, 1
    %p301 = scmp.ne.s32.totalorder %s296, %s298
    %p302 = scmp.eq.s32.totalorder %s31, 0
    %p303 = por %p301, %p302
    %p304 = scmp.ne.s32.totalorder %s296, %s298
    %p305 = scmp.eq.s32.totalorder %s36, 1
    %p306 = por %p304, %p305
    %p307 = scmp.ne.s32.totalorder %s298, %s299
    %p308 = scmp.eq.s32.totalorder %s36, 0
    %p309 = por %p307, %p308
    %p310 = scmp.ne.s32.totalorder %s298, %s299
    %p311 = scmp.eq.s32.totalorder %s37, 1
    %p312 = por %p310, %p311
    %p314 = scmp.ne.s32.totalorder %s299, %s313
    %p315 = scmp.eq.s32.totalorder %s37, 0
    %p316 = por %p314, %p315
    %s318 = sadd.s32 %s317, 1
    %p321 = scmp.eq.s32.totalorder %s31, 1
    %p322 = scmp.ne.s32.totalorder %s317, %s319
    %p323 = scmp.eq.s32.totalorder %s31, 0
    %p324 = por %p322, %p323
    %p325 = scmp.ne.s32.totalorder %s317, %s319
    %p326 = scmp.eq.s32.totalorder %s36, 1
    %p327 = por %p325, %p326
    %p328 = scmp.ne.s32.totalorder %s319, %s320
    %p329 = scmp.eq.s32.totalorder %s36, 0
    %p330 = por %p328, %p329
    %p331 = scmp.ne.s32.totalorder %s319, %s320
    %p332 = scmp.eq.s32.totalorder %s37, 1
    %p333 = por %p331, %p332
    %p335 = scmp.ne.s32.totalorder %s320, %s334
    %p336 = scmp.eq.s32.totalorder %s37, 0
    %p337 = por %p335, %p336
    %s339 = sadd.s32 %s338, 1
    %p342 = scmp.eq.s32.totalorder %s31, 1
    %p343 = scmp.ne.s32.totalorder %s338, %s340
    %p344 = scmp.eq.s32.totalorder %s31, 0
    %p345 = por %p343, %p344
    %p346 = scmp.ne.s32.totalorder %s338, %s340
    %p347 = scmp.eq.s32.totalorder %s36, 1
    %p348 = por %p346, %p347
    %p349 = scmp.ne.s32.totalorder %s340, %s341
    %p350 = scmp.eq.s32.totalorder %s36, 0
    %p351 = por %p349, %p350
    %p352 = scmp.ne.s32.totalorder %s340, %s341
    %p353 = scmp.eq.s32.totalorder %s37, 1
    %p354 = por %p352, %p353
    %p356 = scmp.ne.s32.totalorder %s341, %s355
    %p357 = scmp.eq.s32.totalorder %s37, 0
    %p358 = por %p356, %p357
    %s360 = sadd.s32 %s359, 1
    %p363 = scmp.eq.s32.totalorder %s31, 1
    %p364 = scmp.ne.s32.totalorder %s359, %s361
    %p365 = scmp.eq.s32.totalorder %s31, 0
    %p366 = por %p364, %p365
    %p367 = scmp.ne.s32.totalorder %s359, %s361
    %p368 = scmp.eq.s32.totalorder %s36, 1
    %p369 = por %p367, %p368
    %p370 = scmp.ne.s32.totalorder %s361, %s362
    %p371 = scmp.eq.s32.totalorder %s36, 0
    %p372 = por %p370, %p371
    %p373 = scmp.ne.s32.totalorder %s361, %s362
    %p374 = scmp.eq.s32.totalorder %s37, 1
    %p375 = por %p373, %p374
    %p377 = scmp.ne.s32.totalorder %s362, %s376
    %p378 = scmp.eq.s32.totalorder %s37, 0
    %p379 = por %p377, %p378
    %s381 = sadd.s32 %s380, 1
    %p384 = scmp.eq.s32.totalorder %s31, 1
    %p385 = scmp.ne.s32.totalorder %s380, %s382
    %p386 = scmp.eq.s32.totalorder %s31, 0
    %p387 = por %p385, %p386
    %p388 = scmp.ne.s32.totalorder %s380, %s382
    %p389 = scmp.eq.s32.totalorder %s36, 1
    %p390 = por %p388, %p389
    %p391 = scmp.ne.s32.totalorder %s382, %s383
    %p392 = scmp.eq.s32.totalorder %s36, 0
    %p393 = por %p391, %p392
    %p394 = scmp.ne.s32.totalorder %s382, %s383
    %p395 = scmp.eq.s32.totalorder %s37, 1
    %p396 = por %p394, %p395
    %p398 = scmp.ne.s32.totalorder %s383, %s397
    %p399 = scmp.eq.s32.totalorder %s37, 0
    %p400 = por %p398, %p399
    %s402 = sadd.s32 %s401, 1
    %p405 = scmp.eq.s32.totalorder %s31, 1
    %p406 = scmp.ne.s32.totalorder %s401, %s403
    %p407 = scmp.eq.s32.totalorder %s31, 0
    %p408 = por %p406, %p407
    %p409 = scmp.ne.s32.totalorder %s401, %s403
    %p410 = scmp.eq.s32.totalorder %s36, 1
    %p411 = por %p409, %p410
    %p412 = scmp.ne.s32.totalorder %s403, %s404
    %p413 = scmp.eq.s32.totalorder %s36, 0
    %p414 = por %p412, %p413
    %p415 = scmp.ne.s32.totalorder %s403, %s404
    %p416 = scmp.eq.s32.totalorder %s37, 1
    %p417 = por %p415, %p416
    %p419 = scmp.ne.s32.totalorder %s404, %s418
    %p420 = scmp.eq.s32.totalorder %s37, 0
    %p421 = por %p419, %p420
    %s423 = sadd.s32 %s422, 1
    %p426 = scmp.eq.s32.totalorder %s31, 1
    %p427 = scmp.ne.s32.totalorder %s422, %s424
    %p428 = scmp.eq.s32.totalorder %s31, 0
    %p429 = por %p427, %p428
    %p430 = scmp.ne.s32.totalorder %s422, %s424
    %p431 = scmp.eq.s32.totalorder %s36, 1
    %p432 = por %p430, %p431
    %p433 = scmp.ne.s32.totalorder %s424, %s425
    %p434 = scmp.eq.s32.totalorder %s36, 0
    %p435 = por %p433, %p434
    %p436 = scmp.ne.s32.totalorder %s424, %s425
    %p437 = scmp.eq.s32.totalorder %s37, 1
    %p438 = por %p436, %p437
    %p440 = scmp.ne.s32.totalorder %s425, %s439
    %p441 = scmp.eq.s32.totalorder %s37, 0
    %p442 = por %p440, %p441
    %s444 = sadd.s32 %s443, 1
    %p447 = scmp.eq.s32.totalorder %s31, 1
    %p448 = scmp.ne.s32.totalorder %s443, %s445
    %p449 = scmp.eq.s32.totalorder %s31, 0
    %p450 = por %p448, %p449
    %p451 = scmp.ne.s32.totalorder %s443, %s445
    %p452 = scmp.eq.s32.totalorder %s36, 1
    %p453 = por %p451, %p452
    %p454 = scmp.ne.s32.totalorder %s445, %s446
    %p455 = scmp.eq.s32.totalorder %s36, 0
    %p456 = por %p454, %p455
    %p457 = scmp.ne.s32.totalorder %s445, %s446
    %p458 = scmp.eq.s32.totalorder %s37, 1
    %p459 = por %p457, %p458
    %p461 = scmp.ne.s32.totalorder %s446, %s460
    %p462 = scmp.eq.s32.totalorder %s37, 0
    %p463 = por %p461, %p462
    %s465 = sadd.s32 %s464, 1
    %p468 = scmp.eq.s32.totalorder %s31, 1
    %p469 = scmp.ne.s32.totalorder %s464, %s466
    %p470 = scmp.eq.s32.totalorder %s31, 0
    %p471 = por %p469, %p470
    %p472 = scmp.ne.s32.totalorder %s464, %s466
    %p473 = scmp.eq.s32.totalorder %s36, 1
    %p474 = por %p472, %p473
    %p475 = scmp.ne.s32.totalorder %s466, %s467
    %p476 = scmp.eq.s32.totalorder %s36, 0
    %p477 = por %p475, %p476
    %p478 = scmp.ne.s32.totalorder %s466, %s467
    %p479 = scmp.eq.s32.totalorder %s37, 1
    %p480 = por %p478, %p479
    %p482 = scmp.ne.s32.totalorder %s467, %s481
    %p483 = scmp.eq.s32.totalorder %s37, 0
    %p484 = por %p482, %p483
    %s486 = sadd.s32 %s485, 1
    %p489 = scmp.eq.s32.totalorder %s31, 1
    %p490 = scmp.ne.s32.totalorder %s485, %s487
    %p491 = scmp.eq.s32.totalorder %s31, 0
    %p492 = por %p490, %p491
    %p493 = scmp.ne.s32.totalorder %s485, %s487
    %p494 = scmp.eq.s32.totalorder %s36, 1
    %p495 = por %p493, %p494
    %p496 = scmp.ne.s32.totalorder %s487, %s488
    %p497 = scmp.eq.s32.totalorder %s36, 0
    %p498 = por %p496, %p497
    %p499 = scmp.ne.s32.totalorder %s487, %s488
    %p500 = scmp.eq.s32.totalorder %s37, 1
    %p501 = por %p499, %p500
    %p503 = scmp.ne.s32.totalorder %s488, %s502
    %p504 = scmp.eq.s32.totalorder %s37, 0
    %p505 = por %p503, %p504
    %s507 = sadd.s32 %s506, 1
    %p510 = scmp.eq.s32.totalorder %s31, 1
    %p511 = scmp.ne.s32.totalorder %s506, %s508
    %p512 = scmp.eq.s32.totalorder %s31, 0
    %p513 = por %p511, %p512
    %p514 = scmp.ne.s32.totalorder %s506, %s508
    %p515 = scmp.eq.s32.totalorder %s36, 1
    %p516 = por %p514, %p515
    %p517 = scmp.ne.s32.totalorder %s508, %s509
    %p518 = scmp.eq.s32.totalorder %s36, 0
    %p519 = por %p517, %p518
    %p520 = scmp.ne.s32.totalorder %s508, %s509
    %p521 = scmp.eq.s32.totalorder %s37, 1
    %p522 = por %p520, %p521
    %p524 = scmp.ne.s32.totalorder %s509, %s523
    %p525 = scmp.eq.s32.totalorder %s37, 0
    %p526 = por %p524, %p525
    %s528 = sadd.s32 %s527, 1
    %p531 = scmp.eq.s32.totalorder %s31, 1
    %p532 = scmp.ne.s32.totalorder %s527, %s529
    %p533 = scmp.eq.s32.totalorder %s31, 0
    %p534 = por %p532, %p533
    %p535 = scmp.ne.s32.totalorder %s527, %s529
    %p536 = scmp.eq.s32.totalorder %s36, 1
    %p537 = por %p535, %p536
    %p538 = scmp.ne.s32.totalorder %s529, %s530
    %p539 = scmp.eq.s32.totalorder %s36, 0
    %p540 = por %p538, %p539
    %p541 = scmp.ne.s32.totalorder %s529, %s530
    %p542 = scmp.eq.s32.totalorder %s37, 1
    %p543 = por %p541, %p542
    %p545 = scmp.ne.s32.totalorder %s530, %s544
    %p546 = scmp.eq.s32.totalorder %s37, 0
    %p547 = por %p545, %p546
    %s549 = sadd.s32 %s548, 1
    %p552 = scmp.eq.s32.totalorder %s31, 1
    %p553 = scmp.ne.s32.totalorder %s548, %s550
    %p554 = scmp.eq.s32.totalorder %s31, 0
    %p555 = por %p553, %p554
    %p556 = scmp.ne.s32.totalorder %s548, %s550
    %p557 = scmp.eq.s32.totalorder %s36, 1
    %p558 = por %p556, %p557
    %p559 = scmp.ne.s32.totalorder %s550, %s551
    %p560 = scmp.eq.s32.totalorder %s36, 0
    %p561 = por %p559, %p560
    %p562 = scmp.ne.s32.totalorder %s550, %s551
    %p563 = scmp.eq.s32.totalorder %s37, 1
    %p564 = por %p562, %p563
    %p566 = scmp.ne.s32.totalorder %s551, %s565
    %p567 = scmp.eq.s32.totalorder %s37, 0
    %p568 = por %p566, %p567
    %s569 = ssub.s32 %s31, %s38
    %p570 = scmp.eq.s32.totalorder %s569, 0
    %s572 = sadd.s32 %s571, 1
    %s573 = scalar_select %p570, %s571, %s572
    %p576 = pneg %p570
    %p577 = scmp.eq.s32.totalorder %s31, 1
    %p578 = por %p576, %p577
    %p579 = scmp.ne.s32.totalorder %s571, %s574
    %p580 = scmp.eq.s32.totalorder %s31, 0
    %p581 = por %p579, %p580
    %p582 = scmp.ne.s32.totalorder %s571, %s574
    %p583 = scmp.eq.s32.totalorder %s36, 1
    %p584 = por %p582, %p583
    %p585 = scmp.ne.s32.totalorder %s574, %s575
    %p586 = scmp.eq.s32.totalorder %s36, 0
    %p587 = por %p585, %p586
    %p588 = scmp.ne.s32.totalorder %s574, %s575
    %p589 = scmp.eq.s32.totalorder %s37, 1
    %p590 = por %p588, %p589
    %p592 = scmp.ne.s32.totalorder %s575, %s591
    %p593 = scmp.eq.s32.totalorder %s37, 0
    %p594 = por %p592, %p593
    %p595 = scmp.le.s32.totalorder 1, %s31
    %p596 = scmp.lt.s32.totalorder %s31, 3
    %p597 = pnand %p595, %p596
    %p598 = pneg %p597
    // Predicated region
    $region9: #{dbsnl_forward.1} parent=5 // pred_check
      _
    $region10: #{dbsnl_forward.1} parent=5 // pred_check_branch
      %600 = sbr.rel (%p597) target = $region12
    $region11: #{dbsnl_forward.1} parent=5 // pred_region
      %s601 = ssub.s32 %s31, 1
      // Predicated region
      $region13: #{dbsnl_forward.1} parent=11 // pred_check
        %p602 = pneg %p78
      $region14: #{dbsnl_forward.1} parent=11 // pred_check_branch
        %604 = sbr.rel (%p602) target = $region16
      $region15: #{dbsnl_forward.1} parent=11 // pred_region
        _
      $region16: #{dbsnl_forward.1} parent=11 // pred_fallthru
        _
      // Predicated region
      $region17: #{dbsnl_forward.1} parent=11 // pred_check
        %p605 = pneg %p99
      $region18: #{dbsnl_forward.1} parent=11 // pred_check_branch
        %607 = sbr.rel (%p605) target = $region20
      $region19: #{dbsnl_forward.1} parent=11 // pred_region
        _
      $region20: #{dbsnl_forward.1} parent=11 // pred_fallthru
        _
      // Predicated region
      $region21: #{dbsnl_forward.1} parent=11 // pred_check
        %p608 = pneg %p120
      $region22: #{dbsnl_forward.1} parent=11 // pred_check_branch
        %610 = sbr.rel (%p608) target = $region24
      $region23: #{dbsnl_forward.1} parent=11 // pred_region
        _
      $region24: #{dbsnl_forward.1} parent=11 // pred_fallthru
        _
      // Predicated region
      $region25: #{dbsnl_forward.1} parent=11 // pred_check
        %p611 = pneg %p141
      $region26: #{dbsnl_forward.1} parent=11 // pred_check_branch
        %613 = sbr.rel (%p611) target = $region28
      $region27: #{dbsnl_forward.1} parent=11 // pred_region
        _
      $region28: #{dbsnl_forward.1} parent=11 // pred_fallthru
        _
      // Predicated region
      $region29: #{dbsnl_forward.1} parent=11 // pred_check
        %p614 = pneg %p162
      $region30: #{dbsnl_forward.1} parent=11 // pred_check_branch
        %616 = sbr.rel (%p614) target = $region32
      $region31: #{dbsnl_forward.1} parent=11 // pred_region
        _
      $region32: #{dbsnl_forward.1} parent=11 // pred_fallthru
        _
      // Predicated region
      $region33: #{dbsnl_forward.1} parent=11 // pred_check
        %p617 = pneg %p183
      $region34: #{dbsnl_forward.1} parent=11 // pred_check_branch
        %619 = sbr.rel (%p617) target = $region36
      $region35: #{dbsnl_forward.1} parent=11 // pred_region
        _
      $region36: #{dbsnl_forward.1} parent=11 // pred_fallthru
        _
      // Predicated region
      $region37: #{dbsnl_forward.1} parent=11 // pred_check
        %p620 = pneg %p204
      $region38: #{dbsnl_forward.1} parent=11 // pred_check_branch
        %622 = sbr.rel (%p620) target = $region40
      $region39: #{dbsnl_forward.1} parent=11 // pred_region
        _
      $region40: #{dbsnl_forward.1} parent=11 // pred_fallthru
        _
      // Predicated region
      $region41: #{dbsnl_forward.1} parent=11 // pred_check
        %p623 = pneg %p225
      $region42: #{dbsnl_forward.1} parent=11 // pred_check_branch
        %625 = sbr.rel (%p623) target = $region44
      $region43: #{dbsnl_forward.1} parent=11 // pred_region
        _
      $region44: #{dbsnl_forward.1} parent=11 // pred_fallthru
        _
      // Predicated region
      $region45: #{dbsnl_forward.1} parent=11 // pred_check
        %p626 = pneg %p246
      $region46: #{dbsnl_forward.1} parent=11 // pred_check_branch
        %628 = sbr.rel (%p626) target = $region48
      $region47: #{dbsnl_forward.1} parent=11 // pred_region
        _
      $region48: #{dbsnl_forward.1} parent=11 // pred_fallthru
        _
      // Predicated region
      $region49: #{dbsnl_forward.1} parent=11 // pred_check
        %p629 = pneg %p267
      $region50: #{dbsnl_forward.1} parent=11 // pred_check_branch
        %631 = sbr.rel (%p629) target = $region52
      $region51: #{dbsnl_forward.1} parent=11 // pred_region
        _
      $region52: #{dbsnl_forward.1} parent=11 // pred_fallthru
        _
      // Predicated region
      $region53: #{dbsnl_forward.1} parent=11 // pred_check
        %p632 = pneg %p288
      $region54: #{dbsnl_forward.1} parent=11 // pred_check_branch
        %634 = sbr.rel (%p632) target = $region56
      $region55: #{dbsnl_forward.1} parent=11 // pred_region
        _
      $region56: #{dbsnl_forward.1} parent=11 // pred_fallthru
        _
      // Predicated region
      $region57: #{dbsnl_forward.1} parent=11 // pred_check
        %p635 = pneg %p309
      $region58: #{dbsnl_forward.1} parent=11 // pred_check_branch
        %637 = sbr.rel (%p635) target = $region60
      $region59: #{dbsnl_forward.1} parent=11 // pred_region
        _
      $region60: #{dbsnl_forward.1} parent=11 // pred_fallthru
        _
      // Predicated region
      $region61: #{dbsnl_forward.1} parent=11 // pred_check
        %p638 = pneg %p330
      $region62: #{dbsnl_forward.1} parent=11 // pred_check_branch
        %640 = sbr.rel (%p638) target = $region64
      $region63: #{dbsnl_forward.1} parent=11 // pred_region
        _
      $region64: #{dbsnl_forward.1} parent=11 // pred_fallthru
        _
      // Predicated region
      $region65: #{dbsnl_forward.1} parent=11 // pred_check
        %p641 = pneg %p351
      $region66: #{dbsnl_forward.1} parent=11 // pred_check_branch
        %643 = sbr.rel (%p641) target = $region68
      $region67: #{dbsnl_forward.1} parent=11 // pred_region
        _
      $region68: #{dbsnl_forward.1} parent=11 // pred_fallthru
        _
      // Predicated region
      $region69: #{dbsnl_forward.1} parent=11 // pred_check
        %p644 = pneg %p372
      $region70: #{dbsnl_forward.1} parent=11 // pred_check_branch
        %646 = sbr.rel (%p644) target = $region72
      $region71: #{dbsnl_forward.1} parent=11 // pred_region
        _
      $region72: #{dbsnl_forward.1} parent=11 // pred_fallthru
        _
      // Predicated region
      $region73: #{dbsnl_forward.1} parent=11 // pred_check
        %p647 = pneg %p393
      $region74: #{dbsnl_forward.1} parent=11 // pred_check_branch
        %649 = sbr.rel (%p647) target = $region76
      $region75: #{dbsnl_forward.1} parent=11 // pred_region
        _
      $region76: #{dbsnl_forward.1} parent=11 // pred_fallthru
        _
      // Predicated region
      $region77: #{dbsnl_forward.1} parent=11 // pred_check
        %p650 = pneg %p414
      $region78: #{dbsnl_forward.1} parent=11 // pred_check_branch
        %652 = sbr.rel (%p650) target = $region80
      $region79: #{dbsnl_forward.1} parent=11 // pred_region
        _
      $region80: #{dbsnl_forward.1} parent=11 // pred_fallthru
        _
      // Predicated region
      $region81: #{dbsnl_forward.1} parent=11 // pred_check
        %p653 = pneg %p435
      $region82: #{dbsnl_forward.1} parent=11 // pred_check_branch
        %655 = sbr.rel (%p653) target = $region84
      $region83: #{dbsnl_forward.1} parent=11 // pred_region
        _
      $region84: #{dbsnl_forward.1} parent=11 // pred_fallthru
        _
      // Predicated region
      $region85: #{dbsnl_forward.1} parent=11 // pred_check
        %p656 = pneg %p456
      $region86: #{dbsnl_forward.1} parent=11 // pred_check_branch
        %658 = sbr.rel (%p656) target = $region88
      $region87: #{dbsnl_forward.1} parent=11 // pred_region
        _
      $region88: #{dbsnl_forward.1} parent=11 // pred_fallthru
        _
      // Predicated region
      $region89: #{dbsnl_forward.1} parent=11 // pred_check
        %p659 = pneg %p477
      $region90: #{dbsnl_forward.1} parent=11 // pred_check_branch
        %661 = sbr.rel (%p659) target = $region92
      $region91: #{dbsnl_forward.1} parent=11 // pred_region
        _
      $region92: #{dbsnl_forward.1} parent=11 // pred_fallthru
        _
      // Predicated region
      $region93: #{dbsnl_forward.1} parent=11 // pred_check
        %p662 = pneg %p498
      $region94: #{dbsnl_forward.1} parent=11 // pred_check_branch
        %664 = sbr.rel (%p662) target = $region96
      $region95: #{dbsnl_forward.1} parent=11 // pred_region
        _
      $region96: #{dbsnl_forward.1} parent=11 // pred_fallthru
        _
      // Predicated region
      $region97: #{dbsnl_forward.1} parent=11 // pred_check
        %p665 = pneg %p519
      $region98: #{dbsnl_forward.1} parent=11 // pred_check_branch
        %667 = sbr.rel (%p665) target = $region100
      $region99: #{dbsnl_forward.1} parent=11 // pred_region
        _
      $region100: #{dbsnl_forward.1} parent=11 // pred_fallthru
        _
      // Predicated region
      $region101: #{dbsnl_forward.1} parent=11 // pred_check
        %p668 = pneg %p540
      $region102: #{dbsnl_forward.1} parent=11 // pred_check_branch
        %670 = sbr.rel (%p668) target = $region104
      $region103: #{dbsnl_forward.1} parent=11 // pred_region
        _
      $region104: #{dbsnl_forward.1} parent=11 // pred_fallthru
        _
      // Predicated region
      $region105: #{dbsnl_forward.1} parent=11 // pred_check
        %p671 = pneg %p561
      $region106: #{dbsnl_forward.1} parent=11 // pred_check_branch
        %673 = sbr.rel (%p671) target = $region108
      $region107: #{dbsnl_forward.1} parent=11 // pred_region
        _
      $region108: #{dbsnl_forward.1} parent=11 // pred_fallthru
        _
    $region12: #{dbsnl_forward.1} parent=5 // pred_fallthru
      _
    %p674 = scmp.lt.s32.totalorder %s31, 2
    // Predicated region
    $region109: #{dbsnl_forward.1} parent=5 // pred_check
      %p675 = pneg %p674
    $region110: #{dbsnl_forward.1} parent=5 // pred_check_branch
      %677 = sbr.rel (%p675) target = $region112
    $region111: #{dbsnl_forward.1} parent=5 // pred_region
      // Predicated region
      $region113: #{dbsnl_forward.1} parent=111 // pred_check
        %p678 = pneg %p51
      $region114: #{dbsnl_forward.1} parent=111 // pred_check_branch
        %680 = sbr.rel (%p678) target = $region116
      $region115: #{dbsnl_forward.1} parent=111 // pred_region
        %p681 = scmp.lt.s32.totalorder %s31, 1
        %s682 = scalar_select %p681, %s31, 1
        %s683 = smul.addr %s682, 2
        %s684 = smul.addr %s683, 4
        %s685 = scalar_lea.vmem %s0, %s684
      $region116: #{dbsnl_forward.1} parent=111 // pred_fallthru
        _
    $region112: #{dbsnl_forward.1} parent=5 // pred_fallthru
      _
    %p686 = scmp.le.s32.totalorder 1, %s31
    %p687 = scmp.lt.s32.totalorder %s31, 3
    %p688 = pnand %p686, %p687
    %p689 = pneg %p688
    // Predicated region
    $region117: #{dbsnl_forward.1} parent=5 // pred_check
      _
    $region118: #{dbsnl_forward.1} parent=5 // pred_check_branch
      %691 = sbr.rel (%p688) target = $region120
    $region119: #{dbsnl_forward.1} parent=5 // pred_region
      %s692 = ssub.s32 %s31, 1
      %p693 = scmp.lt.s32.totalorder %s36, 1
      %s694 = scalar_select %p693, %s36, 1
      %s695 = smul.addr %s694, 2
      %s696 = smul.addr %s695, 4
      %s697 = scalar_lea.vmem %s0, %s696
      %p698 = pneg %p57
      %p699 = pneg %p54
      %p700 = pneg %p78
      %p701 = pneg %p75
      %p702 = pneg %p99
      %p703 = pneg %p96
      %p704 = pneg %p120
      %p705 = pneg %p117
      %p706 = pneg %p141
      %p707 = pneg %p138
      %p708 = pneg %p162
      %p709 = pneg %p159
      %p710 = pneg %p183
      %p711 = pneg %p180
      %p712 = pneg %p204
      %p713 = pneg %p201
      %p714 = pneg %p225
      %p715 = pneg %p222
      %p716 = pneg %p246
      %p717 = pneg %p243
      %p718 = pneg %p267
      %p719 = pneg %p264
      %p720 = pneg %p288
      %p721 = pneg %p285
      %p722 = pneg %p309
      %p723 = pneg %p306
      %p724 = pneg %p330
      %p725 = pneg %p327
      %p726 = pneg %p351
      %p727 = pneg %p348
      %p728 = pneg %p372
      %p729 = pneg %p369
      %p730 = pneg %p393
      %p731 = pneg %p390
      %p732 = pneg %p414
      %p733 = pneg %p411
      %p734 = pneg %p435
      %p735 = pneg %p432
      %p736 = pneg %p456
      %p737 = pneg %p453
      %p738 = pneg %p477
      %p739 = pneg %p474
      %p740 = pneg %p498
      %p741 = pneg %p495
      %p742 = pneg %p519
      %p743 = pneg %p516
      %p744 = pneg %p540
      %p745 = pneg %p537
      %p746 = pneg %p561
      %p747 = pneg %p558
      %p748 = pneg %p587
      %p749 = pneg %p584
      %p750 = scmp.lt.s32.totalorder %s36, 1
      %s751 = scalar_select %p750, %s36, 1
      %s752 = smul.addr %s751, 2
      %s753 = smul.addr %s752, 4
      %s754 = scalar_lea.vmem %s25, %s753
      %p755 = scmp.lt.s32.totalorder %s36, 1
      %s756 = scalar_select %p755, %s36, 1
      %s757 = smul.addr %s756, 2
      %s758 = smul.addr %s757, 4
      %s759 = scalar_lea.vmem %s0, %s758
      %p760 = scmp.lt.s32.totalorder %s36, 1
      %s761 = scalar_select %p760, %s36, 1
      %s762 = smul.addr %s761, 2
      %s763 = smul.addr %s762, 4
      %s764 = scalar_lea.vmem %s25, %s763
      %v765 = vlaneseq
      %v766 = vand.u32 %v765, 127
      %v767 = vadd.s32 %v766, 128
      %vm768 = vcmp.ge.s32.totalorder %v766, 16
      %vm769 = vcmp.ge.s32.totalorder %v767, 16
      %v770 = vsel %vm768, 1, 0
      %v771 = vsel %vm769, 1, 0
      %vm772 = vcmp.ge.s32.totalorder %v766, 32
      %vm773 = vcmp.ge.s32.totalorder %v767, 32
      %v774 = vsel %vm772, 1, 0
      %v775 = vsel %vm773, 1, 0
      %v776 = vadd.s32 %v770, %v774
      %v777 = vadd.s32 %v771, %v775
      %vm778 = vcmp.ge.s32.totalorder %v766, 48
      %vm779 = vcmp.ge.s32.totalorder %v767, 48
      %v780 = vsel %vm778, 1, 0
      %v781 = vsel %vm779, 1, 0
      %v782 = vadd.s32 %v776, %v780
      %v783 = vadd.s32 %v777, %v781
      %vm784 = vcmp.ge.s32.totalorder %v766, 64
      %vm785 = vcmp.ge.s32.totalorder %v767, 64
      %v786 = vsel %vm784, 1, 0
      %v787 = vsel %vm785, 1, 0
      %v788 = vadd.s32 %v782, %v786
      %v789 = vadd.s32 %v783, %v787
      %vm790 = vcmp.ge.s32.totalorder %v766, 80
      %vm791 = vcmp.ge.s32.totalorder %v767, 80
      %v792 = vsel %vm790, 1, 0
      %v793 = vsel %vm791, 1, 0
      %v794 = vadd.s32 %v788, %v792
      %v795 = vadd.s32 %v789, %v793
      %vm796 = vcmp.ge.s32.totalorder %v766, 96
      %vm797 = vcmp.ge.s32.totalorder %v767, 96
      %v798 = vsel %vm796, 1, 0
      %v799 = vsel %vm797, 1, 0
      %v800 = vadd.s32 %v794, %v798
      %v801 = vadd.s32 %v795, %v799
      %vm802 = vcmp.ge.s32.totalorder %v766, 112
      %vm803 = vcmp.ge.s32.totalorder %v767, 112
      %v804 = vsel %vm802, 1, 0
      %v805 = vsel %vm803, 1, 0
      %v806 = vadd.s32 %v800, %v804
      %v807 = vadd.s32 %v801, %v805
      %vm808 = vcmp.ge.s32.totalorder %v766, 128
      %vm809 = vcmp.ge.s32.totalorder %v767, 128
      %v810 = vsel %vm808, 1, 0
      %v811 = vsel %vm809, 1, 0
      %v812 = vadd.s32 %v806, %v810
      %v813 = vadd.s32 %v807, %v811
      %vm814 = vcmp.ge.s32.totalorder %v766, 144
      %vm815 = vcmp.ge.s32.totalorder %v767, 144
      %v816 = vsel %vm814, 1, 0
      %v817 = vsel %vm815, 1, 0
      %v818 = vadd.s32 %v812, %v816
      %v819 = vadd.s32 %v813, %v817
      %vm820 = vcmp.ge.s32.totalorder %v766, 160
      %vm821 = vcmp.ge.s32.totalorder %v767, 160
      %v822 = vsel %vm820, 1, 0
      %v823 = vsel %vm821, 1, 0
      %v824 = vadd.s32 %v818, %v822
      %v825 = vadd.s32 %v819, %v823
      %vm826 = vcmp.ge.s32.totalorder %v766, 176
      %vm827 = vcmp.ge.s32.totalorder %v767, 176
      %v828 = vsel %vm826, 1, 0
      %v829 = vsel %vm827, 1, 0
      %v830 = vadd.s32 %v824, %v828
      %v831 = vadd.s32 %v825, %v829
      %vm832 = vcmp.ge.s32.totalorder %v766, 192
      %vm833 = vcmp.ge.s32.totalorder %v767, 192
      %v834 = vsel %vm832, 1, 0
      %v835 = vsel %vm833, 1, 0
      %v836 = vadd.s32 %v830, %v834
      %v837 = vadd.s32 %v831, %v835
      %vm838 = vcmp.ge.s32.totalorder %v766, 208
      %vm839 = vcmp.ge.s32.totalorder %v767, 208
      %v840 = vsel %vm838, 1, 0
      %v841 = vsel %vm839, 1, 0
      %v842 = vadd.s32 %v836, %v840
      %v843 = vadd.s32 %v837, %v841
      %vm844 = vcmp.ge.s32.totalorder %v766, 224
      %vm845 = vcmp.ge.s32.totalorder %v767, 224
      %v846 = vsel %vm844, 1, 0
      %v847 = vsel %vm845, 1, 0
      %v848 = vadd.s32 %v842, %v846
      %v849 = vadd.s32 %v843, %v847
      %vm850 = vcmp.ge.s32.totalorder %v766, 240
      %vm851 = vcmp.ge.s32.totalorder %v767, 240
      %v852 = vsel %vm850, 1, 0
      %v853 = vsel %vm851, 1, 0
      %v854 = vadd.s32 %v848, %v852
      %v855 = vadd.s32 %v849, %v853
      %v856 = vmul.u32 %v854, 16
      %v857 = vmul.u32 %v855, 16
      %v858 = vsub.s32 %v766, %v856
      %v859 = vsub.s32 %v767, %v857
      %v860 = vld [vmem:[%s759] sm:$0x77]
      %v861 = vld [vmem:[%s1] sm:$0xff]
      %v862 = vld [vmem:[%s1 + $0x8] sm:$0xff]
      %v863 = vld [vmem:[%s2] sm:$0xff]
      %v864 = vld [vmem:[%s2 + $0x8] sm:$0xff]
      %866 = vset.pattern.permute.xlu0 0
      %867 = vperm.xlu0 %866, %v863
      %v868 = vpop.permute.xlu0 %867
      %871 = vset.pattern.permute.xlu0 0
      %872 = vperm.xlu0 %871, %v864
      %v873 = vpop.permute.xlu0 %872
      %v876 = vcombine.high %v860, %v860
      %vm877 = vcmask 23552
      %v879 = vsel %vm877, %v861, 0
      %v882 = vsel %vm877, %v862, 0
      %vm884 = vcmask 1042432
      %v885 = vsel %vm884, %v860, 0
      %v887 = vsel %vm884, %v876, 0
      %889 = vmatprep.subr.mxu0 %v887
      %890 = vmatpush1.msra.mxu0 %v885
      %891 = vmatprep.subr.mxu0 0.0
      %892 = vmatpush1.msra.mxu0 0.0
      %893 = vmatprep.subr.mxu0 0.0
      %894 = vmatpush1.msra.mxu0 0.0
      %895 = vmatprep.subr.mxu0 0.0
      %896 = vmatpush1.msra.mxu0 0.0
      %897 = vmatprep.subr.mxu0 0.0
      %898 = vmatpush1.msra.mxu0 0.0
      %899 = vmatprep.subr.mxu0 0.0
      %900 = vmatpush1.msra.mxu0 0.0
      %901 = vmatprep.subr.mxu0 0.0
      %902 = vmatpush1.msra.mxu0 0.0
      %903 = vmatprep.subr.mxu0 0.0
      %904 = vmatpush1.msra.mxu0 0.0
      %905 = vmatprep.subr.mxu0 0.0
      %906 = vmatpush1.msra.mxu0 0.0
      %907 = vmatprep.subr.mxu0 0.0
      %908 = vmatpush1.msra.mxu0 0.0
      %909 = vmatprep.subr.mxu0 0.0
      %910 = vmatpush1.msra.mxu0 0.0
      %911 = vmatprep.subr.mxu0 0.0
      %912 = vmatpush1.msra.mxu0 0.0
      %913 = vmatprep.subr.mxu0 0.0
      %914 = vmatpush1.msra.mxu0 0.0
      %915 = vmatprep.subr.mxu0 0.0
      %916 = vmatpush1.msra.mxu0 0.0
      %917 = vmatprep.subr.mxu0 0.0
      %918 = vmatpush1.msra.mxu0 0.0
      %919 = vmatprep.subr.mxu0 0.0
      %920 = vmatpush1.msra.mxu0 0.0
      %921 = vmatprep.subr.mxu0 0.0
      %922 = vmatpush1.msra.mxu0 0.0
      %923 = vmatprep.subr.mxu0 0.0
      %924 = vmatpush1.msra.mxu0 0.0
      %925 = vmatprep.subr.mxu0 0.0
      %926 = vmatpush1.msra.mxu0 0.0
      %927 = vmatprep.subr.mxu0 0.0
      %928 = vmatpush1.msra.mxu0 0.0
      %929 = vmatprep.subr.mxu0 0.0
      %930 = vmatpush1.msra.mxu0 0.0
      %931 = vmatprep.subr.mxu0 0.0
      %932 = vmatpush1.msra.mxu0 0.0
      %933 = vmatprep.subr.mxu0 0.0
      %934 = vmatpush1.msra.mxu0 0.0
      %935 = vmatprep.subr.mxu0 0.0
      %936 = vmatpush1.msra.mxu0 0.0
      %937 = vmatprep.subr.mxu0 0.0
      %938 = vmatpush1.msra.mxu0 0.0
      %939 = vmatprep.subr.mxu0 0.0
      %940 = vmatpush1.msra.mxu0 0.0
      %941 = vmatprep.subr.mxu0 0.0
      %942 = vmatpush1.msra.mxu0 0.0
      %943 = vmatprep.subr.mxu0 0.0
      %944 = vmatpush1.msra.mxu0 0.0
      %945 = vmatprep.subr.mxu0 0.0
      %946 = vmatpush1.msra.mxu0 0.0
      %947 = vmatprep.subr.mxu0 0.0
      %948 = vmatpush1.msra.mxu0 0.0
      %949 = vmatprep.subr.mxu0 0.0
      %950 = vmatpush1.msra.mxu0 0.0
      %951 = vmatprep.subr.mxu0 0.0
      %952 = vmatpush1.msra.mxu0 0.0
      %953 = vmatprep.mubr.f32.mxu0 0.0
      %954 = vmatmul.mubr.f32.gmra.mrb[0].mxu0 %v879
      %v955 = vpop.f32.mrb[0].mxu0
      %v956 = vadd.f32 %v868, %v955
      %v957 = vpop.f32.mrb[0].mxu0
      %v958 = vadd.f32 %v868, %v957
      %959 = vmatprep.mubr.f32.mxu0 0.0
      %960 = vmatmul.mubr.f32.gmra.mrb[0].mxu0 %v882
      %v961 = vpop.f32.mrb[0].mxu0
      %v962 = vadd.f32 %v873, %v961
      %v963 = vpop.f32.mrb[0].mxu0
      %v964 = vadd.f32 %v873, %v963
      %965 = vdwg.mxu0
      %v966 = vmax.f32 %v956, 0.0
      %v967 = vmax.f32 %v958, 0.0
      %v968 = vmax.f32 %v962, 0.0
      %v969 = vmax.f32 %v964, 0.0
      %970 = vrot.lane.b32.xlu0 %v966, 17
      %v971 = vpop.permute.xlu0 %970
      %972 = vrot.lane.b32.xlu0 %v968, 17
      %v973 = vpop.permute.xlu0 %972
      %974 = vrot.lane.b32.xlu0 %v967, 17
      %v975 = vpop.permute.xlu0 %974
      %976 = vrot.lane.b32.xlu0 %v969, 17
      %v977 = vpop.permute.xlu0 %976
      %vm978 = vcmp.lt.s32.totalorder %v766, 17
      %v979 = vsel %vm978, %v971, %v975
      %v980 = vsel %vm978, %v973, %v977
      %v981 = vsel %vm978, %v975, %v971
      %v982 = vsel %vm978, %v977, %v973
      %v983 = vadd.s32 %v854, 4294967295
      %v984 = vadd.s32 %v855, 4294967295
      %vm985 = vcmp.ge.s32.totalorder %v983, 0
      %vm986 = vcmp.ge.s32.totalorder %v984, 0
      %vm987 = vcmp.lt.s32.totalorder %v983, 16
      %vm988 = vcmp.lt.s32.totalorder %v984, 16
      %vm989 = vmand %vm985, %vm987
      %vm990 = vmand %vm986, %vm988
      %v991 = vadd.s32 %v858, 4294967295
      %v992 = vadd.s32 %v859, 4294967295
      %vm993 = vcmp.ge.s32.totalorder %v991, 0
      %vm994 = vcmp.ge.s32.totalorder %v992, 0
      %vm995 = vmand %vm989, %vm993
      %vm996 = vmand %vm990, %vm994
      %vm997 = vcmp.lt.s32.totalorder %v991, 16
      %vm998 = vcmp.lt.s32.totalorder %v992, 16
      %vm999 = vmand %vm995, %vm997
      %vm1000 = vmand %vm996, %vm998
      %v1001 = vsel %vm999, 1.0, 0.0
      %v1002 = vsel %vm1000, 1.0, 0.0
      %v1003 = vmul.f32 %v981, %v1001
      %v1004 = vmul.f32 %v979, %v1002
      %v1005 = vmul.f32 %v982, %v1001
      %v1006 = vmul.f32 %v980, %v1002
      %1007 = vst [vmem:[#allocation2] sm:$0xff] %v1003
      %1008 = vst [vmem:[#allocation2 + $0x8] sm:$0xff] %v1004
      %1009 = vst [vmem:[#allocation2 + $0x10] sm:$0xff] %v1005
      %1010 = vst [vmem:[#allocation2 + $0x18] sm:$0xff] %v1006
      %1011 = vrot.lane.b32.xlu0 %v966, 16
      %v1012 = vpop.permute.xlu0 %1011
      %1013 = vrot.lane.b32.xlu0 %v968, 16
      %v1014 = vpop.permute.xlu0 %1013
      %1015 = vrot.lane.b32.xlu0 %v967, 16
      %v1016 = vpop.permute.xlu0 %1015
      %1017 = vrot.lane.b32.xlu0 %v969, 16
      %v1018 = vpop.permute.xlu0 %1017
      %vm1019 = vcmp.lt.s32.totalorder %v766, 16
      %v1020 = vsel %vm1019, %v1012, %v1016
      %v1021 = vsel %vm1019, %v1014, %v1018
      %v1022 = vsel %vm1019, %v1016, %v1012
      %v1023 = vsel %vm1019, %v1018, %v1014
      %vm1024 = vcmp.ge.s32.totalorder %v858, 0
      %vm1025 = vcmp.ge.s32.totalorder %v859, 0
      %vm1026 = vmand %vm989, %vm1024
      %vm1027 = vmand %vm990, %vm1025
      %vm1028 = vcmp.lt.s32.totalorder %v858, 16
      %vm1029 = vcmp.lt.s32.totalorder %v859, 16
      %vm1030 = vmand %vm1026, %vm1028
      %vm1031 = vmand %vm1027, %vm1029
      %v1032 = vsel %vm1030, 1.0, 0.0
      %v1033 = vsel %vm1031, 1.0, 0.0
      %v1034 = vmul.f32 %v1022, %v1032
      %v1035 = vmul.f32 %v1020, %v1033
      %v1036 = vmul.f32 %v1023, %v1032
      %v1037 = vmul.f32 %v1021, %v1033
      %1038 = vst [vmem:[#allocation2 + $0x20] sm:$0xff] %v1034
      %1039 = vst [vmem:[#allocation2 + $0x28] sm:$0xff] %v1035
      %1040 = vst [vmem:[#allocation2 + $0x30] sm:$0xff] %v1036
      %1041 = vst [vmem:[#allocation2 + $0x38] sm:$0xff] %v1037
      %1042 = vrot.lane.b32.xlu0 %v966, 15
      %v1043 = vpop.permute.xlu0 %1042
      %1044 = vrot.lane.b32.xlu0 %v968, 15
      %v1045 = vpop.permute.xlu0 %1044
      %1046 = vrot.lane.b32.xlu0 %v967, 15
      %v1047 = vpop.permute.xlu0 %1046
      %1048 = vrot.lane.b32.xlu0 %v969, 15
      %v1049 = vpop.permute.xlu0 %1048
      %vm1050 = vcmp.lt.s32.totalorder %v766, 15
      %v1051 = vsel %vm1050, %v1043, %v1047
      %v1052 = vsel %vm1050, %v1045, %v1049
      %v1053 = vsel %vm1050, %v1047, %v1043
      %v1054 = vsel %vm1050, %v1049, %v1045
      %v1055 = vadd.s32 %v858, 1
      %v1056 = vadd.s32 %v859, 1
      %vm1057 = vcmp.ge.s32.totalorder %v1055, 0
      %vm1058 = vcmp.ge.s32.totalorder %v1056, 0
      %vm1059 = vmand %vm989, %vm1057
      %vm1060 = vmand %vm990, %vm1058
      %vm1061 = vcmp.lt.s32.totalorder %v1055, 16
      %vm1062 = vcmp.lt.s32.totalorder %v1056, 16
      %vm1063 = vmand %vm1059, %vm1061
      %vm1064 = vmand %vm1060, %vm1062
      %v1065 = vsel %vm1063, 1.0, 0.0
      %v1066 = vsel %vm1064, 1.0, 0.0
      %v1067 = vmul.f32 %v1053, %v1065
      %v1068 = vmul.f32 %v1051, %v1066
      %v1069 = vmul.f32 %v1054, %v1065
      %v1070 = vmul.f32 %v1052, %v1066
      %1071 = vst [vmem:[#allocation2 + $0x40] sm:$0xff] %v1067
      %1072 = vst [vmem:[#allocation2 + $0x48] sm:$0xff] %v1068
      %1073 = vst [vmem:[#allocation2 + $0x50] sm:$0xff] %v1069
      %1074 = vst [vmem:[#allocation2 + $0x58] sm:$0xff] %v1070
      %1075 = vrot.lane.b32.xlu0 %v966, 1
      %v1076 = vpop.permute.xlu0 %1075
      %1077 = vrot.lane.b32.xlu0 %v968, 1
      %v1078 = vpop.permute.xlu0 %1077
      %1079 = vrot.lane.b32.xlu0 %v967, 1
      %v1080 = vpop.permute.xlu0 %1079
      %1081 = vrot.lane.b32.xlu0 %v969, 1
      %v1082 = vpop.permute.xlu0 %1081
      %vm1083 = vcmp.lt.s32.totalorder %v766, 1
      %v1084 = vsel %vm1083, %v1076, %v1080
      %v1085 = vsel %vm1083, %v1078, %v1082
      %v1086 = vsel %vm1083, %v1080, %v1076
      %v1087 = vsel %vm1083, %v1082, %v1078
      %vm1088 = vcmp.ge.s32.totalorder %v854, 0
      %vm1089 = vcmp.ge.s32.totalorder %v855, 0
      %vm1090 = vcmp.lt.s32.totalorder %v854, 16
      %vm1091 = vcmp.lt.s32.totalorder %v855, 16
      %vm1092 = vmand %vm1088, %vm1090
      %vm1093 = vmand %vm1089, %vm1091
      %vm1094 = vmand %vm1092, %vm993
      %vm1095 = vmand %vm1093, %vm994
      %vm1096 = vmand %vm1094, %vm997
      %vm1097 = vmand %vm1095, %vm998
      %v1098 = vsel %vm1096, 1.0, 0.0
      %v1099 = vsel %vm1097, 1.0, 0.0
      %v1100 = vmul.f32 %v1086, %v1098
      %v1101 = vmul.f32 %v1084, %v1099
      %v1102 = vmul.f32 %v1087, %v1098
      %v1103 = vmul.f32 %v1085, %v1099
      %1104 = vst [vmem:[#allocation2 + $0x60] sm:$0xff] %v1100
      %1105 = vst [vmem:[#allocation2 + $0x68] sm:$0xff] %v1101
      %1106 = vst [vmem:[#allocation2 + $0x70] sm:$0xff] %v1102
      %1107 = vst [vmem:[#allocation2 + $0x78] sm:$0xff] %v1103
      %vm1108 = vmand %vm1092, %vm1024
      %vm1109 = vmand %vm1093, %vm1025
      %vm1110 = vmand %vm1108, %vm1028
      %vm1111 = vmand %vm1109, %vm1029
      %v1112 = vsel %vm1110, 1.0, 0.0
      %v1113 = vsel %vm1111, 1.0, 0.0
      %v1114 = vmul.f32 %v966, %v1112
      %v1115 = vmul.f32 %v967, %v1113
      %v1116 = vmul.f32 %v968, %v1112
      %v1117 = vmul.f32 %v969, %v1113
      %1118 = vst [vmem:[#allocation2 + $0x80] sm:$0xff] %v1114
      %1119 = vst [vmem:[#allocation2 + $0x88] sm:$0xff] %v1115
      %1120 = vst [vmem:[#allocation2 + $0x90] sm:$0xff] %v1116
      %1121 = vst [vmem:[#allocation2 + $0x98] sm:$0xff] %v1117
      %1122 = vrot.lane.b32.xlu0 %v966, 127
      %v1123 = vpop.permute.xlu0 %1122
      %1124 = vrot.lane.b32.xlu0 %v968, 127
      %v1125 = vpop.permute.xlu0 %1124
      %1126 = vrot.lane.b32.xlu0 %v967, 127
      %v1127 = vpop.permute.xlu0 %1126
      %1128 = vrot.lane.b32.xlu0 %v969, 127
      %v1129 = vpop.permute.xlu0 %1128
      %vm1130 = vcmp.lt.s32.totalorder %v766, 127
      %v1131 = vsel %vm1130, %v1123, %v1127
      %v1132 = vsel %vm1130, %v1125, %v1129
      %v1133 = vsel %vm1130, %v1127, %v1123
      %v1134 = vsel %vm1130, %v1129, %v1125
      %vm1135 = vmand %vm1092, %vm1057
      %vm1136 = vmand %vm1093, %vm1058
      %vm1137 = vmand %vm1135, %vm1061
      %vm1138 = vmand %vm1136, %vm1062
      %v1139 = vsel %vm1137, 1.0, 0.0
      %v1140 = vsel %vm1138, 1.0, 0.0
      %v1141 = vmul.f32 %v1131, %v1139
      %v1142 = vmul.f32 %v1133, %v1140
      %v1143 = vmul.f32 %v1132, %v1139
      %v1144 = vmul.f32 %v1134, %v1140
      %1145 = vst [vmem:[#allocation2 + $0xa0] sm:$0xff] %v1141
      %1146 = vst [vmem:[#allocation2 + $0xa8] sm:$0xff] %v1142
      %1147 = vst [vmem:[#allocation2 + $0xb0] sm:$0xff] %v1143
      %1148 = vst [vmem:[#allocation2 + $0xb8] sm:$0xff] %v1144
      %1149 = vrot.lane.b32.xlu0 %v966, 113
      %v1150 = vpop.permute.xlu0 %1149
      %1151 = vrot.lane.b32.xlu0 %v968, 113
      %v1152 = vpop.permute.xlu0 %1151
      %1153 = vrot.lane.b32.xlu0 %v967, 113
      %v1154 = vpop.permute.xlu0 %1153
      %1155 = vrot.lane.b32.xlu0 %v969, 113
      %v1156 = vpop.permute.xlu0 %1155
      %vm1157 = vcmp.lt.s32.totalorder %v766, 113
      %v1158 = vsel %vm1157, %v1150, %v1154
      %v1159 = vsel %vm1157, %v1152, %v1156
      %v1160 = vsel %vm1157, %v1154, %v1150
      %v1161 = vsel %vm1157, %v1156, %v1152
      %v1162 = vadd.s32 %v854, 1
      %v1163 = vadd.s32 %v855, 1
      %vm1164 = vcmp.ge.s32.totalorder %v1162, 0
      %vm1165 = vcmp.ge.s32.totalorder %v1163, 0
      %vm1166 = vcmp.lt.s32.totalorder %v1162, 16
      %vm1167 = vcmp.lt.s32.totalorder %v1163, 16
      %vm1168 = vmand %vm1164, %vm1166
      %vm1169 = vmand %vm1165, %vm1167
      %vm1170 = vmand %vm1168, %vm993
      %vm1171 = vmand %vm1169, %vm994
      %vm1172 = vmand %vm1170, %vm997
      %vm1173 = vmand %vm1171, %vm998
      %v1174 = vsel %vm1172, 1.0, 0.0
      %v1175 = vsel %vm1173, 1.0, 0.0
      %v1176 = vmul.f32 %v1158, %v1174
      %v1177 = vmul.f32 %v1160, %v1175
      %v1178 = vmul.f32 %v1159, %v1174
      %v1179 = vmul.f32 %v1161, %v1175
      %1180 = vst [vmem:[#allocation2 + $0xc0] sm:$0xff] %v1176
      %1181 = vst [vmem:[#allocation2 + $0xc8] sm:$0xff] %v1177
      %1182 = vst [vmem:[#allocation2 + $0xd0] sm:$0xff] %v1178
      %1183 = vst [vmem:[#allocation2 + $0xd8] sm:$0xff] %v1179
      %1184 = vrot.lane.b32.xlu0 %v966, 112
      %v1185 = vpop.permute.xlu0 %1184
      %1186 = vrot.lane.b32.xlu0 %v968, 112
      %v1187 = vpop.permute.xlu0 %1186
      %1188 = vrot.lane.b32.xlu0 %v967, 112
      %v1189 = vpop.permute.xlu0 %1188
      %1190 = vrot.lane.b32.xlu0 %v969, 112
      %v1191 = vpop.permute.xlu0 %1190
      %vm1192 = vcmp.lt.s32.totalorder %v766, 112
      %v1193 = vsel %vm1192, %v1185, %v1189
      %v1194 = vsel %vm1192, %v1187, %v1191
      %v1195 = vsel %vm1192, %v1189, %v1185
      %v1196 = vsel %vm1192, %v1191, %v1187
      %vm1197 = vmand %vm1168, %vm1024
      %vm1198 = vmand %vm1169, %vm1025
      %vm1199 = vmand %vm1197, %vm1028
      %vm1200 = vmand %vm1198, %vm1029
      %v1201 = vsel %vm1199, 1.0, 0.0
      %v1202 = vsel %vm1200, 1.0, 0.0
      %v1203 = vmul.f32 %v1193, %v1201
      %v1204 = vmul.f32 %v1195, %v1202
      %v1205 = vmul.f32 %v1194, %v1201
      %v1206 = vmul.f32 %v1196, %v1202
      %1207 = vst [vmem:[#allocation2 + $0xe0] sm:$0xff] %v1203
      %1208 = vst [vmem:[#allocation2 + $0xe8] sm:$0xff] %v1204
      %1209 = vst [vmem:[#allocation2 + $0xf0] sm:$0xff] %v1205
      %1210 = vst [vmem:[#allocation2 + $0xf8] sm:$0xff] %v1206
      %1211 = vrot.lane.b32.xlu0 %v966, 111
      %v1212 = vpop.permute.xlu0 %1211
      %1213 = vrot.lane.b32.xlu0 %v968, 111
      %v1214 = vpop.permute.xlu0 %1213
      %1215 = vrot.lane.b32.xlu0 %v967, 111
      %v1216 = vpop.permute.xlu0 %1215
      %1217 = vrot.lane.b32.xlu0 %v969, 111
      %v1218 = vpop.permute.xlu0 %1217
      %vm1219 = vcmp.lt.s32.totalorder %v766, 111
      %v1220 = vsel %vm1219, %v1212, %v1216
      %v1221 = vsel %vm1219, %v1214, %v1218
      %v1222 = vsel %vm1219, %v1216, %v1212
      %v1223 = vsel %vm1219, %v1218, %v1214
      %vm1224 = vmand %vm1168, %vm1057
      %vm1225 = vmand %vm1169, %vm1058
      %vm1226 = vmand %vm1224, %vm1061
      %vm1227 = vmand %vm1225, %vm1062
      %v1228 = vsel %vm1226, 1.0, 0.0
      %v1229 = vsel %vm1227, 1.0, 0.0
      %v1230 = vmul.f32 %v1220, %v1228
      %v1231 = vmul.f32 %v1222, %v1229
      %v1232 = vmul.f32 %v1221, %v1228
      %v1233 = vmul.f32 %v1223, %v1229
      %1234 = vst [vmem:[#allocation2 + $0x100] sm:$0xff] %v1230
      %1235 = vst [vmem:[#allocation2 + $0x108] sm:$0xff] %v1231
      %1236 = vst [vmem:[#allocation2 + $0x110] sm:$0xff] %v1232
      %1237 = vst [vmem:[#allocation2 + $0x118] sm:$0xff] %v1233
      %v1238 = vld [vmem:[%s3] sm:$0xff]
      %v1239 = vld [vmem:[%s3 + $0x8] sm:$0xff]
      %v1240 = vld [vmem:[%s3 + $0x10] sm:$0xff]
      %v1241 = vld [vmem:[%s3 + $0x18] sm:$0xff]
      %v1242 = vld [vmem:[%s4] sm:$0xff]
      %v1243 = vld [vmem:[%s4 + $0x8] sm:$0xff]
      %v1244 = vld [vmem:[#allocation2] sm:$0xff]
      %v1245 = vld [vmem:[#allocation2 + $0x8] sm:$0xff]
      %v1246 = vld [vmem:[#allocation2 + $0x10] sm:$0xff]
      %v1247 = vld [vmem:[#allocation2 + $0x18] sm:$0xff]
      %v1248 = vld [vmem:[#allocation2 + $0x20] sm:$0xff]
      %v1249 = vld [vmem:[#allocation2 + $0x28] sm:$0xff]
      %v1250 = vld [vmem:[#allocation2 + $0x30] sm:$0xff]
      %v1251 = vld [vmem:[#allocation2 + $0x38] sm:$0xff]
      %v1252 = vld [vmem:[#allocation2 + $0x40] sm:$0xff]
      %v1253 = vld [vmem:[#allocation2 + $0x48] sm:$0xff]
      %v1254 = vld [vmem:[#allocation2 + $0x50] sm:$0xff]
      %v1255 = vld [vmem:[#allocation2 + $0x58] sm:$0xff]
      %v1256 = vld [vmem:[#allocation2 + $0x60] sm:$0xff]
      %v1257 = vld [vmem:[#allocation2 + $0x68] sm:$0xff]
      %v1258 = vld [vmem:[#allocation2 + $0x70] sm:$0xff]
      %v1259 = vld [vmem:[#allocation2 + $0x78] sm:$0xff]
      %v1260 = vld [vmem:[#allocation2 + $0x80] sm:$0xff]
      %v1261 = vld [vmem:[#allocation2 + $0x88] sm:$0xff]
      %v1262 = vld [vmem:[#allocation2 + $0x90] sm:$0xff]
      %v1263 = vld [vmem:[#allocation2 + $0x98] sm:$0xff]
      %v1264 = vld [vmem:[#allocation2 + $0xa0] sm:$0xff]
      %v1265 = vld [vmem:[#allocation2 + $0xa8] sm:$0xff]
      %v1266 = vld [vmem:[#allocation2 + $0xb0] sm:$0xff]
      %v1267 = vld [vmem:[#allocation2 + $0xb8] sm:$0xff]
      %v1268 = vld [vmem:[#allocation2 + $0xc0] sm:$0xff]
      %v1269 = vld [vmem:[#allocation2 + $0xc8] sm:$0xff]
      %v1270 = vld [vmem:[#allocation2 + $0xd0] sm:$0xff]
      %v1271 = vld [vmem:[#allocation2 + $0xd8] sm:$0xff]
      %v1272 = vld [vmem:[#allocation2 + $0xe0] sm:$0xff]
      %v1273 = vld [vmem:[#allocation2 + $0xe8] sm:$0xff]
      %v1274 = vld [vmem:[#allocation2 + $0xf0] sm:$0xff]
      %v1275 = vld [vmem:[#allocation2 + $0xf8] sm:$0xff]
      %v1276 = vld [vmem:[#allocation2 + $0x100] sm:$0xff]
      %v1277 = vld [vmem:[#allocation2 + $0x108] sm:$0xff]
      %v1278 = vld [vmem:[#allocation2 + $0x110] sm:$0xff]
      %v1279 = vld [vmem:[#allocation2 + $0x118] sm:$0xff]
      %1281 = vset.pattern.permute.xlu0 0
      %1282 = vperm.xlu0 %1281, %v1242
      %v1283 = vpop.permute.xlu0 %1282
      %1286 = vset.pattern.permute.xlu0 0
      %1287 = vperm.xlu0 %1286, %v1243
      %v1288 = vpop.permute.xlu0 %1287
      %vm1290 = vcmask 130048
      %v1292 = vsel %vm1290, %v1239, 0
      %v1295 = vsel %vm1290, %v1241, 0
      %1297 = vmatprep.subr.mxu0 %v1245
      %1298 = vmatpush1.msra.mxu0 %v1244
      %1299 = vmatprep.subr.mxu0 %v1247
      %1300 = vmatpush1.msra.mxu0 %v1246
      %1301 = vmatprep.subr.mxu0 %v1249
      %1302 = vmatpush1.msra.mxu0 %v1248
      %1303 = vmatprep.subr.mxu0 %v1251
      %1304 = vmatpush1.msra.mxu0 %v1250
      %1305 = vmatprep.subr.mxu0 %v1253
      %1306 = vmatpush1.msra.mxu0 %v1252
      %1307 = vmatprep.subr.mxu0 %v1255
      %1308 = vmatpush1.msra.mxu0 %v1254
      %1309 = vmatprep.subr.mxu0 %v1257
      %1310 = vmatpush1.msra.mxu0 %v1256
      %1311 = vmatprep.subr.mxu0 %v1259
      %1312 = vmatpush1.msra.mxu0 %v1258
      %1313 = vmatprep.subr.mxu0 %v1261
      %1314 = vmatpush1.msra.mxu0 %v1260
      %1315 = vmatprep.subr.mxu0 %v1263
      %1316 = vmatpush1.msra.mxu0 %v1262
      %1317 = vmatprep.subr.mxu0 %v1265
      %1318 = vmatpush1.msra.mxu0 %v1264
      %1319 = vmatprep.subr.mxu0 %v1267
      %1320 = vmatpush1.msra.mxu0 %v1266
      %1321 = vmatprep.subr.mxu0 %v1269
      %1322 = vmatpush1.msra.mxu0 %v1268
      %1323 = vmatprep.subr.mxu0 %v1271
      %1324 = vmatpush1.msra.mxu0 %v1270
      %1325 = vmatprep.subr.mxu0 %v1273
      %1326 = vmatpush1.msra.mxu0 %v1272
      %1327 = vmatprep.subr.mxu0 %v1275
      %1328 = vmatpush1.msra.mxu0 %v1274
      %1329 = vmatprep.subr.mxu0 %v1277
      %1330 = vmatpush1.msra.mxu0 %v1276
      %1331 = vmatprep.subr.mxu0 %v1279
      %1332 = vmatpush1.msra.mxu0 %v1278
      %1333 = vmatprep.subr.mxu0 0.0
      %1334 = vmatpush1.msra.mxu0 0.0
      %1335 = vmatprep.subr.mxu0 0.0
      %1336 = vmatpush1.msra.mxu0 0.0
      %1337 = vmatprep.subr.mxu0 0.0
      %1338 = vmatpush1.msra.mxu0 0.0
      %1339 = vmatprep.subr.mxu0 0.0
      %1340 = vmatpush1.msra.mxu0 0.0
      %1341 = vmatprep.subr.mxu0 0.0
      %1342 = vmatpush1.msra.mxu0 0.0
      %1343 = vmatprep.subr.mxu0 0.0
      %1344 = vmatpush1.msra.mxu0 0.0
      %1345 = vmatprep.subr.mxu0 0.0
      %1346 = vmatpush1.msra.mxu0 0.0
      %1347 = vmatprep.subr.mxu0 0.0
      %1348 = vmatpush1.msra.mxu0 0.0
      %1349 = vmatprep.subr.mxu0 0.0
      %1350 = vmatpush1.msra.mxu0 0.0
      %1351 = vmatprep.subr.mxu0 0.0
      %1352 = vmatpush1.msra.mxu0 0.0
      %1353 = vmatprep.subr.mxu0 0.0
      %1354 = vmatpush1.msra.mxu0 0.0
      %1355 = vmatprep.subr.mxu0 0.0
      %1356 = vmatpush1.msra.mxu0 0.0
      %1357 = vmatprep.subr.mxu0 0.0
      %1358 = vmatpush1.msra.mxu0 0.0
      %1359 = vmatprep.subr.mxu0 0.0
      %1360 = vmatpush1.msra.mxu0 0.0
      %1361 = vmatprep.mubr.f32.mxu0 %v1292
      %1362 = vmatmul.mubr.f32.gmra.mrb[0].mxu0 %v1238
      %v1363 = vpop.f32.mrb[0].mxu0
      %v1364 = vadd.f32 %v1283, %v1363
      %v1365 = vpop.f32.mrb[0].mxu0
      %v1366 = vadd.f32 %v1283, %v1365
      %1367 = vmatprep.mubr.f32.mxu0 %v1295
      %1368 = vmatmul.mubr.f32.gmra.mrb[0].mxu0 %v1240
      %v1369 = vpop.f32.mrb[0].mxu0
      %v1370 = vadd.f32 %v1288, %v1369
      %v1371 = vpop.f32.mrb[0].mxu0
      %v1372 = vadd.f32 %v1288, %v1371
      %1373 = vdwg.mxu0
      %v1374 = vmax.f32 %v1364, 0.0
      %v1375 = vmax.f32 %v1366, 0.0
      %v1376 = vmax.f32 %v1370, 0.0
      %v1377 = vmax.f32 %v1372, 0.0
      %v1378 = vld [vmem:[%s5] sm:$0xff]
      %v1379 = vld [vmem:[%s5 + $0x8] sm:$0xff]
      %v1380 = vld [vmem:[%s6] sm:$0xff]
      %v1381 = vld [vmem:[%s6 + $0x8] sm:$0xff]
      %1383 = vset.pattern.permute.xlu0 0
      %1384 = vperm.xlu0 %1383, %v1380
      %v1385 = vpop.permute.xlu0 %1384
      %1388 = vset.pattern.permute.xlu0 0
      %1389 = vperm.xlu0 %1388, %v1381
      %v1390 = vpop.permute.xlu0 %1389
      %v1393 = vsel %vm1290, %v1378, 0
      %v1396 = vsel %vm1290, %v1379, 0
      %1398 = vmatprep.subr.mxu0 %v1375
      %1399 = vmatpush1.msra.mxu0 %v1374
      %1400 = vmatprep.subr.mxu0 %v1377
      %1401 = vmatpush1.msra.mxu0 %v1376
      %1402 = vmatprep.subr.mxu0 0.0
      %1403 = vmatpush1.msra.mxu0 0.0
      %1404 = vmatprep.subr.mxu0 0.0
      %1405 = vmatpush1.msra.mxu0 0.0
      %1406 = vmatprep.subr.mxu0 0.0
      %1407 = vmatpush1.msra.mxu0 0.0
      %1408 = vmatprep.subr.mxu0 0.0
      %1409 = vmatpush1.msra.mxu0 0.0
      %1410 = vmatprep.subr.mxu0 0.0
      %1411 = vmatpush1.msra.mxu0 0.0
      %1412 = vmatprep.subr.mxu0 0.0
      %1413 = vmatpush1.msra.mxu0 0.0
      %1414 = vmatprep.subr.mxu0 0.0
      %1415 = vmatpush1.msra.mxu0 0.0
      %1416 = vmatprep.subr.mxu0 0.0
      %1417 = vmatpush1.msra.mxu0 0.0
      %1418 = vmatprep.subr.mxu0 0.0
      %1419 = vmatpush1.msra.mxu0 0.0
      %1420 = vmatprep.subr.mxu0 0.0
      %1421 = vmatpush1.msra.mxu0 0.0
      %1422 = vmatprep.subr.mxu0 0.0
      %1423 = vmatpush1.msra.mxu0 0.0
      %1424 = vmatprep.subr.mxu0 0.0
      %1425 = vmatpush1.msra.mxu0 0.0
      %1426 = vmatprep.subr.mxu0 0.0
      %1427 = vmatpush1.msra.mxu0 0.0
      %1428 = vmatprep.subr.mxu0 0.0
      %1429 = vmatpush1.msra.mxu0 0.0
      %1430 = vmatprep.subr.mxu0 0.0
      %1431 = vmatpush1.msra.mxu0 0.0
      %1432 = vmatprep.subr.mxu0 0.0
      %1433 = vmatpush1.msra.mxu0 0.0
      %1434 = vmatprep.subr.mxu0 0.0
      %1435 = vmatpush1.msra.mxu0 0.0
      %1436 = vmatprep.subr.mxu0 0.0
      %1437 = vmatpush1.msra.mxu0 0.0
      %1438 = vmatprep.subr.mxu0 0.0
      %1439 = vmatpush1.msra.mxu0 0.0
      %1440 = vmatprep.subr.mxu0 0.0
      %1441 = vmatpush1.msra.mxu0 0.0
      %1442 = vmatprep.subr.mxu0 0.0
      %1443 = vmatpush1.msra.mxu0 0.0
      %1444 = vmatprep.subr.mxu0 0.0
      %1445 = vmatpush1.msra.mxu0 0.0
      %1446 = vmatprep.subr.mxu0 0.0
      %1447 = vmatpush1.msra.mxu0 0.0
      %1448 = vmatprep.subr.mxu0 0.0
      %1449 = vmatpush1.msra.mxu0 0.0
      %1450 = vmatprep.subr.mxu0 0.0
      %1451 = vmatpush1.msra.mxu0 0.0
      %1452 = vmatprep.subr.mxu0 0.0
      %1453 = vmatpush1.msra.mxu0 0.0
      %1454 = vmatprep.subr.mxu0 0.0
      %1455 = vmatpush1.msra.mxu0 0.0
      %1456 = vmatprep.subr.mxu0 0.0
      %1457 = vmatpush1.msra.mxu0 0.0
      %1458 = vmatprep.subr.mxu0 0.0
      %1459 = vmatpush1.msra.mxu0 0.0
      %1460 = vmatprep.subr.mxu0 0.0
      %1461 = vmatpush1.msra.mxu0 0.0
      %1462 = vmatprep.mubr.f32.mxu0 0.0
      %1463 = vmatmul.mubr.f32.gmra.mrb[0].mxu0 %v1393
      %v1464 = vpop.f32.mrb[0].mxu0
      %v1465 = vadd.f32 %v1385, %v1464
      %v1466 = vpop.f32.mrb[0].mxu0
      %v1467 = vadd.f32 %v1385, %v1466
      %1468 = vmatprep.mubr.f32.mxu0 0.0
      %1469 = vmatmul.mubr.f32.gmra.mrb[0].mxu0 %v1396
      %v1470 = vpop.f32.mrb[0].mxu0
      %v1471 = vadd.f32 %v1390, %v1470
      %v1472 = vpop.f32.mrb[0].mxu0
      %v1473 = vadd.f32 %v1390, %v1472
      %1474 = vdwg.mxu0
      %v1475 = vmax.f32 %v1465, 0.0
      %v1476 = vmax.f32 %v1467, 0.0
      %v1477 = vmax.f32 %v1471, 0.0
      %v1478 = vmax.f32 %v1473, 0.0
      %v1479 = vld [vmem:[%s7] sm:$0xff]
      %v1480 = vld [vmem:[%s7 + $0x8] sm:$0xff]
      %v1481 = vld [vmem:[%s8] sm:$0xff]
      %v1482 = vld [vmem:[%s8 + $0x8] sm:$0xff]
      %1484 = vset.pattern.permute.xlu0 0
      %1485 = vperm.xlu0 %1484, %v1481
      %v1486 = vpop.permute.xlu0 %1485
      %1489 = vset.pattern.permute.xlu0 0
      %1490 = vperm.xlu0 %1489, %v1482
      %v1491 = vpop.permute.xlu0 %1490
      %v1494 = vsel %vm1290, %v1479, 0
      %v1497 = vsel %vm1290, %v1480, 0
      %1499 = vmatprep.subr.mxu0 %v1476
      %1500 = vmatpush1.msra.mxu0 %v1475
      %1501 = vmatprep.subr.mxu0 %v1478
      %1502 = vmatpush1.msra.mxu0 %v1477
      %1503 = vmatprep.subr.mxu0 0.0
      %1504 = vmatpush1.msra.mxu0 0.0
      %1505 = vmatprep.subr.mxu0 0.0
      %1506 = vmatpush1.msra.mxu0 0.0
      %1507 = vmatprep.subr.mxu0 0.0
      %1508 = vmatpush1.msra.mxu0 0.0
      %1509 = vmatprep.subr.mxu0 0.0
      %1510 = vmatpush1.msra.mxu0 0.0
      %1511 = vmatprep.subr.mxu0 0.0
      %1512 = vmatpush1.msra.mxu0 0.0
      %1513 = vmatprep.subr.mxu0 0.0
      %1514 = vmatpush1.msra.mxu0 0.0
      %1515 = vmatprep.subr.mxu0 0.0
      %1516 = vmatpush1.msra.mxu0 0.0
      %1517 = vmatprep.subr.mxu0 0.0
      %1518 = vmatpush1.msra.mxu0 0.0
      %1519 = vmatprep.subr.mxu0 0.0
      %1520 = vmatpush1.msra.mxu0 0.0
      %1521 = vmatprep.subr.mxu0 0.0
      %1522 = vmatpush1.msra.mxu0 0.0
      %1523 = vmatprep.subr.mxu0 0.0
      %1524 = vmatpush1.msra.mxu0 0.0
      %1525 = vmatprep.subr.mxu0 0.0
      %1526 = vmatpush1.msra.mxu0 0.0
      %1527 = vmatprep.subr.mxu0 0.0
      %1528 = vmatpush1.msra.mxu0 0.0
      %1529 = vmatprep.subr.mxu0 0.0
      %1530 = vmatpush1.msra.mxu0 0.0
      %1531 = vmatprep.subr.mxu0 0.0
      %1532 = vmatpush1.msra.mxu0 0.0
      %1533 = vmatprep.subr.mxu0 0.0
      %1534 = vmatpush1.msra.mxu0 0.0
      %1535 = vmatprep.subr.mxu0 0.0
      %1536 = vmatpush1.msra.mxu0 0.0
      %1537 = vmatprep.subr.mxu0 0.0
      %1538 = vmatpush1.msra.mxu0 0.0
      %1539 = vmatprep.subr.mxu0 0.0
      %1540 = vmatpush1.msra.mxu0 0.0
      %1541 = vmatprep.subr.mxu0 0.0
      %1542 = vmatpush1.msra.mxu0 0.0
      %1543 = vmatprep.subr.mxu0 0.0
      %1544 = vmatpush1.msra.mxu0 0.0
      %1545 = vmatprep.subr.mxu0 0.0
      %1546 = vmatpush1.msra.mxu0 0.0
      %1547 = vmatprep.subr.mxu0 0.0
      %1548 = vmatpush1.msra.mxu0 0.0
      %1549 = vmatprep.subr.mxu0 0.0
      %1550 = vmatpush1.msra.mxu0 0.0
      %1551 = vmatprep.subr.mxu0 0.0
      %1552 = vmatpush1.msra.mxu0 0.0
      %1553 = vmatprep.subr.mxu0 0.0
      %1554 = vmatpush1.msra.mxu0 0.0
      %1555 = vmatprep.subr.mxu0 0.0
      %1556 = vmatpush1.msra.mxu0 0.0
      %1557 = vmatprep.subr.mxu0 0.0
      %1558 = vmatpush1.msra.mxu0 0.0
      %1559 = vmatprep.subr.mxu0 0.0
      %1560 = vmatpush1.msra.mxu0 0.0
      %1561 = vmatprep.subr.mxu0 0.0
      %1562 = vmatpush1.msra.mxu0 0.0
      %1563 = vmatprep.mubr.f32.mxu0 0.0
      %1564 = vmatmul.mubr.f32.gmra.mrb[0].mxu0 %v1494
      %v1565 = vpop.f32.mrb[0].mxu0
      %v1566 = vadd.f32 %v1486, %v1565
      %v1567 = vpop.f32.mrb[0].mxu0
      %v1568 = vadd.f32 %v1486, %v1567
      %1569 = vmatprep.mubr.f32.mxu0 0.0
      %1570 = vmatmul.mubr.f32.gmra.mrb[0].mxu0 %v1497
      %v1571 = vpop.f32.mrb[0].mxu0
      %v1572 = vadd.f32 %v1491, %v1571
      %v1573 = vpop.f32.mrb[0].mxu0
      %v1574 = vadd.f32 %v1491, %v1573
      %1575 = vdwg.mxu0
      %v1576 = vmax.f32 %v1566, 0.0
      %v1577 = vmax.f32 %v1568, 0.0
      %v1578 = vmax.f32 %v1572, 0.0
      %v1579 = vmax.f32 %v1574, 0.0
      %1580 = vrot.lane.b32.xlu0 %v1576, 34
      %v1581 = vpop.permute.xlu0 %1580
      %1582 = vrot.lane.b32.xlu0 %v1578, 34
      %v1583 = vpop.permute.xlu0 %1582
      %1584 = vrot.lane.b32.xlu0 %v1577, 34
      %v1585 = vpop.permute.xlu0 %1584
      %1586 = vrot.lane.b32.xlu0 %v1579, 34
      %v1587 = vpop.permute.xlu0 %1586
      %vm1588 = vcmp.lt.s32.totalorder %v766, 34
      %v1589 = vsel %vm1588, %v1581, %v1585
      %v1590 = vsel %vm1588, %v1583, %v1587
      %v1591 = vsel %vm1588, %v1585, %v1581
      %v1592 = vsel %vm1588, %v1587, %v1583
      %v1593 = vadd.s32 %v854, 4294967294
      %v1594 = vadd.s32 %v855, 4294967294
      %vm1595 = vcmp.ge.s32.totalorder %v1593, 0
      %vm1596 = vcmp.ge.s32.totalorder %v1594, 0
      %vm1597 = vcmp.lt.s32.totalorder %v1593, 16
      %vm1598 = vcmp.lt.s32.totalorder %v1594, 16
      %vm1599 = vmand %vm1595, %vm1597
      %vm1600 = vmand %vm1596, %vm1598
      %v1601 = vadd.s32 %v858, 4294967294
      %v1602 = vadd.s32 %v859, 4294967294
      %vm1603 = vcmp.ge.s32.totalorder %v1601, 0
      %vm1604 = vcmp.ge.s32.totalorder %v1602, 0
      %vm1605 = vmand %vm1599, %vm1603
      %vm1606 = vmand %vm1600, %vm1604
      %vm1607 = vcmp.lt.s32.totalorder %v1601, 16
      %vm1608 = vcmp.lt.s32.totalorder %v1602, 16
      %vm1609 = vmand %vm1605, %vm1607
      %vm1610 = vmand %vm1606, %vm1608
      %v1611 = vsel %vm1609, 1.0, 0.0
      %v1612 = vsel %vm1610, 1.0, 0.0
      %v1613 = vmul.f32 %v1591, %v1611
      %v1614 = vmul.f32 %v1589, %v1612
      %v1615 = vmul.f32 %v1592, %v1611
      %v1616 = vmul.f32 %v1590, %v1612
      %1617 = vst [vmem:[#allocation2] sm:$0xff] %v1613
      %1618 = vst [vmem:[#allocation2 + $0x8] sm:$0xff] %v1614
      %1619 = vst [vmem:[#allocation2 + $0x10] sm:$0xff] %v1615
      %1620 = vst [vmem:[#allocation2 + $0x18] sm:$0xff] %v1616
      %1621 = vrot.lane.b32.xlu0 %v1576, 32
      %v1622 = vpop.permute.xlu0 %1621
      %1623 = vrot.lane.b32.xlu0 %v1578, 32
      %v1624 = vpop.permute.xlu0 %1623
      %1625 = vrot.lane.b32.xlu0 %v1577, 32
      %v1626 = vpop.permute.xlu0 %1625
      %1627 = vrot.lane.b32.xlu0 %v1579, 32
      %v1628 = vpop.permute.xlu0 %1627
      %vm1629 = vcmp.lt.s32.totalorder %v766, 32
      %v1630 = vsel %vm1629, %v1622, %v1626
      %v1631 = vsel %vm1629, %v1624, %v1628
      %v1632 = vsel %vm1629, %v1626, %v1622
      %v1633 = vsel %vm1629, %v1628, %v1624
      %vm1634 = vmand %vm1599, %vm1024
      %vm1635 = vmand %vm1600, %vm1025
      %vm1636 = vmand %vm1634, %vm1028
      %vm1637 = vmand %vm1635, %vm1029
      %v1638 = vsel %vm1636, 1.0, 0.0
      %v1639 = vsel %vm1637, 1.0, 0.0
      %v1640 = vmul.f32 %v1632, %v1638
      %v1641 = vmul.f32 %v1630, %v1639
      %v1642 = vmul.f32 %v1633, %v1638
      %v1643 = vmul.f32 %v1631, %v1639
      %1644 = vst [vmem:[#allocation2 + $0x20] sm:$0xff] %v1640
      %1645 = vst [vmem:[#allocation2 + $0x28] sm:$0xff] %v1641
      %1646 = vst [vmem:[#allocation2 + $0x30] sm:$0xff] %v1642
      %1647 = vst [vmem:[#allocation2 + $0x38] sm:$0xff] %v1643
      %1648 = vrot.lane.b32.xlu0 %v1576, 30
      %v1649 = vpop.permute.xlu0 %1648
      %1650 = vrot.lane.b32.xlu0 %v1578, 30
      %v1651 = vpop.permute.xlu0 %1650
      %1652 = vrot.lane.b32.xlu0 %v1577, 30
      %v1653 = vpop.permute.xlu0 %1652
      %1654 = vrot.lane.b32.xlu0 %v1579, 30
      %v1655 = vpop.permute.xlu0 %1654
      %vm1656 = vcmp.lt.s32.totalorder %v766, 30
      %v1657 = vsel %vm1656, %v1649, %v1653
      %v1658 = vsel %vm1656, %v1651, %v1655
      %v1659 = vsel %vm1656, %v1653, %v1649
      %v1660 = vsel %vm1656, %v1655, %v1651
      %v1661 = vadd.s32 %v858, 2
      %v1662 = vadd.s32 %v859, 2
      %vm1663 = vcmp.ge.s32.totalorder %v1661, 0
      %vm1664 = vcmp.ge.s32.totalorder %v1662, 0
      %vm1665 = vmand %vm1599, %vm1663
      %vm1666 = vmand %vm1600, %vm1664
      %vm1667 = vcmp.lt.s32.totalorder %v1661, 16
      %vm1668 = vcmp.lt.s32.totalorder %v1662, 16
      %vm1669 = vmand %vm1665, %vm1667
      %vm1670 = vmand %vm1666, %vm1668
      %v1671 = vsel %vm1669, 1.0, 0.0
      %v1672 = vsel %vm1670, 1.0, 0.0
      %v1673 = vmul.f32 %v1659, %v1671
      %v1674 = vmul.f32 %v1657, %v1672
      %v1675 = vmul.f32 %v1660, %v1671
      %v1676 = vmul.f32 %v1658, %v1672
      %1677 = vst [vmem:[#allocation2 + $0x40] sm:$0xff] %v1673
      %1678 = vst [vmem:[#allocation2 + $0x48] sm:$0xff] %v1674
      %1679 = vst [vmem:[#allocation2 + $0x50] sm:$0xff] %v1675
      %1680 = vst [vmem:[#allocation2 + $0x58] sm:$0xff] %v1676
      %1681 = vrot.lane.b32.xlu0 %v1576, 2
      %v1682 = vpop.permute.xlu0 %1681
      %1683 = vrot.lane.b32.xlu0 %v1578, 2
      %v1684 = vpop.permute.xlu0 %1683
      %1685 = vrot.lane.b32.xlu0 %v1577, 2
      %v1686 = vpop.permute.xlu0 %1685
      %1687 = vrot.lane.b32.xlu0 %v1579, 2
      %v1688 = vpop.permute.xlu0 %1687
      %vm1689 = vcmp.lt.s32.totalorder %v766, 2
      %v1690 = vsel %vm1689, %v1682, %v1686
      %v1691 = vsel %vm1689, %v1684, %v1688
      %v1692 = vsel %vm1689, %v1686, %v1682
      %v1693 = vsel %vm1689, %v1688, %v1684
      %vm1694 = vmand %vm1092, %vm1603
      %vm1695 = vmand %vm1093, %vm1604
      %vm1696 = vmand %vm1694, %vm1607
      %vm1697 = vmand %vm1695, %vm1608
      %v1698 = vsel %vm1696, 1.0, 0.0
      %v1699 = vsel %vm1697, 1.0, 0.0
      %v1700 = vmul.f32 %v1692, %v1698
      %v1701 = vmul.f32 %v1690, %v1699
      %v1702 = vmul.f32 %v1693, %v1698
      %v1703 = vmul.f32 %v1691, %v1699
      %1704 = vst [vmem:[#allocation2 + $0x60] sm:$0xff] %v1700
      %1705 = vst [vmem:[#allocation2 + $0x68] sm:$0xff] %v1701
      %1706 = vst [vmem:[#allocation2 + $0x70] sm:$0xff] %v1702
      %1707 = vst [vmem:[#allocation2 + $0x78] sm:$0xff] %v1703
      %v1708 = vmul.f32 %v1576, %v1112
      %v1709 = vmul.f32 %v1577, %v1113
      %v1710 = vmul.f32 %v1578, %v1112
      %v1711 = vmul.f32 %v1579, %v1113
      %1712 = vst [vmem:[#allocation2 + $0x80] sm:$0xff] %v1708
      %1713 = vst [vmem:[#allocation2 + $0x88] sm:$0xff] %v1709
      %1714 = vst [vmem:[#allocation2 + $0x90] sm:$0xff] %v1710
      %1715 = vst [vmem:[#allocation2 + $0x98] sm:$0xff] %v1711
      %1716 = vrot.lane.b32.xlu0 %v1576, 126
      %v1717 = vpop.permute.xlu0 %1716
      %1718 = vrot.lane.b32.xlu0 %v1578, 126
      %v1719 = vpop.permute.xlu0 %1718
      %1720 = vrot.lane.b32.xlu0 %v1577, 126
      %v1721 = vpop.permute.xlu0 %1720
      %1722 = vrot.lane.b32.xlu0 %v1579, 126
      %v1723 = vpop.permute.xlu0 %1722
      %vm1724 = vcmp.lt.s32.totalorder %v766, 126
      %v1725 = vsel %vm1724, %v1717, %v1721
      %v1726 = vsel %vm1724, %v1719, %v1723
      %v1727 = vsel %vm1724, %v1721, %v1717
      %v1728 = vsel %vm1724, %v1723, %v1719
      %vm1729 = vmand %vm1092, %vm1663
      %vm1730 = vmand %vm1093, %vm1664
      %vm1731 = vmand %vm1729, %vm1667
      %vm1732 = vmand %vm1730, %vm1668
      %v1733 = vsel %vm1731, 1.0, 0.0
      %v1734 = vsel %vm1732, 1.0, 0.0
      %v1735 = vmul.f32 %v1725, %v1733
      %v1736 = vmul.f32 %v1727, %v1734
      %v1737 = vmul.f32 %v1726, %v1733
      %v1738 = vmul.f32 %v1728, %v1734
      %1739 = vst [vmem:[#allocation2 + $0xa0] sm:$0xff] %v1735
      %1740 = vst [vmem:[#allocation2 + $0xa8] sm:$0xff] %v1736
      %1741 = vst [vmem:[#allocation2 + $0xb0] sm:$0xff] %v1737
      %1742 = vst [vmem:[#allocation2 + $0xb8] sm:$0xff] %v1738
      %1743 = vrot.lane.b32.xlu0 %v1576, 98
      %v1744 = vpop.permute.xlu0 %1743
      %1745 = vrot.lane.b32.xlu0 %v1578, 98
      %v1746 = vpop.permute.xlu0 %1745
      %1747 = vrot.lane.b32.xlu0 %v1577, 98
      %v1748 = vpop.permute.xlu0 %1747
      %1749 = vrot.lane.b32.xlu0 %v1579, 98
      %v1750 = vpop.permute.xlu0 %1749
      %vm1751 = vcmp.lt.s32.totalorder %v766, 98
      %v1752 = vsel %vm1751, %v1744, %v1748
      %v1753 = vsel %vm1751, %v1746, %v1750
      %v1754 = vsel %vm1751, %v1748, %v1744
      %v1755 = vsel %vm1751, %v1750, %v1746
      %v1756 = vadd.s32 %v854, 2
      %v1757 = vadd.s32 %v855, 2
      %vm1758 = vcmp.ge.s32.totalorder %v1756, 0
      %vm1759 = vcmp.ge.s32.totalorder %v1757, 0
      %vm1760 = vcmp.lt.s32.totalorder %v1756, 16
      %vm1761 = vcmp.lt.s32.totalorder %v1757, 16
      %vm1762 = vmand %vm1758, %vm1760
      %vm1763 = vmand %vm1759, %vm1761
      %vm1764 = vmand %vm1762, %vm1603
      %vm1765 = vmand %vm1763, %vm1604
      %vm1766 = vmand %vm1764, %vm1607
      %vm1767 = vmand %vm1765, %vm1608
      %v1768 = vsel %vm1766, 1.0, 0.0
      %v1769 = vsel %vm1767, 1.0, 0.0
      %v1770 = vmul.f32 %v1752, %v1768
      %v1771 = vmul.f32 %v1754, %v1769
      %v1772 = vmul.f32 %v1753, %v1768
      %v1773 = vmul.f32 %v1755, %v1769
      %1774 = vst [vmem:[#allocation2 + $0xc0] sm:$0xff] %v1770
      %1775 = vst [vmem:[#allocation2 + $0xc8] sm:$0xff] %v1771
      %1776 = vst [vmem:[#allocation2 + $0xd0] sm:$0xff] %v1772
      %1777 = vst [vmem:[#allocation2 + $0xd8] sm:$0xff] %v1773
      %1778 = vrot.lane.b32.xlu0 %v1576, 96
      %v1779 = vpop.permute.xlu0 %1778
      %1780 = vrot.lane.b32.xlu0 %v1578, 96
      %v1781 = vpop.permute.xlu0 %1780
      %1782 = vrot.lane.b32.xlu0 %v1577, 96
      %v1783 = vpop.permute.xlu0 %1782
      %1784 = vrot.lane.b32.xlu0 %v1579, 96
      %v1785 = vpop.permute.xlu0 %1784
      %vm1786 = vcmp.lt.s32.totalorder %v766, 96
      %v1787 = vsel %vm1786, %v1779, %v1783
      %v1788 = vsel %vm1786, %v1781, %v1785
      %v1789 = vsel %vm1786, %v1783, %v1779
      %v1790 = vsel %vm1786, %v1785, %v1781
      %vm1791 = vmand %vm1762, %vm1024
      %vm1792 = vmand %vm1763, %vm1025
      %vm1793 = vmand %vm1791, %vm1028
      %vm1794 = vmand %vm1792, %vm1029
      %v1795 = vsel %vm1793, 1.0, 0.0
      %v1796 = vsel %vm1794, 1.0, 0.0
      %v1797 = vmul.f32 %v1787, %v1795
      %v1798 = vmul.f32 %v1789, %v1796
      %v1799 = vmul.f32 %v1788, %v1795
      %v1800 = vmul.f32 %v1790, %v1796
      %1801 = vst [vmem:[#allocation2 + $0xe0] sm:$0xff] %v1797
      %1802 = vst [vmem:[#allocation2 + $0xe8] sm:$0xff] %v1798
      %1803 = vst [vmem:[#allocation2 + $0xf0] sm:$0xff] %v1799
      %1804 = vst [vmem:[#allocation2 + $0xf8] sm:$0xff] %v1800
      %1805 = vrot.lane.b32.xlu0 %v1576, 94
      %v1806 = vpop.permute.xlu0 %1805
      %1807 = vrot.lane.b32.xlu0 %v1578, 94
      %v1808 = vpop.permute.xlu0 %1807
      %1809 = vrot.lane.b32.xlu0 %v1577, 94
      %v1810 = vpop.permute.xlu0 %1809
      %1811 = vrot.lane.b32.xlu0 %v1579, 94
      %v1812 = vpop.permute.xlu0 %1811
      %vm1813 = vcmp.lt.s32.totalorder %v766, 94
      %v1814 = vsel %vm1813, %v1806, %v1810
      %v1815 = vsel %vm1813, %v1808, %v1812
      %v1816 = vsel %vm1813, %v1810, %v1806
      %v1817 = vsel %vm1813, %v1812, %v1808
      %vm1818 = vmand %vm1762, %vm1663
      %vm1819 = vmand %vm1763, %vm1664
      %vm1820 = vmand %vm1818, %vm1667
      %vm1821 = vmand %vm1819, %vm1668
      %v1822 = vsel %vm1820, 1.0, 0.0
      %v1823 = vsel %vm1821, 1.0, 0.0
      %v1824 = vmul.f32 %v1814, %v1822
      %v1825 = vmul.f32 %v1816, %v1823
      %v1826 = vmul.f32 %v1815, %v1822
      %v1827 = vmul.f32 %v1817, %v1823
      %1828 = vst [vmem:[#allocation2 + $0x100] sm:$0xff] %v1824
      %1829 = vst [vmem:[#allocation2 + $0x108] sm:$0xff] %v1825
      %1830 = vst [vmem:[#allocation2 + $0x110] sm:$0xff] %v1826
      %1831 = vst [vmem:[#allocation2 + $0x118] sm:$0xff] %v1827
      %v1832 = vld [vmem:[%s9] sm:$0xff]
      %v1833 = vld [vmem:[%s9 + $0x8] sm:$0xff]
      %v1834 = vld [vmem:[%s9 + $0x10] sm:$0xff]
      %v1835 = vld [vmem:[%s9 + $0x18] sm:$0xff]
      %v1836 = vld [vmem:[%s10] sm:$0xff]
      %v1837 = vld [vmem:[%s10 + $0x8] sm:$0xff]
      %v1838 = vld [vmem:[#allocation2] sm:$0xff]
      %v1839 = vld [vmem:[#allocation2 + $0x8] sm:$0xff]
      %v1840 = vld [vmem:[#allocation2 + $0x10] sm:$0xff]
      %v1841 = vld [vmem:[#allocation2 + $0x18] sm:$0xff]
      %v1842 = vld [vmem:[#allocation2 + $0x20] sm:$0xff]
      %v1843 = vld [vmem:[#allocation2 + $0x28] sm:$0xff]
      %v1844 = vld [vmem:[#allocation2 + $0x30] sm:$0xff]
      %v1845 = vld [vmem:[#allocation2 + $0x38] sm:$0xff]
      %v1846 = vld [vmem:[#allocation2 + $0x40] sm:$0xff]
      %v1847 = vld [vmem:[#allocation2 + $0x48] sm:$0xff]
      %v1848 = vld [vmem:[#allocation2 + $0x50] sm:$0xff]
      %v1849 = vld [vmem:[#allocation2 + $0x58] sm:$0xff]
      %v1850 = vld [vmem:[#allocation2 + $0x60] sm:$0xff]
      %v1851 = vld [vmem:[#allocation2 + $0x68] sm:$0xff]
      %v1852 = vld [vmem:[#allocation2 + $0x70] sm:$0xff]
      %v1853 = vld [vmem:[#allocation2 + $0x78] sm:$0xff]
      %v1854 = vld [vmem:[#allocation2 + $0x80] sm:$0xff]
      %v1855 = vld [vmem:[#allocation2 + $0x88] sm:$0xff]
      %v1856 = vld [vmem:[#allocation2 + $0x90] sm:$0xff]
      %v1857 = vld [vmem:[#allocation2 + $0x98] sm:$0xff]
      %v1858 = vld [vmem:[#allocation2 + $0xa0] sm:$0xff]
      %v1859 = vld [vmem:[#allocation2 + $0xa8] sm:$0xff]
      %v1860 = vld [vmem:[#allocation2 + $0xb0] sm:$0xff]
      %v1861 = vld [vmem:[#allocation2 + $0xb8] sm:$0xff]
      %v1862 = vld [vmem:[#allocation2 + $0xc0] sm:$0xff]
      %v1863 = vld [vmem:[#allocation2 + $0xc8] sm:$0xff]
      %v1864 = vld [vmem:[#allocation2 + $0xd0] sm:$0xff]
      %v1865 = vld [vmem:[#allocation2 + $0xd8] sm:$0xff]
      %v1866 = vld [vmem:[#allocation2 + $0xe0] sm:$0xff]
      %v1867 = vld [vmem:[#allocation2 + $0xe8] sm:$0xff]
      %v1868 = vld [vmem:[#allocation2 + $0xf0] sm:$0xff]
      %v1869 = vld [vmem:[#allocation2 + $0xf8] sm:$0xff]
      %v1870 = vld [vmem:[#allocation2 + $0x100] sm:$0xff]
      %v1871 = vld [vmem:[#allocation2 + $0x108] sm:$0xff]
      %v1872 = vld [vmem:[#allocation2 + $0x110] sm:$0xff]
      %v1873 = vld [vmem:[#allocation2 + $0x118] sm:$0xff]
      %1875 = vset.pattern.permute.xlu0 0
      %1876 = vperm.xlu0 %1875, %v1836
      %v1877 = vpop.permute.xlu0 %1876
      %1880 = vset.pattern.permute.xlu0 0
      %1881 = vperm.xlu0 %1880, %v1837
      %v1882 = vpop.permute.xlu0 %1881
      %v1885 = vsel %vm1290, %v1833, 0
      %v1888 = vsel %vm1290, %v1835, 0
      %1890 = vmatprep.subr.mxu0 %v1839
      %1891 = vmatpush1.msra.mxu0 %v1838
      %1892 = vmatprep.subr.mxu0 %v1841
      %1893 = vmatpush1.msra.mxu0 %v1840
      %1894 = vmatprep.subr.mxu0 %v1843
      %1895 = vmatpush1.msra.mxu0 %v1842
      %1896 = vmatprep.subr.mxu0 %v1845
      %1897 = vmatpush1.msra.mxu0 %v1844
      %1898 = vmatprep.subr.mxu0 %v1847
      %1899 = vmatpush1.msra.mxu0 %v1846
      %1900 = vmatprep.subr.mxu0 %v1849
      %1901 = vmatpush1.msra.mxu0 %v1848
      %1902 = vmatprep.subr.mxu0 %v1851
      %1903 = vmatpush1.msra.mxu0 %v1850
      %1904 = vmatprep.subr.mxu0 %v1853
      %1905 = vmatpush1.msra.mxu0 %v1852
      %1906 = vmatprep.subr.mxu0 %v1855
      %1907 = vmatpush1.msra.mxu0 %v1854
      %1908 = vmatprep.subr.mxu0 %v1857
      %1909 = vmatpush1.msra.mxu0 %v1856
      %1910 = vmatprep.subr.mxu0 %v1859
      %1911 = vmatpush1.msra.mxu0 %v1858
      %1912 = vmatprep.subr.mxu0 %v1861
      %1913 = vmatpush1.msra.mxu0 %v1860
      %1914 = vmatprep.subr.mxu0 %v1863
      %1915 = vmatpush1.msra.mxu0 %v1862
      %1916 = vmatprep.subr.mxu0 %v1865
      %1917 = vmatpush1.msra.mxu0 %v1864
      %1918 = vmatprep.subr.mxu0 %v1867
      %1919 = vmatpush1.msra.mxu0 %v1866
      %1920 = vmatprep.subr.mxu0 %v1869
      %1921 = vmatpush1.msra.mxu0 %v1868
      %1922 = vmatprep.subr.mxu0 %v1871
      %1923 = vmatpush1.msra.mxu0 %v1870
      %1924 = vmatprep.subr.mxu0 %v1873
      %1925 = vmatpush1.msra.mxu0 %v1872
      %1926 = vmatprep.subr.mxu0 0.0
      %1927 = vmatpush1.msra.mxu0 0.0
      %1928 = vmatprep.subr.mxu0 0.0
      %1929 = vmatpush1.msra.mxu0 0.0
      %1930 = vmatprep.subr.mxu0 0.0
      %1931 = vmatpush1.msra.mxu0 0.0
      %1932 = vmatprep.subr.mxu0 0.0
      %1933 = vmatpush1.msra.mxu0 0.0
      %1934 = vmatprep.subr.mxu0 0.0
      %1935 = vmatpush1.msra.mxu0 0.0
      %1936 = vmatprep.subr.mxu0 0.0
      %1937 = vmatpush1.msra.mxu0 0.0
      %1938 = vmatprep.subr.mxu0 0.0
      %1939 = vmatpush1.msra.mxu0 0.0
      %1940 = vmatprep.subr.mxu0 0.0
      %1941 = vmatpush1.msra.mxu0 0.0
      %1942 = vmatprep.subr.mxu0 0.0
      %1943 = vmatpush1.msra.mxu0 0.0
      %1944 = vmatprep.subr.mxu0 0.0
      %1945 = vmatpush1.msra.mxu0 0.0
      %1946 = vmatprep.subr.mxu0 0.0
      %1947 = vmatpush1.msra.mxu0 0.0
      %1948 = vmatprep.subr.mxu0 0.0
      %1949 = vmatpush1.msra.mxu0 0.0
      %1950 = vmatprep.subr.mxu0 0.0
      %1951 = vmatpush1.msra.mxu0 0.0
      %1952 = vmatprep.subr.mxu0 0.0
      %1953 = vmatpush1.msra.mxu0 0.0
      %1954 = vmatprep.mubr.f32.mxu0 %v1885
      %1955 = vmatmul.mubr.f32.gmra.mrb[0].mxu0 %v1832
      %v1956 = vpop.f32.mrb[0].mxu0
      %v1957 = vadd.f32 %v1877, %v1956
      %v1958 = vpop.f32.mrb[0].mxu0
      %v1959 = vadd.f32 %v1877, %v1958
      %1960 = vmatprep.mubr.f32.mxu0 %v1888
      %1961 = vmatmul.mubr.f32.gmra.mrb[0].mxu0 %v1834
      %v1962 = vpop.f32.mrb[0].mxu0
      %v1963 = vadd.f32 %v1882, %v1962
      %v1964 = vpop.f32.mrb[0].mxu0
      %v1965 = vadd.f32 %v1882, %v1964
      %1966 = vdwg.mxu0
      %v1967 = vmax.f32 %v1957, 0.0
      %v1968 = vmax.f32 %v1959, 0.0
      %v1969 = vmax.f32 %v1963, 0.0
      %v1970 = vmax.f32 %v1965, 0.0
      %v1971 = vld [vmem:[%s11] sm:$0xff]
      %v1972 = vld [vmem:[%s11 + $0x8] sm:$0xff]
      %v1973 = vld [vmem:[%s12] sm:$0xff]
      %v1974 = vld [vmem:[%s12 + $0x8] sm:$0xff]
      %1976 = vset.pattern.permute.xlu0 0
      %1977 = vperm.xlu0 %1976, %v1973
      %v1978 = vpop.permute.xlu0 %1977
      %1981 = vset.pattern.permute.xlu0 0
      %1982 = vperm.xlu0 %1981, %v1974
      %v1983 = vpop.permute.xlu0 %1982
      %v1986 = vsel %vm1290, %v1971, 0
      %v1989 = vsel %vm1290, %v1972, 0
      %1991 = vmatprep.subr.mxu0 %v1968
      %1992 = vmatpush1.msra.mxu0 %v1967
      %1993 = vmatprep.subr.mxu0 %v1970
      %1994 = vmatpush1.msra.mxu0 %v1969
      %1995 = vmatprep.subr.mxu0 0.0
      %1996 = vmatpush1.msra.mxu0 0.0
      %1997 = vmatprep.subr.mxu0 0.0
      %1998 = vmatpush1.msra.mxu0 0.0
      %1999 = vmatprep.subr.mxu0 0.0
      %2000 = vmatpush1.msra.mxu0 0.0
      %2001 = vmatprep.subr.mxu0 0.0
      %2002 = vmatpush1.msra.mxu0 0.0
      %2003 = vmatprep.subr.mxu0 0.0
      %2004 = vmatpush1.msra.mxu0 0.0
      %2005 = vmatprep.subr.mxu0 0.0
      %2006 = vmatpush1.msra.mxu0 0.0
      %2007 = vmatprep.subr.mxu0 0.0
      %2008 = vmatpush1.msra.mxu0 0.0
      %2009 = vmatprep.subr.mxu0 0.0
      %2010 = vmatpush1.msra.mxu0 0.0
      %2011 = vmatprep.subr.mxu0 0.0
      %2012 = vmatpush1.msra.mxu0 0.0
      %2013 = vmatprep.subr.mxu0 0.0
      %2014 = vmatpush1.msra.mxu0 0.0
      %2015 = vmatprep.subr.mxu0 0.0
      %2016 = vmatpush1.msra.mxu0 0.0
      %2017 = vmatprep.subr.mxu0 0.0
      %2018 = vmatpush1.msra.mxu0 0.0
      %2019 = vmatprep.subr.mxu0 0.0
      %2020 = vmatpush1.msra.mxu0 0.0
      %2021 = vmatprep.subr.mxu0 0.0
      %2022 = vmatpush1.msra.mxu0 0.0
      %2023 = vmatprep.subr.mxu0 0.0
      %2024 = vmatpush1.msra.mxu0 0.0
      %2025 = vmatprep.subr.mxu0 0.0
      %2026 = vmatpush1.msra.mxu0 0.0
      %2027 = vmatprep.subr.mxu0 0.0
      %2028 = vmatpush1.msra.mxu0 0.0
      %2029 = vmatprep.subr.mxu0 0.0
      %2030 = vmatpush1.msra.mxu0 0.0
      %2031 = vmatprep.subr.mxu0 0.0
      %2032 = vmatpush1.msra.mxu0 0.0
      %2033 = vmatprep.subr.mxu0 0.0
      %2034 = vmatpush1.msra.mxu0 0.0
      %2035 = vmatprep.subr.mxu0 0.0
      %2036 = vmatpush1.msra.mxu0 0.0
      %2037 = vmatprep.subr.mxu0 0.0
      %2038 = vmatpush1.msra.mxu0 0.0
      %2039 = vmatprep.subr.mxu0 0.0
      %2040 = vmatpush1.msra.mxu0 0.0
      %2041 = vmatprep.subr.mxu0 0.0
      %2042 = vmatpush1.msra.mxu0 0.0
      %2043 = vmatprep.subr.mxu0 0.0
      %2044 = vmatpush1.msra.mxu0 0.0
      %2045 = vmatprep.subr.mxu0 0.0
      %2046 = vmatpush1.msra.mxu0 0.0
      %2047 = vmatprep.subr.mxu0 0.0
      %2048 = vmatpush1.msra.mxu0 0.0
      %2049 = vmatprep.subr.mxu0 0.0
      %2050 = vmatpush1.msra.mxu0 0.0
      %2051 = vmatprep.subr.mxu0 0.0
      %2052 = vmatpush1.msra.mxu0 0.0
      %2053 = vmatprep.subr.mxu0 0.0
      %2054 = vmatpush1.msra.mxu0 0.0
      %2055 = vmatprep.mubr.f32.mxu0 0.0
      %2056 = vmatmul.mubr.f32.gmra.mrb[0].mxu0 %v1986
      %v2057 = vpop.f32.mrb[0].mxu0
      %v2058 = vadd.f32 %v1978, %v2057
      %v2059 = vpop.f32.mrb[0].mxu0
      %v2060 = vadd.f32 %v1978, %v2059
      %2061 = vmatprep.mubr.f32.mxu0 0.0
      %2062 = vmatmul.mubr.f32.gmra.mrb[0].mxu0 %v1989
      %v2063 = vpop.f32.mrb[0].mxu0
      %v2064 = vadd.f32 %v1983, %v2063
      %v2065 = vpop.f32.mrb[0].mxu0
      %v2066 = vadd.f32 %v1983, %v2065
      %2067 = vdwg.mxu0
      %v2068 = vadd.f32 %v1576, %v2058
      %v2069 = vadd.f32 %v1577, %v2060
      %v2070 = vadd.f32 %v1578, %v2064
      %v2071 = vadd.f32 %v1579, %v2066
      %2072 = vrot.lane.b32.xlu0 %v2068, 34
      %v2073 = vpop.permute.xlu0 %2072
      %2074 = vrot.lane.b32.xlu0 %v2070, 34
      %v2075 = vpop.permute.xlu0 %2074
      %2076 = vrot.lane.b32.xlu0 %v2069, 34
      %v2077 = vpop.permute.xlu0 %2076
      %2078 = vrot.lane.b32.xlu0 %v2071, 34
      %v2079 = vpop.permute.xlu0 %2078
      %v2080 = vsel %vm1588, %v2073, %v2077
      %v2081 = vsel %vm1588, %v2075, %v2079
      %v2082 = vsel %vm1588, %v2077, %v2073
      %v2083 = vsel %vm1588, %v2079, %v2075
      %v2084 = vmul.f32 %v2082, %v1611
      %v2085 = vmul.f32 %v2080, %v1612
      %v2086 = vmul.f32 %v2083, %v1611
      %v2087 = vmul.f32 %v2081, %v1612
      %2088 = vst [vmem:[#allocation2] sm:$0xff] %v2084
      %2089 = vst [vmem:[#allocation2 + $0x8] sm:$0xff] %v2085
      %2090 = vst [vmem:[#allocation2 + $0x10] sm:$0xff] %v2086
      %2091 = vst [vmem:[#allocation2 + $0x18] sm:$0xff] %v2087
      %2092 = vrot.lane.b32.xlu0 %v2068, 32
      %v2093 = vpop.permute.xlu0 %2092
      %2094 = vrot.lane.b32.xlu0 %v2070, 32
      %v2095 = vpop.permute.xlu0 %2094
      %2096 = vrot.lane.b32.xlu0 %v2069, 32
      %v2097 = vpop.permute.xlu0 %2096
      %2098 = vrot.lane.b32.xlu0 %v2071, 32
      %v2099 = vpop.permute.xlu0 %2098
      %v2100 = vsel %vm1629, %v2093, %v2097
      %v2101 = vsel %vm1629, %v2095, %v2099
      %v2102 = vsel %vm1629, %v2097, %v2093
      %v2103 = vsel %vm1629, %v2099, %v2095
      %v2104 = vmul.f32 %v2102, %v1638
      %v2105 = vmul.f32 %v2100, %v1639
      %v2106 = vmul.f32 %v2103, %v1638
      %v2107 = vmul.f32 %v2101, %v1639
      %2108 = vst [vmem:[#allocation2 + $0x20] sm:$0xff] %v2104
      %2109 = vst [vmem:[#allocation2 + $0x28] sm:$0xff] %v2105
      %2110 = vst [vmem:[#allocation2 + $0x30] sm:$0xff] %v2106
      %2111 = vst [vmem:[#allocation2 + $0x38] sm:$0xff] %v2107
      %2112 = vrot.lane.b32.xlu0 %v2068, 30
      %v2113 = vpop.permute.xlu0 %2112
      %2114 = vrot.lane.b32.xlu0 %v2070, 30
      %v2115 = vpop.permute.xlu0 %2114
      %2116 = vrot.lane.b32.xlu0 %v2069, 30
      %v2117 = vpop.permute.xlu0 %2116
      %2118 = vrot.lane.b32.xlu0 %v2071, 30
      %v2119 = vpop.permute.xlu0 %2118
      %v2120 = vsel %vm1656, %v2113, %v2117
      %v2121 = vsel %vm1656, %v2115, %v2119
      %v2122 = vsel %vm1656, %v2117, %v2113
      %v2123 = vsel %vm1656, %v2119, %v2115
      %v2124 = vmul.f32 %v2122, %v1671
      %v2125 = vmul.f32 %v2120, %v1672
      %v2126 = vmul.f32 %v2123, %v1671
      %v2127 = vmul.f32 %v2121, %v1672
      %2128 = vst [vmem:[#allocation2 + $0x40] sm:$0xff] %v2124
      %2129 = vst [vmem:[#allocation2 + $0x48] sm:$0xff] %v2125
      %2130 = vst [vmem:[#allocation2 + $0x50] sm:$0xff] %v2126
      %2131 = vst [vmem:[#allocation2 + $0x58] sm:$0xff] %v2127
      %2132 = vrot.lane.b32.xlu0 %v2068, 2
      %v2133 = vpop.permute.xlu0 %2132
      %2134 = vrot.lane.b32.xlu0 %v2070, 2
      %v2135 = vpop.permute.xlu0 %2134
      %2136 = vrot.lane.b32.xlu0 %v2069, 2
      %v2137 = vpop.permute.xlu0 %2136
      %2138 = vrot.lane.b32.xlu0 %v2071, 2
      %v2139 = vpop.permute.xlu0 %2138
      %v2140 = vsel %vm1689, %v2133, %v2137
      %v2141 = vsel %vm1689, %v2135, %v2139
      %v2142 = vsel %vm1689, %v2137, %v2133
      %v2143 = vsel %vm1689, %v2139, %v2135
      %v2144 = vmul.f32 %v2142, %v1698
      %v2145 = vmul.f32 %v2140, %v1699
      %v2146 = vmul.f32 %v2143, %v1698
      %v2147 = vmul.f32 %v2141, %v1699
      %2148 = vst [vmem:[#allocation2 + $0x60] sm:$0xff] %v2144
      %2149 = vst [vmem:[#allocation2 + $0x68] sm:$0xff] %v2145
      %2150 = vst [vmem:[#allocation2 + $0x70] sm:$0xff] %v2146
      %2151 = vst [vmem:[#allocation2 + $0x78] sm:$0xff] %v2147
      %v2152 = vmul.f32 %v2068, %v1112
      %v2153 = vmul.f32 %v2069, %v1113
      %v2154 = vmul.f32 %v2070, %v1112
      %v2155 = vmul.f32 %v2071, %v1113
      %2156 = vst [vmem:[#allocation2 + $0x80] sm:$0xff] %v2152
      %2157 = vst [vmem:[#allocation2 + $0x88] sm:$0xff] %v2153
      %2158 = vst [vmem:[#allocation2 + $0x90] sm:$0xff] %v2154
      %2159 = vst [vmem:[#allocation2 + $0x98] sm:$0xff] %v2155
      %2160 = vrot.lane.b32.xlu0 %v2068, 126
      %v2161 = vpop.permute.xlu0 %2160
      %2162 = vrot.lane.b32.xlu0 %v2070, 126
      %v2163 = vpop.permute.xlu0 %2162
      %2164 = vrot.lane.b32.xlu0 %v2069, 126
      %v2165 = vpop.permute.xlu0 %2164
      %2166 = vrot.lane.b32.xlu0 %v2071, 126
      %v2167 = vpop.permute.xlu0 %2166
      %v2168 = vsel %vm1724, %v2161, %v2165
      %v2169 = vsel %vm1724, %v2163, %v2167
      %v2170 = vsel %vm1724, %v2165, %v2161
      %v2171 = vsel %vm1724, %v2167, %v2163
      %v2172 = vmul.f32 %v2168, %v1733
      %v2173 = vmul.f32 %v2170, %v1734
      %v2174 = vmul.f32 %v2169, %v1733
      %v2175 = vmul.f32 %v2171, %v1734
      %2176 = vst [vmem:[#allocation2 + $0xa0] sm:$0xff] %v2172
      %2177 = vst [vmem:[#allocation2 + $0xa8] sm:$0xff] %v2173
      %2178 = vst [vmem:[#allocation2 + $0xb0] sm:$0xff] %v2174
      %2179 = vst [vmem:[#allocation2 + $0xb8] sm:$0xff] %v2175
      %2180 = vrot.lane.b32.xlu0 %v2068, 98
      %v2181 = vpop.permute.xlu0 %2180
      %2182 = vrot.lane.b32.xlu0 %v2070, 98
      %v2183 = vpop.permute.xlu0 %2182
      %2184 = vrot.lane.b32.xlu0 %v2069, 98
      %v2185 = vpop.permute.xlu0 %2184
      %2186 = vrot.lane.b32.xlu0 %v2071, 98
      %v2187 = vpop.permute.xlu0 %2186
      %v2188 = vsel %vm1751, %v2181, %v2185
      %v2189 = vsel %vm1751, %v2183, %v2187
      %v2190 = vsel %vm1751, %v2185, %v2181
      %v2191 = vsel %vm1751, %v2187, %v2183
      %v2192 = vmul.f32 %v2188, %v1768
      %v2193 = vmul.f32 %v2190, %v1769
      %v2194 = vmul.f32 %v2189, %v1768
      %v2195 = vmul.f32 %v2191, %v1769
      %2196 = vst [vmem:[#allocation2 + $0xc0] sm:$0xff] %v2192
      %2197 = vst [vmem:[#allocation2 + $0xc8] sm:$0xff] %v2193
      %2198 = vst [vmem:[#allocation2 + $0xd0] sm:$0xff] %v2194
      %2199 = vst [vmem:[#allocation2 + $0xd8] sm:$0xff] %v2195
      %2200 = vrot.lane.b32.xlu0 %v2068, 96
      %v2201 = vpop.permute.xlu0 %2200
      %2202 = vrot.lane.b32.xlu0 %v2070, 96
      %v2203 = vpop.permute.xlu0 %2202
      %2204 = vrot.lane.b32.xlu0 %v2069, 96
      %v2205 = vpop.permute.xlu0 %2204
      %2206 = vrot.lane.b32.xlu0 %v2071, 96
      %v2207 = vpop.permute.xlu0 %2206
      %v2208 = vsel %vm1786, %v2201, %v2205
      %v2209 = vsel %vm1786, %v2203, %v2207
      %v2210 = vsel %vm1786, %v2205, %v2201
      %v2211 = vsel %vm1786, %v2207, %v2203
      %v2212 = vmul.f32 %v2208, %v1795
      %v2213 = vmul.f32 %v2210, %v1796
      %v2214 = vmul.f32 %v2209, %v1795
      %v2215 = vmul.f32 %v2211, %v1796
      %2216 = vst [vmem:[#allocation2 + $0xe0] sm:$0xff] %v2212
      %2217 = vst [vmem:[#allocation2 + $0xe8] sm:$0xff] %v2213
      %2218 = vst [vmem:[#allocation2 + $0xf0] sm:$0xff] %v2214
      %2219 = vst [vmem:[#allocation2 + $0xf8] sm:$0xff] %v2215
      %2220 = vrot.lane.b32.xlu0 %v2068, 94
      %v2221 = vpop.permute.xlu0 %2220
      %2222 = vrot.lane.b32.xlu0 %v2070, 94
      %v2223 = vpop.permute.xlu0 %2222
      %2224 = vrot.lane.b32.xlu0 %v2069, 94
      %v2225 = vpop.permute.xlu0 %2224
      %2226 = vrot.lane.b32.xlu0 %v2071, 94
      %v2227 = vpop.permute.xlu0 %2226
      %v2228 = vsel %vm1813, %v2221, %v2225
      %v2229 = vsel %vm1813, %v2223, %v2227
      %v2230 = vsel %vm1813, %v2225, %v2221
      %v2231 = vsel %vm1813, %v2227, %v2223
      %v2232 = vmul.f32 %v2228, %v1822
      %v2233 = vmul.f32 %v2230, %v1823
      %v2234 = vmul.f32 %v2229, %v1822
      %v2235 = vmul.f32 %v2231, %v1823
      %2236 = vst [vmem:[#allocation2 + $0x100] sm:$0xff] %v2232
      %2237 = vst [vmem:[#allocation2 + $0x108] sm:$0xff] %v2233
      %2238 = vst [vmem:[#allocation2 + $0x110] sm:$0xff] %v2234
      %2239 = vst [vmem:[#allocation2 + $0x118] sm:$0xff] %v2235
      %v2240 = vld [vmem:[%s13] sm:$0xff]
      %v2241 = vld [vmem:[%s13 + $0x8] sm:$0xff]
      %v2242 = vld [vmem:[%s13 + $0x10] sm:$0xff]
      %v2243 = vld [vmem:[%s13 + $0x18] sm:$0xff]
      %v2244 = vld [vmem:[%s14] sm:$0xff]
      %v2245 = vld [vmem:[%s14 + $0x8] sm:$0xff]
      %v2246 = vld [vmem:[#allocation2] sm:$0xff]
      %v2247 = vld [vmem:[#allocation2 + $0x8] sm:$0xff]
      %v2248 = vld [vmem:[#allocation2 + $0x10] sm:$0xff]
      %v2249 = vld [vmem:[#allocation2 + $0x18] sm:$0xff]
      %v2250 = vld [vmem:[#allocation2 + $0x20] sm:$0xff]
      %v2251 = vld [vmem:[#allocation2 + $0x28] sm:$0xff]
      %v2252 = vld [vmem:[#allocation2 + $0x30] sm:$0xff]
      %v2253 = vld [vmem:[#allocation2 + $0x38] sm:$0xff]
      %v2254 = vld [vmem:[#allocation2 + $0x40] sm:$0xff]
      %v2255 = vld [vmem:[#allocation2 + $0x48] sm:$0xff]
      %v2256 = vld [vmem:[#allocation2 + $0x50] sm:$0xff]
      %v2257 = vld [vmem:[#allocation2 + $0x58] sm:$0xff]
      %v2258 = vld [vmem:[#allocation2 + $0x60] sm:$0xff]
      %v2259 = vld [vmem:[#allocation2 + $0x68] sm:$0xff]
      %v2260 = vld [vmem:[#allocation2 + $0x70] sm:$0xff]
      %v2261 = vld [vmem:[#allocation2 + $0x78] sm:$0xff]
      %v2262 = vld [vmem:[#allocation2 + $0x80] sm:$0xff]
      %v2263 = vld [vmem:[#allocation2 + $0x88] sm:$0xff]
      %v2264 = vld [vmem:[#allocation2 + $0x90] sm:$0xff]
      %v2265 = vld [vmem:[#allocation2 + $0x98] sm:$0xff]
      %v2266 = vld [vmem:[#allocation2 + $0xa0] sm:$0xff]
      %v2267 = vld [vmem:[#allocation2 + $0xa8] sm:$0xff]
      %v2268 = vld [vmem:[#allocation2 + $0xb0] sm:$0xff]
      %v2269 = vld [vmem:[#allocation2 + $0xb8] sm:$0xff]
      %v2270 = vld [vmem:[#allocation2 + $0xc0] sm:$0xff]
      %v2271 = vld [vmem:[#allocation2 + $0xc8] sm:$0xff]
      %v2272 = vld [vmem:[#allocation2 + $0xd0] sm:$0xff]
      %v2273 = vld [vmem:[#allocation2 + $0xd8] sm:$0xff]
      %v2274 = vld [vmem:[#allocation2 + $0xe0] sm:$0xff]
      %v2275 = vld [vmem:[#allocation2 + $0xe8] sm:$0xff]
      %v2276 = vld [vmem:[#allocation2 + $0xf0] sm:$0xff]
      %v2277 = vld [vmem:[#allocation2 + $0xf8] sm:$0xff]
      %v2278 = vld [vmem:[#allocation2 + $0x100] sm:$0xff]
      %v2279 = vld [vmem:[#allocation2 + $0x108] sm:$0xff]
      %v2280 = vld [vmem:[#allocation2 + $0x110] sm:$0xff]
      %v2281 = vld [vmem:[#allocation2 + $0x118] sm:$0xff]
      %2283 = vset.pattern.permute.xlu0 0
      %2284 = vperm.xlu0 %2283, %v2244
      %v2285 = vpop.permute.xlu0 %2284
      %2288 = vset.pattern.permute.xlu0 0
      %2289 = vperm.xlu0 %2288, %v2245
      %v2290 = vpop.permute.xlu0 %2289
      %v2293 = vsel %vm1290, %v2241, 0
      %v2296 = vsel %vm1290, %v2243, 0
      %2298 = vmatprep.subr.mxu0 %v2247
      %2299 = vmatpush1.msra.mxu0 %v2246
      %2300 = vmatprep.subr.mxu0 %v2249
      %2301 = vmatpush1.msra.mxu0 %v2248
      %2302 = vmatprep.subr.mxu0 %v2251
      %2303 = vmatpush1.msra.mxu0 %v2250
      %2304 = vmatprep.subr.mxu0 %v2253
      %2305 = vmatpush1.msra.mxu0 %v2252
      %2306 = vmatprep.subr.mxu0 %v2255
      %2307 = vmatpush1.msra.mxu0 %v2254
      %2308 = vmatprep.subr.mxu0 %v2257
      %2309 = vmatpush1.msra.mxu0 %v2256
      %2310 = vmatprep.subr.mxu0 %v2259
      %2311 = vmatpush1.msra.mxu0 %v2258
      %2312 = vmatprep.subr.mxu0 %v2261
      %2313 = vmatpush1.msra.mxu0 %v2260
      %2314 = vmatprep.subr.mxu0 %v2263
      %2315 = vmatpush1.msra.mxu0 %v2262
      %2316 = vmatprep.subr.mxu0 %v2265
      %2317 = vmatpush1.msra.mxu0 %v2264
      %2318 = vmatprep.subr.mxu0 %v2267
      %2319 = vmatpush1.msra.mxu0 %v2266
      %2320 = vmatprep.subr.mxu0 %v2269
      %2321 = vmatpush1.msra.mxu0 %v2268
      %2322 = vmatprep.subr.mxu0 %v2271
      %2323 = vmatpush1.msra.mxu0 %v2270
      %2324 = vmatprep.subr.mxu0 %v2273
      %2325 = vmatpush1.msra.mxu0 %v2272
      %2326 = vmatprep.subr.mxu0 %v2275
      %2327 = vmatpush1.msra.mxu0 %v2274
      %2328 = vmatprep.subr.mxu0 %v2277
      %2329 = vmatpush1.msra.mxu0 %v2276
      %2330 = vmatprep.subr.mxu0 %v2279
      %2331 = vmatpush1.msra.mxu0 %v2278
      %2332 = vmatprep.subr.mxu0 %v2281
      %2333 = vmatpush1.msra.mxu0 %v2280
      %2334 = vmatprep.subr.mxu0 0.0
      %2335 = vmatpush1.msra.mxu0 0.0
      %2336 = vmatprep.subr.mxu0 0.0
      %2337 = vmatpush1.msra.mxu0 0.0
      %2338 = vmatprep.subr.mxu0 0.0
      %2339 = vmatpush1.msra.mxu0 0.0
      %2340 = vmatprep.subr.mxu0 0.0
      %2341 = vmatpush1.msra.mxu0 0.0
      %2342 = vmatprep.subr.mxu0 0.0
      %2343 = vmatpush1.msra.mxu0 0.0
      %2344 = vmatprep.subr.mxu0 0.0
      %2345 = vmatpush1.msra.mxu0 0.0
      %2346 = vmatprep.subr.mxu0 0.0
      %2347 = vmatpush1.msra.mxu0 0.0
      %2348 = vmatprep.subr.mxu0 0.0
      %2349 = vmatpush1.msra.mxu0 0.0
      %2350 = vmatprep.subr.mxu0 0.0
      %2351 = vmatpush1.msra.mxu0 0.0
      %2352 = vmatprep.subr.mxu0 0.0
      %2353 = vmatpush1.msra.mxu0 0.0
      %2354 = vmatprep.subr.mxu0 0.0
      %2355 = vmatpush1.msra.mxu0 0.0
      %2356 = vmatprep.subr.mxu0 0.0
      %2357 = vmatpush1.msra.mxu0 0.0
      %2358 = vmatprep.subr.mxu0 0.0
      %2359 = vmatpush1.msra.mxu0 0.0
      %2360 = vmatprep.subr.mxu0 0.0
      %2361 = vmatpush1.msra.mxu0 0.0
      %2362 = vmatprep.mubr.f32.mxu0 %v2293
      %2363 = vmatmul.mubr.f32.gmra.mrb[0].mxu0 %v2240
      %v2364 = vpop.f32.mrb[0].mxu0
      %v2365 = vadd.f32 %v2285, %v2364
      %v2366 = vpop.f32.mrb[0].mxu0
      %v2367 = vadd.f32 %v2285, %v2366
      %2368 = vmatprep.mubr.f32.mxu0 %v2296
      %2369 = vmatmul.mubr.f32.gmra.mrb[0].mxu0 %v2242
      %v2370 = vpop.f32.mrb[0].mxu0
      %v2371 = vadd.f32 %v2290, %v2370
      %v2372 = vpop.f32.mrb[0].mxu0
      %v2373 = vadd.f32 %v2290, %v2372
      %2374 = vdwg.mxu0
      %v2375 = vmax.f32 %v2365, 0.0
      %v2376 = vmax.f32 %v2367, 0.0
      %v2377 = vmax.f32 %v2371, 0.0
      %v2378 = vmax.f32 %v2373, 0.0
      %v2379 = vld [vmem:[%s15] sm:$0xff]
      %v2380 = vld [vmem:[%s15 + $0x8] sm:$0xff]
      %v2381 = vld [vmem:[%s16] sm:$0xff]
      %v2382 = vld [vmem:[%s16 + $0x8] sm:$0xff]
      %2384 = vset.pattern.permute.xlu0 0
      %2385 = vperm.xlu0 %2384, %v2381
      %v2386 = vpop.permute.xlu0 %2385
      %2389 = vset.pattern.permute.xlu0 0
      %2390 = vperm.xlu0 %2389, %v2382
      %v2391 = vpop.permute.xlu0 %2390
      %v2394 = vsel %vm1290, %v2379, 0
      %v2397 = vsel %vm1290, %v2380, 0
      %2399 = vmatprep.subr.mxu0 %v2376
      %2400 = vmatpush1.msra.mxu0 %v2375
      %2401 = vmatprep.subr.mxu0 %v2378
      %2402 = vmatpush1.msra.mxu0 %v2377
      %2403 = vmatprep.subr.mxu0 0.0
      %2404 = vmatpush1.msra.mxu0 0.0
      %2405 = vmatprep.subr.mxu0 0.0
      %2406 = vmatpush1.msra.mxu0 0.0
      %2407 = vmatprep.subr.mxu0 0.0
      %2408 = vmatpush1.msra.mxu0 0.0
      %2409 = vmatprep.subr.mxu0 0.0
      %2410 = vmatpush1.msra.mxu0 0.0
      %2411 = vmatprep.subr.mxu0 0.0
      %2412 = vmatpush1.msra.mxu0 0.0
      %2413 = vmatprep.subr.mxu0 0.0
      %2414 = vmatpush1.msra.mxu0 0.0
      %2415 = vmatprep.subr.mxu0 0.0
      %2416 = vmatpush1.msra.mxu0 0.0
      %2417 = vmatprep.subr.mxu0 0.0
      %2418 = vmatpush1.msra.mxu0 0.0
      %2419 = vmatprep.subr.mxu0 0.0
      %2420 = vmatpush1.msra.mxu0 0.0
      %2421 = vmatprep.subr.mxu0 0.0
      %2422 = vmatpush1.msra.mxu0 0.0
      %2423 = vmatprep.subr.mxu0 0.0
      %2424 = vmatpush1.msra.mxu0 0.0
      %2425 = vmatprep.subr.mxu0 0.0
      %2426 = vmatpush1.msra.mxu0 0.0
      %2427 = vmatprep.subr.mxu0 0.0
      %2428 = vmatpush1.msra.mxu0 0.0
      %2429 = vmatprep.subr.mxu0 0.0
      %2430 = vmatpush1.msra.mxu0 0.0
      %2431 = vmatprep.subr.mxu0 0.0
      %2432 = vmatpush1.msra.mxu0 0.0
      %2433 = vmatprep.subr.mxu0 0.0
      %2434 = vmatpush1.msra.mxu0 0.0
      %2435 = vmatprep.subr.mxu0 0.0
      %2436 = vmatpush1.msra.mxu0 0.0
      %2437 = vmatprep.subr.mxu0 0.0
      %2438 = vmatpush1.msra.mxu0 0.0
      %2439 = vmatprep.subr.mxu0 0.0
      %2440 = vmatpush1.msra.mxu0 0.0
      %2441 = vmatprep.subr.mxu0 0.0
      %2442 = vmatpush1.msra.mxu0 0.0
      %2443 = vmatprep.subr.mxu0 0.0
      %2444 = vmatpush1.msra.mxu0 0.0
      %2445 = vmatprep.subr.mxu0 0.0
      %2446 = vmatpush1.msra.mxu0 0.0
      %2447 = vmatprep.subr.mxu0 0.0
      %2448 = vmatpush1.msra.mxu0 0.0
      %2449 = vmatprep.subr.mxu0 0.0
      %2450 = vmatpush1.msra.mxu0 0.0
      %2451 = vmatprep.subr.mxu0 0.0
      %2452 = vmatpush1.msra.mxu0 0.0
      %2453 = vmatprep.subr.mxu0 0.0
      %2454 = vmatpush1.msra.mxu0 0.0
      %2455 = vmatprep.subr.mxu0 0.0
      %2456 = vmatpush1.msra.mxu0 0.0
      %2457 = vmatprep.subr.mxu0 0.0
      %2458 = vmatpush1.msra.mxu0 0.0
      %2459 = vmatprep.subr.mxu0 0.0
      %2460 = vmatpush1.msra.mxu0 0.0
      %2461 = vmatprep.subr.mxu0 0.0
      %2462 = vmatpush1.msra.mxu0 0.0
      %2463 = vmatprep.mubr.f32.mxu0 0.0
      %2464 = vmatmul.mubr.f32.gmra.mrb[0].mxu0 %v2394
      %v2465 = vpop.f32.mrb[0].mxu0
      %v2466 = vadd.f32 %v2386, %v2465
      %v2467 = vpop.f32.mrb[0].mxu0
      %v2468 = vadd.f32 %v2386, %v2467
      %2469 = vmatprep.mubr.f32.mxu0 0.0
      %2470 = vmatmul.mubr.f32.gmra.mrb[0].mxu0 %v2397
      %v2471 = vpop.f32.mrb[0].mxu0
      %v2472 = vadd.f32 %v2391, %v2471
      %v2473 = vpop.f32.mrb[0].mxu0
      %v2474 = vadd.f32 %v2391, %v2473
      %2475 = vdwg.mxu0
      %v2476 = vadd.f32 %v2068, %v2466
      %v2477 = vadd.f32 %v2069, %v2468
      %v2478 = vadd.f32 %v2070, %v2472
      %v2479 = vadd.f32 %v2071, %v2474
      %v2480 = vld [vmem:[%s17] sm:$0xff]
      %v2481 = vld [vmem:[%s17 + $0x8] sm:$0xff]
      %v2482 = vld [vmem:[%s18] sm:$0xff]
      %v2483 = vld [vmem:[%s18 + $0x8] sm:$0xff]
      %2485 = vset.pattern.permute.xlu0 0
      %2486 = vperm.xlu0 %2485, %v2482
      %v2487 = vpop.permute.xlu0 %2486
      %2490 = vset.pattern.permute.xlu0 0
      %2491 = vperm.xlu0 %2490, %v2483
      %v2492 = vpop.permute.xlu0 %2491
      %v2495 = vsel %vm1290, %v2480, 0
      %v2498 = vsel %vm1290, %v2481, 0
      %2500 = vmatprep.subr.mxu0 %v2477
      %2501 = vmatpush1.msra.mxu0 %v2476
      %2502 = vmatprep.subr.mxu0 %v2479
      %2503 = vmatpush1.msra.mxu0 %v2478
      %2504 = vmatprep.subr.mxu0 0.0
      %2505 = vmatpush1.msra.mxu0 0.0
      %2506 = vmatprep.subr.mxu0 0.0
      %2507 = vmatpush1.msra.mxu0 0.0
      %2508 = vmatprep.subr.mxu0 0.0
      %2509 = vmatpush1.msra.mxu0 0.0
      %2510 = vmatprep.subr.mxu0 0.0
      %2511 = vmatpush1.msra.mxu0 0.0
      %2512 = vmatprep.subr.mxu0 0.0
      %2513 = vmatpush1.msra.mxu0 0.0
      %2514 = vmatprep.subr.mxu0 0.0
      %2515 = vmatpush1.msra.mxu0 0.0
      %2516 = vmatprep.subr.mxu0 0.0
      %2517 = vmatpush1.msra.mxu0 0.0
      %2518 = vmatprep.subr.mxu0 0.0
      %2519 = vmatpush1.msra.mxu0 0.0
      %2520 = vmatprep.subr.mxu0 0.0
      %2521 = vmatpush1.msra.mxu0 0.0
      %2522 = vmatprep.subr.mxu0 0.0
      %2523 = vmatpush1.msra.mxu0 0.0
      %2524 = vmatprep.subr.mxu0 0.0
      %2525 = vmatpush1.msra.mxu0 0.0
      %2526 = vmatprep.subr.mxu0 0.0
      %2527 = vmatpush1.msra.mxu0 0.0
      %2528 = vmatprep.subr.mxu0 0.0
      %2529 = vmatpush1.msra.mxu0 0.0
      %2530 = vmatprep.subr.mxu0 0.0
      %2531 = vmatpush1.msra.mxu0 0.0
      %2532 = vmatprep.subr.mxu0 0.0
      %2533 = vmatpush1.msra.mxu0 0.0
      %2534 = vmatprep.subr.mxu0 0.0
      %2535 = vmatpush1.msra.mxu0 0.0
      %2536 = vmatprep.subr.mxu0 0.0
      %2537 = vmatpush1.msra.mxu0 0.0
      %2538 = vmatprep.subr.mxu0 0.0
      %2539 = vmatpush1.msra.mxu0 0.0
      %2540 = vmatprep.subr.mxu0 0.0
      %2541 = vmatpush1.msra.mxu0 0.0
      %2542 = vmatprep.subr.mxu0 0.0
      %2543 = vmatpush1.msra.mxu0 0.0
      %2544 = vmatprep.subr.mxu0 0.0
      %2545 = vmatpush1.msra.mxu0 0.0
      %2546 = vmatprep.subr.mxu0 0.0
      %2547 = vmatpush1.msra.mxu0 0.0
      %2548 = vmatprep.subr.mxu0 0.0
      %2549 = vmatpush1.msra.mxu0 0.0
      %2550 = vmatprep.subr.mxu0 0.0
      %2551 = vmatpush1.msra.mxu0 0.0
      %2552 = vmatprep.subr.mxu0 0.0
      %2553 = vmatpush1.msra.mxu0 0.0
      %2554 = vmatprep.subr.mxu0 0.0
      %2555 = vmatpush1.msra.mxu0 0.0
      %2556 = vmatprep.subr.mxu0 0.0
      %2557 = vmatpush1.msra.mxu0 0.0
      %2558 = vmatprep.subr.mxu0 0.0
      %2559 = vmatpush1.msra.mxu0 0.0
      %2560 = vmatprep.subr.mxu0 0.0
      %2561 = vmatpush1.msra.mxu0 0.0
      %2562 = vmatprep.subr.mxu0 0.0
      %2563 = vmatpush1.msra.mxu0 0.0
      %2564 = vmatprep.mubr.f32.mxu0 0.0
      %2565 = vmatmul.mubr.f32.gmra.mrb[0].mxu0 %v2495
      %v2566 = vpop.f32.mrb[0].mxu0
      %v2567 = vadd.f32 %v2487, %v2566
      %v2568 = vpop.f32.mrb[0].mxu0
      %v2569 = vadd.f32 %v2487, %v2568
      %2570 = vmatprep.mubr.f32.mxu0 0.0
      %2571 = vmatmul.mubr.f32.gmra.mrb[0].mxu0 %v2498
      %v2572 = vpop.f32.mrb[0].mxu0
      %v2573 = vadd.f32 %v2492, %v2572
      %v2574 = vpop.f32.mrb[0].mxu0
      %v2575 = vadd.f32 %v2492, %v2574
      %2576 = vdwg.mxu0
      %v2577 = vmax.f32 %v2567, 0.0
      %v2578 = vmax.f32 %v2569, 0.0
      %v2579 = vmax.f32 %v2573, 0.0
      %v2580 = vmax.f32 %v2575, 0.0
      %v2581 = vld [vmem:[%s19] sm:$0xff]
      %v2582 = vld [vmem:[%s20] sm:$0xff]
      %2584 = vset.pattern.permute.xlu0 0
      %2585 = vperm.xlu0 %2584, %v2582
      %v2586 = vpop.permute.xlu0 %2585
      %v2589 = vsel %vm1290, %v2581, 0
      %2591 = vmatprep.subr.mxu0 %v2578
      %2592 = vmatpush1.msra.mxu0 %v2577
      %2593 = vmatprep.subr.mxu0 %v2580
      %2594 = vmatpush1.msra.mxu0 %v2579
      %2595 = vmatprep.subr.mxu0 0.0
      %2596 = vmatpush1.msra.mxu0 0.0
      %2597 = vmatprep.subr.mxu0 0.0
      %2598 = vmatpush1.msra.mxu0 0.0
      %2599 = vmatprep.subr.mxu0 0.0
      %2600 = vmatpush1.msra.mxu0 0.0
      %2601 = vmatprep.subr.mxu0 0.0
      %2602 = vmatpush1.msra.mxu0 0.0
      %2603 = vmatprep.subr.mxu0 0.0
      %2604 = vmatpush1.msra.mxu0 0.0
      %2605 = vmatprep.subr.mxu0 0.0
      %2606 = vmatpush1.msra.mxu0 0.0
      %2607 = vmatprep.subr.mxu0 0.0
      %2608 = vmatpush1.msra.mxu0 0.0
      %2609 = vmatprep.subr.mxu0 0.0
      %2610 = vmatpush1.msra.mxu0 0.0
      %2611 = vmatprep.subr.mxu0 0.0
      %2612 = vmatpush1.msra.mxu0 0.0
      %2613 = vmatprep.subr.mxu0 0.0
      %2614 = vmatpush1.msra.mxu0 0.0
      %2615 = vmatprep.subr.mxu0 0.0
      %2616 = vmatpush1.msra.mxu0 0.0
      %2617 = vmatprep.subr.mxu0 0.0
      %2618 = vmatpush1.msra.mxu0 0.0
      %2619 = vmatprep.subr.mxu0 0.0
      %2620 = vmatpush1.msra.mxu0 0.0
      %2621 = vmatprep.subr.mxu0 0.0
      %2622 = vmatpush1.msra.mxu0 0.0
      %2623 = vmatprep.subr.mxu0 0.0
      %2624 = vmatpush1.msra.mxu0 0.0
      %2625 = vmatprep.subr.mxu0 0.0
      %2626 = vmatpush1.msra.mxu0 0.0
      %2627 = vmatprep.subr.mxu0 0.0
      %2628 = vmatpush1.msra.mxu0 0.0
      %2629 = vmatprep.subr.mxu0 0.0
      %2630 = vmatpush1.msra.mxu0 0.0
      %2631 = vmatprep.subr.mxu0 0.0
      %2632 = vmatpush1.msra.mxu0 0.0
      %2633 = vmatprep.subr.mxu0 0.0
      %2634 = vmatpush1.msra.mxu0 0.0
      %2635 = vmatprep.subr.mxu0 0.0
      %2636 = vmatpush1.msra.mxu0 0.0
      %2637 = vmatprep.subr.mxu0 0.0
      %2638 = vmatpush1.msra.mxu0 0.0
      %2639 = vmatprep.subr.mxu0 0.0
      %2640 = vmatpush1.msra.mxu0 0.0
      %2641 = vmatprep.subr.mxu0 0.0
      %2642 = vmatpush1.msra.mxu0 0.0
      %2643 = vmatprep.subr.mxu0 0.0
      %2644 = vmatpush1.msra.mxu0 0.0
      %2645 = vmatprep.subr.mxu0 0.0
      %2646 = vmatpush1.msra.mxu0 0.0
      %2647 = vmatprep.subr.mxu0 0.0
      %2648 = vmatpush1.msra.mxu0 0.0
      %2649 = vmatprep.subr.mxu0 0.0
      %2650 = vmatpush1.msra.mxu0 0.0
      %2651 = vmatprep.subr.mxu0 0.0
      %2652 = vmatpush1.msra.mxu0 0.0
      %2653 = vmatprep.subr.mxu0 0.0
      %2654 = vmatpush1.msra.mxu0 0.0
      %2655 = vmatprep.mubr.f32.mxu0 0.0
      %2656 = vmatmul.mubr.f32.gmra.mrb[0].mxu0 %v2589
      %v2657 = vpop.f32.mrb[0].mxu0
      %v2658 = vadd.f32 %v2586, %v2657
      %v2659 = vpop.f32.mrb[0].mxu0
      %v2660 = vadd.f32 %v2586, %v2659
      %2661 = vdwg.mxu0
      %v2662 = vmax.f32 %v2658, 0.0
      %v2663 = vmax.f32 %v2660, 0.0
      %v2664 = vld [vmem:[%s21] sm:$0xff]
      %v2665 = vld [vmem:[%s22] sm:$0xff]
      %2667 = vset.pattern.permute.xlu0 0
      %2668 = vperm.xlu0 %2667, %v2665
      %v2669 = vpop.permute.xlu0 %2668
      %vm2671 = vcmask 64512
      %v2673 = vsel %vm2671, %v2664, 0
      %2675 = vmatprep.subr.mxu0 %v2663
      %2676 = vmatpush1.msra.mxu0 %v2662
      %2677 = vmatprep.subr.mxu0 0.0
      %2678 = vmatpush1.msra.mxu0 0.0
      %2679 = vmatprep.subr.mxu0 0.0
      %2680 = vmatpush1.msra.mxu0 0.0
      %2681 = vmatprep.subr.mxu0 0.0
      %2682 = vmatpush1.msra.mxu0 0.0
      %2683 = vmatprep.subr.mxu0 0.0
      %2684 = vmatpush1.msra.mxu0 0.0
      %2685 = vmatprep.subr.mxu0 0.0
      %2686 = vmatpush1.msra.mxu0 0.0
      %2687 = vmatprep.subr.mxu0 0.0
      %2688 = vmatpush1.msra.mxu0 0.0
      %2689 = vmatprep.subr.mxu0 0.0
      %2690 = vmatpush1.msra.mxu0 0.0
      %2691 = vmatprep.subr.mxu0 0.0
      %2692 = vmatpush1.msra.mxu0 0.0
      %2693 = vmatprep.subr.mxu0 0.0
      %2694 = vmatpush1.msra.mxu0 0.0
      %2695 = vmatprep.subr.mxu0 0.0
      %2696 = vmatpush1.msra.mxu0 0.0
      %2697 = vmatprep.subr.mxu0 0.0
      %2698 = vmatpush1.msra.mxu0 0.0
      %2699 = vmatprep.subr.mxu0 0.0
      %2700 = vmatpush1.msra.mxu0 0.0
      %2701 = vmatprep.subr.mxu0 0.0
      %2702 = vmatpush1.msra.mxu0 0.0
      %2703 = vmatprep.subr.mxu0 0.0
      %2704 = vmatpush1.msra.mxu0 0.0
      %2705 = vmatprep.subr.mxu0 0.0
      %2706 = vmatpush1.msra.mxu0 0.0
      %2707 = vmatprep.subr.mxu0 0.0
      %2708 = vmatpush1.msra.mxu0 0.0
      %2709 = vmatprep.subr.mxu0 0.0
      %2710 = vmatpush1.msra.mxu0 0.0
      %2711 = vmatprep.subr.mxu0 0.0
      %2712 = vmatpush1.msra.mxu0 0.0
      %2713 = vmatprep.subr.mxu0 0.0
      %2714 = vmatpush1.msra.mxu0 0.0
      %2715 = vmatprep.subr.mxu0 0.0
      %2716 = vmatpush1.msra.mxu0 0.0
      %2717 = vmatprep.subr.mxu0 0.0
      %2718 = vmatpush1.msra.mxu0 0.0
      %2719 = vmatprep.subr.mxu0 0.0
      %2720 = vmatpush1.msra.mxu0 0.0
      %2721 = vmatprep.subr.mxu0 0.0
      %2722 = vmatpush1.msra.mxu0 0.0
      %2723 = vmatprep.subr.mxu0 0.0
      %2724 = vmatpush1.msra.mxu0 0.0
      %2725 = vmatprep.subr.mxu0 0.0
      %2726 = vmatpush1.msra.mxu0 0.0
      %2727 = vmatprep.subr.mxu0 0.0
      %2728 = vmatpush1.msra.mxu0 0.0
      %2729 = vmatprep.subr.mxu0 0.0
      %2730 = vmatpush1.msra.mxu0 0.0
      %2731 = vmatprep.subr.mxu0 0.0
      %2732 = vmatpush1.msra.mxu0 0.0
      %2733 = vmatprep.subr.mxu0 0.0
      %2734 = vmatpush1.msra.mxu0 0.0
      %2735 = vmatprep.subr.mxu0 0.0
      %2736 = vmatpush1.msra.mxu0 0.0
      %2737 = vmatprep.subr.mxu0 0.0
      %2738 = vmatpush1.msra.mxu0 0.0
      %2739 = vmatprep.mubr.f32.mxu0 0.0
      %2740 = vmatmul.mubr.f32.gmra.mrb[0].mxu0 %v2673
      %v2741 = vpop.f32.mrb[0].mxu0
      %v2742 = vadd.f32 %v2669, %v2741
      %v2743 = vpop.f32.mrb[0].mxu0
      %v2744 = vadd.f32 %v2669, %v2743
      %2745 = vdwg.mxu0
      %v2746 = vmax.f32 %v2742, 0.0
      %v2747 = vmax.f32 %v2744, 0.0
      %v2748 = vld [vmem:[%s23] sm:$0x7]
      %v2749 = vld [vmem:[%s24] sm:$0x7]
      %2751 = vset.pattern.permute.xlu0 0
      %2752 = vperm.xlu0 %2751, %v2749
      %v2753 = vpop.permute.xlu0 %2752
      %v2756 = vsel %vm2671, %v2748, 0
      %2758 = vmatprep.subr.mxu0 %v2747
      %2759 = vmatpush1.msra.mxu0 %v2746
      %2760 = vmatprep.subr.mxu0 0.0
      %2761 = vmatpush1.msra.mxu0 0.0
      %2762 = vmatprep.subr.mxu0 0.0
      %2763 = vmatpush1.msra.mxu0 0.0
      %2764 = vmatprep.subr.mxu0 0.0
      %2765 = vmatpush1.msra.mxu0 0.0
      %2766 = vmatprep.subr.mxu0 0.0
      %2767 = vmatpush1.msra.mxu0 0.0
      %2768 = vmatprep.subr.mxu0 0.0
      %2769 = vmatpush1.msra.mxu0 0.0
      %2770 = vmatprep.subr.mxu0 0.0
      %2771 = vmatpush1.msra.mxu0 0.0
      %2772 = vmatprep.subr.mxu0 0.0
      %2773 = vmatpush1.msra.mxu0 0.0
      %2774 = vmatprep.subr.mxu0 0.0
      %2775 = vmatpush1.msra.mxu0 0.0
      %2776 = vmatprep.subr.mxu0 0.0
      %2777 = vmatpush1.msra.mxu0 0.0
      %2778 = vmatprep.subr.mxu0 0.0
      %2779 = vmatpush1.msra.mxu0 0.0
      %2780 = vmatprep.subr.mxu0 0.0
      %2781 = vmatpush1.msra.mxu0 0.0
      %2782 = vmatprep.subr.mxu0 0.0
      %2783 = vmatpush1.msra.mxu0 0.0
      %2784 = vmatprep.subr.mxu0 0.0
      %2785 = vmatpush1.msra.mxu0 0.0
      %2786 = vmatprep.subr.mxu0 0.0
      %2787 = vmatpush1.msra.mxu0 0.0
      %2788 = vmatprep.subr.mxu0 0.0
      %2789 = vmatpush1.msra.mxu0 0.0
      %2790 = vmatprep.subr.mxu0 0.0
      %2791 = vmatpush1.msra.mxu0 0.0
      %2792 = vmatprep.subr.mxu0 0.0
      %2793 = vmatpush1.msra.mxu0 0.0
      %2794 = vmatprep.subr.mxu0 0.0
      %2795 = vmatpush1.msra.mxu0 0.0
      %2796 = vmatprep.subr.mxu0 0.0
      %2797 = vmatpush1.msra.mxu0 0.0
      %2798 = vmatprep.subr.mxu0 0.0
      %2799 = vmatpush1.msra.mxu0 0.0
      %2800 = vmatprep.subr.mxu0 0.0
      %2801 = vmatpush1.msra.mxu0 0.0
      %2802 = vmatprep.subr.mxu0 0.0
      %2803 = vmatpush1.msra.mxu0 0.0
      %2804 = vmatprep.subr.mxu0 0.0
      %2805 = vmatpush1.msra.mxu0 0.0
      %2806 = vmatprep.subr.mxu0 0.0
      %2807 = vmatpush1.msra.mxu0 0.0
      %2808 = vmatprep.subr.mxu0 0.0
      %2809 = vmatpush1.msra.mxu0 0.0
      %2810 = vmatprep.subr.mxu0 0.0
      %2811 = vmatpush1.msra.mxu0 0.0
      %2812 = vmatprep.subr.mxu0 0.0
      %2813 = vmatpush1.msra.mxu0 0.0
      %2814 = vmatprep.subr.mxu0 0.0
      %2815 = vmatpush1.msra.mxu0 0.0
      %2816 = vmatprep.subr.mxu0 0.0
      %2817 = vmatpush1.msra.mxu0 0.0
      %2818 = vmatprep.subr.mxu0 0.0
      %2819 = vmatpush1.msra.mxu0 0.0
      %2820 = vmatprep.subr.mxu0 0.0
      %2821 = vmatpush1.msra.mxu0 0.0
      %2822 = vmatprep.mubr.f32.mxu0 0.0
      %2823 = vmatmul.mubr.f32.gmra.mrb[0].mxu0 %v2756
      %v2824 = vpop.f32.mrb[0].mxu0
      %v2825 = vadd.f32 %v2753, %v2824
      %v2826 = vpop.f32.mrb[0].mxu0
      %v2827 = vadd.f32 %v2753, %v2826
      %2828 = vdwg.mxu0
      %v2831 = vcombine.low %v2825, %v2827
      %2833 = vst [vmem:[%s764] sm:$0x77] %v2831
      %p2834 = scmp.lt.s32.totalorder %s36, 1
      %s2835 = scalar_select %p2834, %s36, 1
      %s2836 = smul.addr %s2835, 2
      %s2837 = smul.addr %s2836, 4
      %s2838 = scalar_lea.vmem %s25, %s2837
      // Predicated region
      $region121: #{dbsnl_forward.1} parent=119 // pred_check
        %p2839 = pneg %p584
      $region122: #{dbsnl_forward.1} parent=119 // pred_check_branch
        %2841 = sbr.rel (%p2839) target = $region124
      $region123: #{dbsnl_forward.1} parent=119 // pred_region
        _
      $region124: #{dbsnl_forward.1} parent=119 // pred_fallthru
        _
    $region120: #{dbsnl_forward.1} parent=5 // pred_fallthru
      _
    %p2842 = scmp.le.s32.totalorder 2, %s31
    // Predicated region
    $region125: #{dbsnl_forward.1} parent=5 // pred_check
      %p2843 = pneg %p2842
    $region126: #{dbsnl_forward.1} parent=5 // pred_check_branch
      %2845 = sbr.rel (%p2843) target = $region128
    $region127: #{dbsnl_forward.1} parent=5 // pred_region
      %s2846 = ssub.s32 %s31, 2
      // Predicated region
      $region129: #{dbsnl_forward.1} parent=127 // pred_check
        %p2847 = pneg %p590
      $region130: #{dbsnl_forward.1} parent=127 // pred_check_branch
        %2849 = sbr.rel (%p2847) target = $region132
      $region131: #{dbsnl_forward.1} parent=127 // pred_region
        %p2850 = scmp.lt.s32.totalorder %s37, 1
        %s2851 = scalar_select %p2850, %s37, 1
        %s2852 = smul.addr %s2851, 2
        %s2853 = smul.addr %s2852, 4
        %s2854 = scalar_lea.vmem %s25, %s2853
      $region132: #{dbsnl_forward.1} parent=127 // pred_fallthru
        _
    $region128: #{dbsnl_forward.1} parent=5 // pred_fallthru
      _
  $region6: #{dbsnl_forward.1} parent=0 // loop_footer
    %s35 = sadd.s32 1, %s31
  $region7: #{dbsnl_forward.1} parent=0 // loop_footer_branch
    %30 = sbr.rel target = $region3
  $region8: #{dbsnl_forward.1} parent=0 // loop_exit
    _

</llo_original>
